<compile_context>
chip_gen: v6e
topology: v6e:2x2x1
jax: 0.10.0
libtpu: 0.0.40
codegen_flags: <defaults>
</compile_context>

<pallas_src>
import math

import jax
import jax.numpy as jnp
from jax.experimental import pallas as pl
from jax.experimental.pallas import tpu as pltpu


_C1 = 0.7978845608028654          # sqrt(2/pi)
_C2 = _C1 * 0.044715


def _convt1x1_gelu_kernel(w_ref, x_ref, b_ref, o_ref):
    # w_ref: (Cout, Cin) bf16  -- transposed ConvTranspose2d weight (MXU LHS)
    # x_ref: (Cin, TP)   f32   -- one spatial tile of one batch element
    # b_ref: (Cout, 1)   f32
    # o_ref: (Cout, TP)  f32
    x_bf16 = x_ref[...].astype(jnp.bfloat16)              # in-kernel cast (VPU)
    v1 = jnp.dot(w_ref[...], x_bf16, preferred_element_type=jnp.float32)
    v1 = v1 + b_ref[...]                                   # lane-broadcast bias
    inner = v1 * (_C1 + _C2 * (v1 * v1))                   # Horner form
    o_ref[...] = (0.5 * v1) * (jnp.tanh(inner) + 1.0)      # tanh -> EUP slot


def _spatial_tile(p: int, max_tp: int = 1024) -> int:
    """Lane-axis tile: full extent if small, else a balanced multiple of 128."""
    if p <= max_tp:
        return p
    n_tiles = -(-p // max_tp)          # cdiv
    tp = -(-p // n_tiles)              # balance tiles -> avoid a tiny ragged tail
    return -(-tp // 128) * 128         # round up to a lane multiple


@jax.jit
def model_forward(x_nchw, weight, bias):
    """x_nchw: (N, 1024, H, W) f32
    weight:  (1024, 512) f32  (ConvTranspose2d weight (Cin, Cout, 1, 1) squeezed)
    bias:    (512,) f32
    returns: (N, 512, H-2, W-2) f32 (NCHW), matching the PyTorch module.
    """
    n, cin, h, w = x_nchw.shape
    cout = weight.shape[1]
    ho, wo = h - 2, w - 2
    assert ho > 0 and wo > 0, "padding=1 with k=1 requires spatial >= 3"
    p = h * w                                   # UNCROPPED spatial extent

    x3 = x_nchw.reshape(n, cin, p)              # trailing-dim reshape: no copy
    w_t = weight.T.astype(jnp.bfloat16)         # (Cout, Cin); tiny one-time prep
    b2 = bias.astype(jnp.float32).reshape(cout, 1)

    tp = _spatial_tile(p)
    grid = (n, pl.cdiv(p, tp))

    out_full = pl.pallas_call(
        _convt1x1_gelu_kernel,
        out_shape=jax.ShapeDtypeStruct((n, cout, p), jnp.float32),
        grid=grid,
        in_specs=[
            # Constant block index -> weight is fetched once across the grid.
            # (pl.Buffered(1) would also drop its 2nd VMEM buffer; left default
            #  for portability — total footprint is ~14 MiB either way.)
            pl.BlockSpec((cout, cin), lambda i, j: (0, 0)),
            pl.BlockSpec((None, cin, tp), lambda i, j: (i, 0, j)),
            pl.BlockSpec((cout, 1), lambda i, j: (0, 0)),
        ],
        out_specs=pl.BlockSpec((None, cout, tp), lambda i, j: (i, 0, j)),
        compiler_params=pltpu.CompilerParams(
            dimension_semantics=("parallel", "parallel"),
            vmem_limit_bytes=32 * 1024 * 1024,
        ),
    )(w_t, x3, b2)

    # padding=1 on a k=1, s=1 transposed conv == crop one pixel per border.
    out_full = out_full.reshape(n, cout, h, w)
    return out_full[:, :, 1:h - 1, 1:w - 1]


def _reference(x_nchw, weight, bias):
    """True f32 reference (mirrors the PyTorch module's math)."""
    h, w = x_nchw.shape[2], x_nchw.shape[3]
    xc = x_nchw[:, :, 1:h - 1, 1:w - 1]
    v1 = jnp.einsum("nchw,cd->ndhw", xc, weight,
                    precision=jax.lax.Precision.HIGHEST)
    v1 = v1 + bias[None, :, None, None]
    return (v1 * 0.5) * (jnp.tanh((v1 + (v1 ** 3) * 0.044715) * _C1) + 1.0)


if __name__ == "__main__":
    key = jax.random.PRNGKey(0)
    k_w, k_b, k_x1, k_x2, k_x3 = jax.random.split(key, 5)

    CIN, COUT = 1024, 512
    bound = 1.0 / math.sqrt(CIN)
    weight = jax.random.uniform(k_w, (CIN, COUT), jnp.float32, -bound, bound)
    bias = jax.random.uniform(k_b, (COUT,), jnp.float32, -bound, bound)

    cases = [
        (2, 16, 16, k_x1),   # P = 256: single clean 256-lane tile (unmasked stores)
        (2, 27, 27, k_x2),   # P = 729: single full-extent tile (p <= 1024)
        (2, 33, 33, k_x3),   # P = 1089: two balanced 640-lane tiles, masked tail
    ]
    for n, h, w, kx in cases:
        x = jax.random.normal(kx, (n, CIN, h, w), jnp.float32)
        out = jax.block_until_ready(model_forward(x, weight, bias))
        assert out.shape == (n, COUT, h - 2, w - 2)

        ref = _reference(x, weight, bias)
        err = float(jnp.max(jnp.abs(out - ref)))
        assert err < 3e-2, f"max abs err {err} for case {(n, h, w)}"

    print("KERNEL_OK")
</pallas_src>

<mosaic_0001>
module attributes {stable_mosaic.version = 11 : i64} {
  func.func @_convt1x1_gelu_kernel(%arg0: i32, %arg1: i32, %arg2: memref<512x1024xbf16, #tpu.memory_space<vmem>>, %arg3: memref<1x1024x256xf32, #tpu.memory_space<vmem>>, %arg4: memref<512x1xf32, #tpu.memory_space<vmem>>, %arg5: memref<1x512x256xf32, #tpu.memory_space<vmem>>) attributes {dimension_semantics = [#tpu.dimension_semantics<parallel>, #tpu.dimension_semantics<parallel>], iteration_bounds = array<i64: 2, 1>, scalar_prefetch = 0 : i64, scratch_operands = 0 : i64, tpu.core_type = #tpu.core_type<tc>, window_params = [{pipeline_mode = #tpu.pipeline_mode<synchronous>, transform_indices = @transform_0, window_bounds = array<i64: 512, 1024>}, {transform_indices = @transform_1, window_bounds = array<i64: 1, 1024, 256>}, {pipeline_mode = #tpu.pipeline_mode<synchronous>, transform_indices = @transform_2, window_bounds = array<i64: 512, 1>}, {transform_indices = @transform_3, window_bounds = array<i64: 1, 512, 256>}]} {
    %c0 = arith.constant 0 : index
    %c0_0 = arith.constant 0 : index
    %c0_1 = arith.constant 0 : index
    %0 = vector.load %arg3[%c0, %c0_0, %c0_1] : memref<1x1024x256xf32, #tpu.memory_space<vmem>>, vector<1x1024x256xf32>
    %1 = vector.shape_cast %0 : vector<1x1024x256xf32> to vector<1024x256xf32>
    %2 = arith.truncf %1 : vector<1024x256xf32> to vector<1024x256xbf16>
    %c0_2 = arith.constant 0 : index
    %c0_3 = arith.constant 0 : index
    %3 = vector.load %arg2[%c0_2, %c0_3] : memref<512x1024xbf16, #tpu.memory_space<vmem>>, vector<512x1024xbf16>
    %cst = arith.constant dense<0.000000e+00> : vector<512x256xf32>
    %4 = tpu.matmul %3, %2, %cst {dimension_numbers = #tpu.dot_dimension_numbers<[1], [0], [0], [1], [0, 0, 1, 1], [], []>} : vector<512x1024xbf16>, vector<1024x256xbf16>, vector<512x256xf32> -> vector<512x256xf32>
    %c0_4 = arith.constant 0 : index
    %c0_5 = arith.constant 0 : index
    %5 = vector.load %arg4[%c0_4, %c0_5] : memref<512x1xf32, #tpu.memory_space<vmem>>, vector<512x1xf32>
    %6 = vector.broadcast %5 : vector<512x1xf32> to vector<512x256xf32>
    %7 = arith.addf %4, %6 : vector<512x256xf32>
    %8 = arith.mulf %7, %7 : vector<512x256xf32>
    %cst_6 = arith.constant 0.0356774069 : f32
    %9 = vector.broadcast %cst_6 : f32 to vector<512x256xf32>
    %10 = arith.mulf %9, %8 : vector<512x256xf32>
    %cst_7 = arith.constant 0.797884583 : f32
    %11 = vector.broadcast %cst_7 : f32 to vector<512x256xf32>
    %12 = arith.addf %11, %10 : vector<512x256xf32>
    %13 = arith.mulf %7, %12 : vector<512x256xf32>
    %cst_8 = arith.constant 5.000000e-01 : f32
    %14 = vector.broadcast %cst_8 : f32 to vector<512x256xf32>
    %15 = arith.mulf %14, %7 : vector<512x256xf32>
    %16 = math.tanh %13 : vector<512x256xf32>
    %cst_9 = arith.constant 1.000000e+00 : f32
    %17 = vector.broadcast %cst_9 : f32 to vector<512x256xf32>
    %18 = arith.addf %16, %17 : vector<512x256xf32>
    %19 = arith.mulf %15, %18 : vector<512x256xf32>
    %c0_10 = arith.constant 0 : index
    %c0_11 = arith.constant 0 : index
    %c0_12 = arith.constant 0 : index
    %20 = vector.load %arg5[%c0_10, %c0_11, %c0_12] : memref<1x512x256xf32, #tpu.memory_space<vmem>>, vector<1x512x256xf32>
    %21 = vector.shape_cast %20 : vector<1x512x256xf32> to vector<512x256xf32>
    %22 = vector.shape_cast %19 : vector<512x256xf32> to vector<1x512x256xf32>
    tpu.vector_store %arg5[%c0_10, %c0_11, %c0_12], %22 {strides = array<i32>} : memref<1x512x256xf32, #tpu.memory_space<vmem>>, vector<1x512x256xf32>,
    return
  }
  func.func @transform_0(%arg0: i32, %arg1: i32) -> (i32, i32) {
    %c0_i32 = arith.constant 0 : i32
    %c0_i32_0 = arith.constant 0 : i32
    %c0_i32_1 = arith.constant 0 : i32
    return %c0_i32, %c0_i32_0 : i32, i32
  }
  func.func @transform_1(%arg0: i32, %arg1: i32) -> (i32, i32, i32) {
    %c0_i32 = arith.constant 0 : i32
    %c0_i32_0 = arith.constant 0 : i32
    return %arg0, %c0_i32, %arg1 : i32, i32, i32
  }
  func.func @transform_2(%arg0: i32, %arg1: i32) -> (i32, i32) {
    %c0_i32 = arith.constant 0 : i32
    %c0_i32_0 = arith.constant 0 : i32
    %c0_i32_1 = arith.constant 0 : i32
    return %c0_i32, %c0_i32_0 : i32, i32
  }
  func.func @transform_3(%arg0: i32, %arg1: i32) -> (i32, i32, i32) {
    %c0_i32 = arith.constant 0 : i32
    %c0_i32_0 = arith.constant 0 : i32
    return %arg0, %c0_i32, %arg1 : i32, i32, i32
  }
}

</mosaic_0001>

<llo_original>
// kernel: model_forward.1
$region0: #{model_forward.1}
  #allocation0 [shape = 'u32[]', space=smem, size = 0x4, offset = 0x4, fixed_abs, tag = 'smem constant byte address 0x4 - core index']
  #allocation1 [shape = 'u32[144,128]{1,0:T(1,128)}', space=vmem, size = 0x12000, scoped, tag = 'internal scratch']
  %s0 = inlined_call_operand.vmem [shape: bf16[512,1024], index: 0, kind: input, shape index: {}]
  %s1 = inlined_call_operand.vmem [shape: f32[2,1024,256], index: 1, kind: input, shape index: {}]
  %s2 = inlined_call_operand.vmem [shape: f32[512,1], index: 2, kind: input, shape index: {}]
  %s3 = inlined_call_operand.vmem [shape: f32[2,512,256], index: 3, kind: output, shape index: {}]
  %s4 = sld [smem:[#allocation0]]
  $region45: #{model_forward.1} parent=0
    _
  %s6 = ssub.s32 1, %s4
  %s7 = scalar_select 0, %s6, %s4
  loop: start=0, step=1, limit=4
  $region2: #{model_forward.1} parent=0 // loop_pre_header
    _
  $region3: #{model_forward.1} parent=0 // loop_header
    %s9 = sphi 0, %s13
    %p10 = scmp.ge.s32.totalorder %s9, 4
    %s16 = sphi 0, %s28
    %s17 = sphi 0, %s24
    %s18 = sphi 0, %s16
    %s19 = sphi 0, %s17
    %s20 = sphi 0, %s18
    %s21 = sphi 0, %s19
    %s29 = sphi 0, %s29
    %s31 = sphi 0, %s29
    %s32 = sphi 0, %s31
    %s46 = sphi 0, %s32
    %s54 = sphi 0, %s56
    %s57 = sphi 0, %s54
    %s58 = sphi 0, %s57
    %s74 = sphi 0, %s58
    %s78 = sphi 0, %s78
    %s80 = sphi 0, %s78
    %s81 = sphi 0, %s80
    %s95 = sphi 0, %s81
    %s103 = sphi 0, %s105
    %s106 = sphi 0, %s103
    %s107 = sphi 0, %s106
    %s123 = sphi 0, %s107
  $region4: #{model_forward.1} parent=0 // loop_header_branch
    %12 = sbr.rel (%p10) target = $region8
  $region5: #{model_forward.1} parent=0 // loop_body
    %s14 = ssub.s32 %s9, 1
    %s15 = ssub.s32 %s9, 2
    %s22 = sadd.s32 1, %s17
    %p23 = scmp.ge.s32.totalorder %s22, 1
    %s24 = scalar_select %p23, 0, %s22
    %s25 = sadd.s32 1, %s16
    %s26 = scalar_select %p23, %s25, %s16
    %p27 = scmp.ge.s32.totalorder %s26, 2
    %s28 = scalar_select %p27, 0, %s26
    %s30 = sadd.s32 %s29, 1
    %p33 = scmp.eq.s32.totalorder %s9, 1
    %p34 = scmp.ne.s32.totalorder %s29, %s31
    %p35 = scmp.eq.s32.totalorder %s9, 0
    %p36 = por %p34, %p35
    %p37 = scmp.ne.s32.totalorder %s29, %s31
    %p38 = scmp.eq.s32.totalorder %s14, 1
    %p39 = por %p37, %p38
    %p40 = scmp.ne.s32.totalorder %s31, %s32
    %p41 = scmp.eq.s32.totalorder %s14, 0
    %p42 = por %p40, %p41
    %p43 = scmp.ne.s32.totalorder %s31, %s32
    %p44 = scmp.eq.s32.totalorder %s15, 1
    %p45 = por %p43, %p44
    %p47 = scmp.ne.s32.totalorder %s32, %s46
    %p48 = scmp.eq.s32.totalorder %s15, 0
    %p49 = por %p47, %p48
    %s50 = ssub.s32 %s16, %s28
    %s51 = ssub.s32 %s17, %s24
    %s52 = sor.u32 %s50, %s51
    %p53 = scmp.eq.s32.totalorder %s52, 0
    %s55 = sadd.s32 %s54, 1
    %s56 = scalar_select %p53, %s54, %s55
    %p59 = pneg %p53
    %p60 = scmp.eq.s32.totalorder %s9, 1
    %p61 = por %p59, %p60
    %p62 = scmp.ne.s32.totalorder %s54, %s57
    %p63 = scmp.eq.s32.totalorder %s9, 0
    %p64 = por %p62, %p63
    %p65 = scmp.ne.s32.totalorder %s54, %s57
    %p66 = scmp.eq.s32.totalorder %s14, 1
    %p67 = por %p65, %p66
    %p68 = scmp.ne.s32.totalorder %s57, %s58
    %p69 = scmp.eq.s32.totalorder %s14, 0
    %p70 = por %p68, %p69
    %p71 = scmp.ne.s32.totalorder %s57, %s58
    %p72 = scmp.eq.s32.totalorder %s15, 1
    %p73 = por %p71, %p72
    %p75 = scmp.ne.s32.totalorder %s58, %s74
    %p76 = scmp.eq.s32.totalorder %s15, 0
    %p77 = por %p75, %p76
    %s79 = sadd.s32 %s78, 1
    %p82 = scmp.eq.s32.totalorder %s9, 1
    %p83 = scmp.ne.s32.totalorder %s78, %s80
    %p84 = scmp.eq.s32.totalorder %s9, 0
    %p85 = por %p83, %p84
    %p86 = scmp.ne.s32.totalorder %s78, %s80
    %p87 = scmp.eq.s32.totalorder %s14, 1
    %p88 = por %p86, %p87
    %p89 = scmp.ne.s32.totalorder %s80, %s81
    %p90 = scmp.eq.s32.totalorder %s14, 0
    %p91 = por %p89, %p90
    %p92 = scmp.ne.s32.totalorder %s80, %s81
    %p93 = scmp.eq.s32.totalorder %s15, 1
    %p94 = por %p92, %p93
    %p96 = scmp.ne.s32.totalorder %s81, %s95
    %p97 = scmp.eq.s32.totalorder %s15, 0
    %p98 = por %p96, %p97
    %s99 = ssub.s32 %s16, %s28
    %s100 = ssub.s32 %s17, %s24
    %s101 = sor.u32 %s99, %s100
    %p102 = scmp.eq.s32.totalorder %s101, 0
    %s104 = sadd.s32 %s103, 1
    %s105 = scalar_select %p102, %s103, %s104
    %p108 = pneg %p102
    %p109 = scmp.eq.s32.totalorder %s9, 1
    %p110 = por %p108, %p109
    %p111 = scmp.ne.s32.totalorder %s103, %s106
    %p112 = scmp.eq.s32.totalorder %s9, 0
    %p113 = por %p111, %p112
    %p114 = scmp.ne.s32.totalorder %s103, %s106
    %p115 = scmp.eq.s32.totalorder %s14, 1
    %p116 = por %p114, %p115
    %p117 = scmp.ne.s32.totalorder %s106, %s107
    %p118 = scmp.eq.s32.totalorder %s14, 0
    %p119 = por %p117, %p118
    %p120 = scmp.ne.s32.totalorder %s106, %s107
    %p121 = scmp.eq.s32.totalorder %s15, 1
    %p122 = por %p120, %p121
    %p124 = scmp.ne.s32.totalorder %s107, %s123
    %p125 = scmp.eq.s32.totalorder %s15, 0
    %p126 = por %p124, %p125
    %p127 = scmp.le.s32.totalorder 1, %s9
    %p128 = scmp.lt.s32.totalorder %s9, 3
    %p129 = pnand %p127, %p128
    %p130 = pneg %p129
    // Predicated region
    $region9: #{model_forward.1} parent=5 // pred_check
      _
    $region10: #{model_forward.1} parent=5 // pred_check_branch
      %132 = sbr.rel (%p129) target = $region12
    $region11: #{model_forward.1} parent=5 // pred_region
      %s133 = ssub.s32 %s9, 1
      // Predicated region
      $region13: #{model_forward.1} parent=11 // pred_check
        %p134 = pneg %p42
      $region14: #{model_forward.1} parent=11 // pred_check_branch
        %136 = sbr.rel (%p134) target = $region16
      $region15: #{model_forward.1} parent=11 // pred_region
        _
      $region16: #{model_forward.1} parent=11 // pred_fallthru
        _
      // Predicated region
      $region17: #{model_forward.1} parent=11 // pred_check
        %p137 = pneg %p91
      $region18: #{model_forward.1} parent=11 // pred_check_branch
        %139 = sbr.rel (%p137) target = $region20
      $region19: #{model_forward.1} parent=11 // pred_region
        _
      $region20: #{model_forward.1} parent=11 // pred_fallthru
        _
    $region12: #{model_forward.1} parent=5 // pred_fallthru
      _
    %p140 = scmp.lt.s32.totalorder %s9, 2
    // Predicated region
    $region21: #{model_forward.1} parent=5 // pred_check
      %p141 = pneg %p140
    $region22: #{model_forward.1} parent=5 // pred_check_branch
      %143 = sbr.rel (%p141) target = $region24
    $region23: #{model_forward.1} parent=5 // pred_region
      // Predicated region
      $region25: #{model_forward.1} parent=23 // pred_check
        %p144 = pneg %p64
      $region26: #{model_forward.1} parent=23 // pred_check_branch
        %146 = sbr.rel (%p144) target = $region28
      $region27: #{model_forward.1} parent=23 // pred_region
        %s147 = smul.u32 2, %s17
        %p148 = scmp.lt.s32.totalorder %s16, 1
        %s149 = scalar_select %p148, %s16, 1
        %p150 = scmp.lt.s32.totalorder %s147, 1
        %s151 = scalar_select %p150, %s147, 1
        %s152 = smul.addr %s149, 256
        %s153 = sadd.s32 %s151, %s152
        %s154 = smul.addr %s153, 8
        %s155 = scalar_lea.vmem %s1, %s154
        %s156 = smul.u32 2, %s17
      $region28: #{model_forward.1} parent=23 // pred_fallthru
        _
    $region24: #{model_forward.1} parent=5 // pred_fallthru
      _
    %p157 = scmp.le.s32.totalorder 1, %s9
    %p158 = scmp.lt.s32.totalorder %s9, 3
    %p159 = pnand %p157, %p158
    %p160 = pneg %p159
    // Predicated region
    $region29: #{model_forward.1} parent=5 // pred_check
      _
    $region30: #{model_forward.1} parent=5 // pred_check_branch
      %162 = sbr.rel (%p159) target = $region32
    $region31: #{model_forward.1} parent=5 // pred_region
      %s163 = ssub.s32 %s9, 1
      %p164 = pneg %p42
      %p165 = pneg %p39
      %s166 = smul.u32 2, %s19
      %p167 = scmp.lt.s32.totalorder %s18, 1
      %s168 = scalar_select %p167, %s18, 1
      %p169 = scmp.lt.s32.totalorder %s166, 1
      %s170 = scalar_select %p169, %s166, 1
      %s171 = smul.addr %s168, 256
      %s172 = sadd.s32 %s170, %s171
      %s173 = smul.addr %s172, 8
      %s174 = scalar_lea.vmem %s1, %s173
      %p175 = pneg %p70
      %p176 = pneg %p67
      %p177 = pneg %p91
      %p178 = pneg %p88
      %p179 = pneg %p119
      %p180 = pneg %p116
      %s181 = smul.u32 2, %s19
      %p182 = scmp.lt.s32.totalorder %s18, 1
      %s183 = scalar_select %p182, %s18, 1
      %p184 = scmp.lt.s32.totalorder %s181, 1
      %s185 = scalar_select %p184, %s181, 1
      %s186 = smul.addr %s183, 128
      %s187 = sadd.s32 %s185, %s186
      %s188 = smul.addr %s187, 8
      %s189 = scalar_lea.vmem %s3, %s188
      %s190 = smul.u32 2, %s19
      %p191 = scmp.lt.s32.totalorder %s18, 1
      %s192 = scalar_select %p191, %s18, 1
      %p193 = scmp.lt.s32.totalorder %s190, 1
      %s194 = scalar_select %p193, %s190, 1
      %s195 = smul.addr %s192, 256
      %s196 = sadd.s32 %s194, %s195
      %s197 = smul.addr %s196, 8
      %s198 = scalar_lea.vmem %s1, %s197
      %s199 = smul.u32 2, %s19
      %s200 = smul.u32 2, %s19
      %p201 = scmp.lt.s32.totalorder %s18, 1
      %s202 = scalar_select %p201, %s18, 1
      %p203 = scmp.lt.s32.totalorder %s200, 1
      %s204 = scalar_select %p203, %s200, 1
      %s205 = smul.addr %s202, 128
      %s206 = sadd.s32 %s204, %s205
      %s207 = smul.addr %s206, 8
      %s208 = scalar_lea.vmem %s3, %s207
      %s209 = smul.u32 2, %s19
      %v210 = vld [vmem:[%s198] sm:$0xff]
      %v211 = vld [vmem:[%s198 + $0x8] sm:$0xff]
      %v212 = vld [vmem:[%s198 + $0x10] sm:$0xff]
      %v213 = vld [vmem:[%s198 + $0x18] sm:$0xff]
      %v214 = vld [vmem:[%s198 + $0x20] sm:$0xff]
      %v215 = vld [vmem:[%s198 + $0x28] sm:$0xff]
      %v216 = vld [vmem:[%s198 + $0x30] sm:$0xff]
      %v217 = vld [vmem:[%s198 + $0x38] sm:$0xff]
      %v218 = vld [vmem:[%s198 + $0x40] sm:$0xff]
      %v219 = vld [vmem:[%s198 + $0x48] sm:$0xff]
      %v220 = vld [vmem:[%s198 + $0x50] sm:$0xff]
      %v221 = vld [vmem:[%s198 + $0x58] sm:$0xff]
      %v222 = vld [vmem:[%s198 + $0x60] sm:$0xff]
      %v223 = vld [vmem:[%s198 + $0x68] sm:$0xff]
      %v224 = vld [vmem:[%s198 + $0x70] sm:$0xff]
      %v225 = vld [vmem:[%s198 + $0x78] sm:$0xff]
      %v226 = vld [vmem:[%s198 + $0x80] sm:$0xff]
      %v227 = vld [vmem:[%s198 + $0x88] sm:$0xff]
      %v228 = vld [vmem:[%s198 + $0x90] sm:$0xff]
      %v229 = vld [vmem:[%s198 + $0x98] sm:$0xff]
      %v230 = vld [vmem:[%s198 + $0xa0] sm:$0xff]
      %v231 = vld [vmem:[%s198 + $0xa8] sm:$0xff]
      %v232 = vld [vmem:[%s198 + $0xb0] sm:$0xff]
      %v233 = vld [vmem:[%s198 + $0xb8] sm:$0xff]
      %v234 = vld [vmem:[%s198 + $0xc0] sm:$0xff]
      %v235 = vld [vmem:[%s198 + $0xc8] sm:$0xff]
      %v236 = vld [vmem:[%s198 + $0xd0] sm:$0xff]
      %v237 = vld [vmem:[%s198 + $0xd8] sm:$0xff]
      %v238 = vld [vmem:[%s198 + $0xe0] sm:$0xff]
      %v239 = vld [vmem:[%s198 + $0xe8] sm:$0xff]
      %v240 = vld [vmem:[%s198 + $0xf0] sm:$0xff]
      %v241 = vld [vmem:[%s198 + $0xf8] sm:$0xff]
      %v242 = vld [vmem:[%s198 + $0x100] sm:$0xff]
      %v243 = vld [vmem:[%s198 + $0x108] sm:$0xff]
      %v244 = vld [vmem:[%s198 + $0x110] sm:$0xff]
      %v245 = vld [vmem:[%s198 + $0x118] sm:$0xff]
      %v246 = vld [vmem:[%s198 + $0x120] sm:$0xff]
      %v247 = vld [vmem:[%s198 + $0x128] sm:$0xff]
      %v248 = vld [vmem:[%s198 + $0x130] sm:$0xff]
      %v249 = vld [vmem:[%s198 + $0x138] sm:$0xff]
      %v250 = vld [vmem:[%s198 + $0x140] sm:$0xff]
      %v251 = vld [vmem:[%s198 + $0x148] sm:$0xff]
      %v252 = vld [vmem:[%s198 + $0x150] sm:$0xff]
      %v253 = vld [vmem:[%s198 + $0x158] sm:$0xff]
      %v254 = vld [vmem:[%s198 + $0x160] sm:$0xff]
      %v255 = vld [vmem:[%s198 + $0x168] sm:$0xff]
      %v256 = vld [vmem:[%s198 + $0x170] sm:$0xff]
      %v257 = vld [vmem:[%s198 + $0x178] sm:$0xff]
      %v258 = vld [vmem:[%s198 + $0x180] sm:$0xff]
      %v259 = vld [vmem:[%s198 + $0x188] sm:$0xff]
      %v260 = vld [vmem:[%s198 + $0x190] sm:$0xff]
      %v261 = vld [vmem:[%s198 + $0x198] sm:$0xff]
      %v262 = vld [vmem:[%s198 + $0x1a0] sm:$0xff]
      %v263 = vld [vmem:[%s198 + $0x1a8] sm:$0xff]
      %v264 = vld [vmem:[%s198 + $0x1b0] sm:$0xff]
      %v265 = vld [vmem:[%s198 + $0x1b8] sm:$0xff]
      %v266 = vld [vmem:[%s198 + $0x1c0] sm:$0xff]
      %v267 = vld [vmem:[%s198 + $0x1c8] sm:$0xff]
      %v268 = vld [vmem:[%s198 + $0x1d0] sm:$0xff]
      %v269 = vld [vmem:[%s198 + $0x1d8] sm:$0xff]
      %v270 = vld [vmem:[%s198 + $0x1e0] sm:$0xff]
      %v271 = vld [vmem:[%s198 + $0x1e8] sm:$0xff]
      %v272 = vld [vmem:[%s198 + $0x1f0] sm:$0xff]
      %v273 = vld [vmem:[%s198 + $0x1f8] sm:$0xff]
      %v274 = vld [vmem:[%s198 + $0x200] sm:$0xff]
      %v275 = vld [vmem:[%s198 + $0x208] sm:$0xff]
      %v276 = vld [vmem:[%s198 + $0x210] sm:$0xff]
      %v277 = vld [vmem:[%s198 + $0x218] sm:$0xff]
      %v278 = vld [vmem:[%s198 + $0x220] sm:$0xff]
      %v279 = vld [vmem:[%s198 + $0x228] sm:$0xff]
      %v280 = vld [vmem:[%s198 + $0x230] sm:$0xff]
      %v281 = vld [vmem:[%s198 + $0x238] sm:$0xff]
      %v282 = vld [vmem:[%s198 + $0x240] sm:$0xff]
      %v283 = vld [vmem:[%s198 + $0x248] sm:$0xff]
      %v284 = vld [vmem:[%s198 + $0x250] sm:$0xff]
      %v285 = vld [vmem:[%s198 + $0x258] sm:$0xff]
      %v286 = vld [vmem:[%s198 + $0x260] sm:$0xff]
      %v287 = vld [vmem:[%s198 + $0x268] sm:$0xff]
      %v288 = vld [vmem:[%s198 + $0x270] sm:$0xff]
      %v289 = vld [vmem:[%s198 + $0x278] sm:$0xff]
      %v290 = vld [vmem:[%s198 + $0x280] sm:$0xff]
      %v291 = vld [vmem:[%s198 + $0x288] sm:$0xff]
      %v292 = vld [vmem:[%s198 + $0x290] sm:$0xff]
      %v293 = vld [vmem:[%s198 + $0x298] sm:$0xff]
      %v294 = vld [vmem:[%s198 + $0x2a0] sm:$0xff]
      %v295 = vld [vmem:[%s198 + $0x2a8] sm:$0xff]
      %v296 = vld [vmem:[%s198 + $0x2b0] sm:$0xff]
      %v297 = vld [vmem:[%s198 + $0x2b8] sm:$0xff]
      %v298 = vld [vmem:[%s198 + $0x2c0] sm:$0xff]
      %v299 = vld [vmem:[%s198 + $0x2c8] sm:$0xff]
      %v300 = vld [vmem:[%s198 + $0x2d0] sm:$0xff]
      %v301 = vld [vmem:[%s198 + $0x2d8] sm:$0xff]
      %v302 = vld [vmem:[%s198 + $0x2e0] sm:$0xff]
      %v303 = vld [vmem:[%s198 + $0x2e8] sm:$0xff]
      %v304 = vld [vmem:[%s198 + $0x2f0] sm:$0xff]
      %v305 = vld [vmem:[%s198 + $0x2f8] sm:$0xff]
      %v306 = vld [vmem:[%s198 + $0x300] sm:$0xff]
      %v307 = vld [vmem:[%s198 + $0x308] sm:$0xff]
      %v308 = vld [vmem:[%s198 + $0x310] sm:$0xff]
      %v309 = vld [vmem:[%s198 + $0x318] sm:$0xff]
      %v310 = vld [vmem:[%s198 + $0x320] sm:$0xff]
      %v311 = vld [vmem:[%s198 + $0x328] sm:$0xff]
      %v312 = vld [vmem:[%s198 + $0x330] sm:$0xff]
      %v313 = vld [vmem:[%s198 + $0x338] sm:$0xff]
      %v314 = vld [vmem:[%s198 + $0x340] sm:$0xff]
      %v315 = vld [vmem:[%s198 + $0x348] sm:$0xff]
      %v316 = vld [vmem:[%s198 + $0x350] sm:$0xff]
      %v317 = vld [vmem:[%s198 + $0x358] sm:$0xff]
      %v318 = vld [vmem:[%s198 + $0x360] sm:$0xff]
      %v319 = vld [vmem:[%s198 + $0x368] sm:$0xff]
      %v320 = vld [vmem:[%s198 + $0x370] sm:$0xff]
      %v321 = vld [vmem:[%s198 + $0x378] sm:$0xff]
      %v322 = vld [vmem:[%s198 + $0x380] sm:$0xff]
      %v323 = vld [vmem:[%s198 + $0x388] sm:$0xff]
      %v324 = vld [vmem:[%s198 + $0x390] sm:$0xff]
      %v325 = vld [vmem:[%s198 + $0x398] sm:$0xff]
      %v326 = vld [vmem:[%s198 + $0x3a0] sm:$0xff]
      %v327 = vld [vmem:[%s198 + $0x3a8] sm:$0xff]
      %v328 = vld [vmem:[%s198 + $0x3b0] sm:$0xff]
      %v329 = vld [vmem:[%s198 + $0x3b8] sm:$0xff]
      %v330 = vld [vmem:[%s198 + $0x3c0] sm:$0xff]
      %v331 = vld [vmem:[%s198 + $0x3c8] sm:$0xff]
      %v332 = vld [vmem:[%s198 + $0x3d0] sm:$0xff]
      %v333 = vld [vmem:[%s198 + $0x3d8] sm:$0xff]
      %v334 = vld [vmem:[%s198 + $0x3e0] sm:$0xff]
      %v335 = vld [vmem:[%s198 + $0x3e8] sm:$0xff]
      %v336 = vld [vmem:[%s198 + $0x3f0] sm:$0xff]
      %v337 = vld [vmem:[%s198 + $0x3f8] sm:$0xff]
      %v338 = vld [vmem:[%s198 + $0x400] sm:$0xff]
      %v339 = vld [vmem:[%s198 + $0x408] sm:$0xff]
      %v340 = vld [vmem:[%s198 + $0x410] sm:$0xff]
      %v341 = vld [vmem:[%s198 + $0x418] sm:$0xff]
      %v342 = vld [vmem:[%s198 + $0x420] sm:$0xff]
      %v343 = vld [vmem:[%s198 + $0x428] sm:$0xff]
      %v344 = vld [vmem:[%s198 + $0x430] sm:$0xff]
      %v345 = vld [vmem:[%s198 + $0x438] sm:$0xff]
      %v346 = vld [vmem:[%s198 + $0x440] sm:$0xff]
      %v347 = vld [vmem:[%s198 + $0x448] sm:$0xff]
      %v348 = vld [vmem:[%s198 + $0x450] sm:$0xff]
      %v349 = vld [vmem:[%s198 + $0x458] sm:$0xff]
      %v350 = vld [vmem:[%s198 + $0x460] sm:$0xff]
      %v351 = vld [vmem:[%s198 + $0x468] sm:$0xff]
      %v352 = vld [vmem:[%s198 + $0x470] sm:$0xff]
      %v353 = vld [vmem:[%s198 + $0x478] sm:$0xff]
      %v354 = vld [vmem:[%s198 + $0x480] sm:$0xff]
      %v355 = vld [vmem:[%s198 + $0x488] sm:$0xff]
      %v356 = vld [vmem:[%s198 + $0x490] sm:$0xff]
      %v357 = vld [vmem:[%s198 + $0x498] sm:$0xff]
      %v358 = vld [vmem:[%s198 + $0x4a0] sm:$0xff]
      %v359 = vld [vmem:[%s198 + $0x4a8] sm:$0xff]
      %v360 = vld [vmem:[%s198 + $0x4b0] sm:$0xff]
      %v361 = vld [vmem:[%s198 + $0x4b8] sm:$0xff]
      %v362 = vld [vmem:[%s198 + $0x4c0] sm:$0xff]
      %v363 = vld [vmem:[%s198 + $0x4c8] sm:$0xff]
      %v364 = vld [vmem:[%s198 + $0x4d0] sm:$0xff]
      %v365 = vld [vmem:[%s198 + $0x4d8] sm:$0xff]
      %v366 = vld [vmem:[%s198 + $0x4e0] sm:$0xff]
      %v367 = vld [vmem:[%s198 + $0x4e8] sm:$0xff]
      %v368 = vld [vmem:[%s198 + $0x4f0] sm:$0xff]
      %v369 = vld [vmem:[%s198 + $0x4f8] sm:$0xff]
      %v370 = vld [vmem:[%s198 + $0x500] sm:$0xff]
      %v371 = vld [vmem:[%s198 + $0x508] sm:$0xff]
      %v372 = vld [vmem:[%s198 + $0x510] sm:$0xff]
      %v373 = vld [vmem:[%s198 + $0x518] sm:$0xff]
      %v374 = vld [vmem:[%s198 + $0x520] sm:$0xff]
      %v375 = vld [vmem:[%s198 + $0x528] sm:$0xff]
      %v376 = vld [vmem:[%s198 + $0x530] sm:$0xff]
      %v377 = vld [vmem:[%s198 + $0x538] sm:$0xff]
      %v378 = vld [vmem:[%s198 + $0x540] sm:$0xff]
      %v379 = vld [vmem:[%s198 + $0x548] sm:$0xff]
      %v380 = vld [vmem:[%s198 + $0x550] sm:$0xff]
      %v381 = vld [vmem:[%s198 + $0x558] sm:$0xff]
      %v382 = vld [vmem:[%s198 + $0x560] sm:$0xff]
      %v383 = vld [vmem:[%s198 + $0x568] sm:$0xff]
      %v384 = vld [vmem:[%s198 + $0x570] sm:$0xff]
      %v385 = vld [vmem:[%s198 + $0x578] sm:$0xff]
      %v386 = vld [vmem:[%s198 + $0x580] sm:$0xff]
      %v387 = vld [vmem:[%s198 + $0x588] sm:$0xff]
      %v388 = vld [vmem:[%s198 + $0x590] sm:$0xff]
      %v389 = vld [vmem:[%s198 + $0x598] sm:$0xff]
      %v390 = vld [vmem:[%s198 + $0x5a0] sm:$0xff]
      %v391 = vld [vmem:[%s198 + $0x5a8] sm:$0xff]
      %v392 = vld [vmem:[%s198 + $0x5b0] sm:$0xff]
      %v393 = vld [vmem:[%s198 + $0x5b8] sm:$0xff]
      %v394 = vld [vmem:[%s198 + $0x5c0] sm:$0xff]
      %v395 = vld [vmem:[%s198 + $0x5c8] sm:$0xff]
      %v396 = vld [vmem:[%s198 + $0x5d0] sm:$0xff]
      %v397 = vld [vmem:[%s198 + $0x5d8] sm:$0xff]
      %v398 = vld [vmem:[%s198 + $0x5e0] sm:$0xff]
      %v399 = vld [vmem:[%s198 + $0x5e8] sm:$0xff]
      %v400 = vld [vmem:[%s198 + $0x5f0] sm:$0xff]
      %v401 = vld [vmem:[%s198 + $0x5f8] sm:$0xff]
      %v402 = vld [vmem:[%s198 + $0x600] sm:$0xff]
      %v403 = vld [vmem:[%s198 + $0x608] sm:$0xff]
      %v404 = vld [vmem:[%s198 + $0x610] sm:$0xff]
      %v405 = vld [vmem:[%s198 + $0x618] sm:$0xff]
      %v406 = vld [vmem:[%s198 + $0x620] sm:$0xff]
      %v407 = vld [vmem:[%s198 + $0x628] sm:$0xff]
      %v408 = vld [vmem:[%s198 + $0x630] sm:$0xff]
      %v409 = vld [vmem:[%s198 + $0x638] sm:$0xff]
      %v410 = vld [vmem:[%s198 + $0x640] sm:$0xff]
      %v411 = vld [vmem:[%s198 + $0x648] sm:$0xff]
      %v412 = vld [vmem:[%s198 + $0x650] sm:$0xff]
      %v413 = vld [vmem:[%s198 + $0x658] sm:$0xff]
      %v414 = vld [vmem:[%s198 + $0x660] sm:$0xff]
      %v415 = vld [vmem:[%s198 + $0x668] sm:$0xff]
      %v416 = vld [vmem:[%s198 + $0x670] sm:$0xff]
      %v417 = vld [vmem:[%s198 + $0x678] sm:$0xff]
      %v418 = vld [vmem:[%s198 + $0x680] sm:$0xff]
      %v419 = vld [vmem:[%s198 + $0x688] sm:$0xff]
      %v420 = vld [vmem:[%s198 + $0x690] sm:$0xff]
      %v421 = vld [vmem:[%s198 + $0x698] sm:$0xff]
      %v422 = vld [vmem:[%s198 + $0x6a0] sm:$0xff]
      %v423 = vld [vmem:[%s198 + $0x6a8] sm:$0xff]
      %v424 = vld [vmem:[%s198 + $0x6b0] sm:$0xff]
      %v425 = vld [vmem:[%s198 + $0x6b8] sm:$0xff]
      %v426 = vld [vmem:[%s198 + $0x6c0] sm:$0xff]
      %v427 = vld [vmem:[%s198 + $0x6c8] sm:$0xff]
      %v428 = vld [vmem:[%s198 + $0x6d0] sm:$0xff]
      %v429 = vld [vmem:[%s198 + $0x6d8] sm:$0xff]
      %v430 = vld [vmem:[%s198 + $0x6e0] sm:$0xff]
      %v431 = vld [vmem:[%s198 + $0x6e8] sm:$0xff]
      %v432 = vld [vmem:[%s198 + $0x6f0] sm:$0xff]
      %v433 = vld [vmem:[%s198 + $0x6f8] sm:$0xff]
      %v434 = vld [vmem:[%s198 + $0x700] sm:$0xff]
      %v435 = vld [vmem:[%s198 + $0x708] sm:$0xff]
      %v436 = vld [vmem:[%s198 + $0x710] sm:$0xff]
      %v437 = vld [vmem:[%s198 + $0x718] sm:$0xff]
      %v438 = vld [vmem:[%s198 + $0x720] sm:$0xff]
      %v439 = vld [vmem:[%s198 + $0x728] sm:$0xff]
      %v440 = vld [vmem:[%s198 + $0x730] sm:$0xff]
      %v441 = vld [vmem:[%s198 + $0x738] sm:$0xff]
      %v442 = vld [vmem:[%s198 + $0x740] sm:$0xff]
      %v443 = vld [vmem:[%s198 + $0x748] sm:$0xff]
      %v444 = vld [vmem:[%s198 + $0x750] sm:$0xff]
      %v445 = vld [vmem:[%s198 + $0x758] sm:$0xff]
      %v446 = vld [vmem:[%s198 + $0x760] sm:$0xff]
      %v447 = vld [vmem:[%s198 + $0x768] sm:$0xff]
      %v448 = vld [vmem:[%s198 + $0x770] sm:$0xff]
      %v449 = vld [vmem:[%s198 + $0x778] sm:$0xff]
      %v450 = vld [vmem:[%s198 + $0x780] sm:$0xff]
      %v451 = vld [vmem:[%s198 + $0x788] sm:$0xff]
      %v452 = vld [vmem:[%s198 + $0x790] sm:$0xff]
      %v453 = vld [vmem:[%s198 + $0x798] sm:$0xff]
      %v454 = vld [vmem:[%s198 + $0x7a0] sm:$0xff]
      %v455 = vld [vmem:[%s198 + $0x7a8] sm:$0xff]
      %v456 = vld [vmem:[%s198 + $0x7b0] sm:$0xff]
      %v457 = vld [vmem:[%s198 + $0x7b8] sm:$0xff]
      %v458 = vld [vmem:[%s198 + $0x7c0] sm:$0xff]
      %v459 = vld [vmem:[%s198 + $0x7c8] sm:$0xff]
      %v460 = vld [vmem:[%s198 + $0x7d0] sm:$0xff]
      %v461 = vld [vmem:[%s198 + $0x7d8] sm:$0xff]
      %v462 = vld [vmem:[%s198 + $0x7e0] sm:$0xff]
      %v463 = vld [vmem:[%s198 + $0x7e8] sm:$0xff]
      %v464 = vld [vmem:[%s198 + $0x7f0] sm:$0xff]
      %v465 = vld [vmem:[%s198 + $0x7f8] sm:$0xff]
      %v466 = vpack.c.bf16 %v212, %v210
      %v467 = vpack.c.bf16 %v213, %v211
      %v468 = vpack.c.bf16 %v216, %v214
      %v469 = vpack.c.bf16 %v217, %v215
      %v470 = vpack.c.bf16 %v220, %v218
      %v471 = vpack.c.bf16 %v221, %v219
      %v472 = vpack.c.bf16 %v224, %v222
      %v473 = vpack.c.bf16 %v225, %v223
      %v474 = vpack.c.bf16 %v228, %v226
      %v475 = vpack.c.bf16 %v229, %v227
      %v476 = vpack.c.bf16 %v232, %v230
      %v477 = vpack.c.bf16 %v233, %v231
      %v478 = vpack.c.bf16 %v236, %v234
      %v479 = vpack.c.bf16 %v237, %v235
      %v480 = vpack.c.bf16 %v240, %v238
      %v481 = vpack.c.bf16 %v241, %v239
      %v482 = vpack.c.bf16 %v244, %v242
      %v483 = vpack.c.bf16 %v245, %v243
      %v484 = vpack.c.bf16 %v248, %v246
      %v485 = vpack.c.bf16 %v249, %v247
      %v486 = vpack.c.bf16 %v252, %v250
      %v487 = vpack.c.bf16 %v253, %v251
      %v488 = vpack.c.bf16 %v256, %v254
      %v489 = vpack.c.bf16 %v257, %v255
      %v490 = vpack.c.bf16 %v260, %v258
      %v491 = vpack.c.bf16 %v261, %v259
      %v492 = vpack.c.bf16 %v264, %v262
      %v493 = vpack.c.bf16 %v265, %v263
      %v494 = vpack.c.bf16 %v268, %v266
      %v495 = vpack.c.bf16 %v269, %v267
      %v496 = vpack.c.bf16 %v272, %v270
      %v497 = vpack.c.bf16 %v273, %v271
      %v498 = vpack.c.bf16 %v276, %v274
      %v499 = vpack.c.bf16 %v277, %v275
      %v500 = vpack.c.bf16 %v280, %v278
      %v501 = vpack.c.bf16 %v281, %v279
      %v502 = vpack.c.bf16 %v284, %v282
      %v503 = vpack.c.bf16 %v285, %v283
      %v504 = vpack.c.bf16 %v288, %v286
      %v505 = vpack.c.bf16 %v289, %v287
      %v506 = vpack.c.bf16 %v292, %v290
      %v507 = vpack.c.bf16 %v293, %v291
      %v508 = vpack.c.bf16 %v296, %v294
      %v509 = vpack.c.bf16 %v297, %v295
      %v510 = vpack.c.bf16 %v300, %v298
      %v511 = vpack.c.bf16 %v301, %v299
      %v512 = vpack.c.bf16 %v304, %v302
      %v513 = vpack.c.bf16 %v305, %v303
      %v514 = vpack.c.bf16 %v308, %v306
      %v515 = vpack.c.bf16 %v309, %v307
      %v516 = vpack.c.bf16 %v312, %v310
      %v517 = vpack.c.bf16 %v313, %v311
      %v518 = vpack.c.bf16 %v316, %v314
      %v519 = vpack.c.bf16 %v317, %v315
      %v520 = vpack.c.bf16 %v320, %v318
      %v521 = vpack.c.bf16 %v321, %v319
      %v522 = vpack.c.bf16 %v324, %v322
      %v523 = vpack.c.bf16 %v325, %v323
      %v524 = vpack.c.bf16 %v328, %v326
      %v525 = vpack.c.bf16 %v329, %v327
      %v526 = vpack.c.bf16 %v332, %v330
      %v527 = vpack.c.bf16 %v333, %v331
      %v528 = vpack.c.bf16 %v336, %v334
      %v529 = vpack.c.bf16 %v337, %v335
      %v530 = vpack.c.bf16 %v340, %v338
      %v531 = vpack.c.bf16 %v341, %v339
      %v532 = vpack.c.bf16 %v344, %v342
      %v533 = vpack.c.bf16 %v345, %v343
      %v534 = vpack.c.bf16 %v348, %v346
      %v535 = vpack.c.bf16 %v349, %v347
      %v536 = vpack.c.bf16 %v352, %v350
      %v537 = vpack.c.bf16 %v353, %v351
      %v538 = vpack.c.bf16 %v356, %v354
      %v539 = vpack.c.bf16 %v357, %v355
      %v540 = vpack.c.bf16 %v360, %v358
      %v541 = vpack.c.bf16 %v361, %v359
      %v542 = vpack.c.bf16 %v364, %v362
      %v543 = vpack.c.bf16 %v365, %v363
      %v544 = vpack.c.bf16 %v368, %v366
      %v545 = vpack.c.bf16 %v369, %v367
      %v546 = vpack.c.bf16 %v372, %v370
      %v547 = vpack.c.bf16 %v373, %v371
      %v548 = vpack.c.bf16 %v376, %v374
      %v549 = vpack.c.bf16 %v377, %v375
      %v550 = vpack.c.bf16 %v380, %v378
      %v551 = vpack.c.bf16 %v381, %v379
      %v552 = vpack.c.bf16 %v384, %v382
      %v553 = vpack.c.bf16 %v385, %v383
      %v554 = vpack.c.bf16 %v388, %v386
      %v555 = vpack.c.bf16 %v389, %v387
      %v556 = vpack.c.bf16 %v392, %v390
      %v557 = vpack.c.bf16 %v393, %v391
      %v558 = vpack.c.bf16 %v396, %v394
      %v559 = vpack.c.bf16 %v397, %v395
      %v560 = vpack.c.bf16 %v400, %v398
      %v561 = vpack.c.bf16 %v401, %v399
      %v562 = vpack.c.bf16 %v404, %v402
      %v563 = vpack.c.bf16 %v405, %v403
      %v564 = vpack.c.bf16 %v408, %v406
      %v565 = vpack.c.bf16 %v409, %v407
      %v566 = vpack.c.bf16 %v412, %v410
      %v567 = vpack.c.bf16 %v413, %v411
      %v568 = vpack.c.bf16 %v416, %v414
      %v569 = vpack.c.bf16 %v417, %v415
      %v570 = vpack.c.bf16 %v420, %v418
      %v571 = vpack.c.bf16 %v421, %v419
      %v572 = vpack.c.bf16 %v424, %v422
      %v573 = vpack.c.bf16 %v425, %v423
      %v574 = vpack.c.bf16 %v428, %v426
      %v575 = vpack.c.bf16 %v429, %v427
      %v576 = vpack.c.bf16 %v432, %v430
      %v577 = vpack.c.bf16 %v433, %v431
      %v578 = vpack.c.bf16 %v436, %v434
      %v579 = vpack.c.bf16 %v437, %v435
      %v580 = vpack.c.bf16 %v440, %v438
      %v581 = vpack.c.bf16 %v441, %v439
      %v582 = vpack.c.bf16 %v444, %v442
      %v583 = vpack.c.bf16 %v445, %v443
      %v584 = vpack.c.bf16 %v448, %v446
      %v585 = vpack.c.bf16 %v449, %v447
      %v586 = vpack.c.bf16 %v452, %v450
      %v587 = vpack.c.bf16 %v453, %v451
      %v588 = vpack.c.bf16 %v456, %v454
      %v589 = vpack.c.bf16 %v457, %v455
      %v590 = vpack.c.bf16 %v460, %v458
      %v591 = vpack.c.bf16 %v461, %v459
      %v592 = vpack.c.bf16 %v464, %v462
      %v593 = vpack.c.bf16 %v465, %v463
      %v594 = vld [vmem:[%s0] sm:$0xff]
      %v595 = vld [vmem:[%s0 + $0x8] sm:$0xff]
      %v596 = vld [vmem:[%s0 + $0x10] sm:$0xff]
      %v597 = vld [vmem:[%s0 + $0x18] sm:$0xff]
      %v598 = vld [vmem:[%s0 + $0x20] sm:$0xff]
      %v599 = vld [vmem:[%s0 + $0x28] sm:$0xff]
      %v600 = vld [vmem:[%s0 + $0x30] sm:$0xff]
      %v601 = vld [vmem:[%s0 + $0x38] sm:$0xff]
      %v602 = vld [vmem:[%s0 + $0x40] sm:$0xff]
      %v603 = vld [vmem:[%s0 + $0x48] sm:$0xff]
      %v604 = vld [vmem:[%s0 + $0x50] sm:$0xff]
      %v605 = vld [vmem:[%s0 + $0x58] sm:$0xff]
      %v606 = vld [vmem:[%s0 + $0x60] sm:$0xff]
      %v607 = vld [vmem:[%s0 + $0x68] sm:$0xff]
      %v608 = vld [vmem:[%s0 + $0x70] sm:$0xff]
      %v609 = vld [vmem:[%s0 + $0x78] sm:$0xff]
      %v610 = vld [vmem:[%s0 + $0x80] sm:$0xff]
      %v611 = vld [vmem:[%s0 + $0x88] sm:$0xff]
      %v612 = vld [vmem:[%s0 + $0x90] sm:$0xff]
      %v613 = vld [vmem:[%s0 + $0x98] sm:$0xff]
      %v614 = vld [vmem:[%s0 + $0xa0] sm:$0xff]
      %v615 = vld [vmem:[%s0 + $0xa8] sm:$0xff]
      %v616 = vld [vmem:[%s0 + $0xb0] sm:$0xff]
      %v617 = vld [vmem:[%s0 + $0xb8] sm:$0xff]
      %v618 = vld [vmem:[%s0 + $0xc0] sm:$0xff]
      %v619 = vld [vmem:[%s0 + $0xc8] sm:$0xff]
      %v620 = vld [vmem:[%s0 + $0xd0] sm:$0xff]
      %v621 = vld [vmem:[%s0 + $0xd8] sm:$0xff]
      %v622 = vld [vmem:[%s0 + $0xe0] sm:$0xff]
      %v623 = vld [vmem:[%s0 + $0xe8] sm:$0xff]
      %v624 = vld [vmem:[%s0 + $0xf0] sm:$0xff]
      %v625 = vld [vmem:[%s0 + $0xf8] sm:$0xff]
      %v626 = vld [vmem:[%s0 + $0x100] sm:$0xff]
      %v627 = vld [vmem:[%s0 + $0x108] sm:$0xff]
      %v628 = vld [vmem:[%s0 + $0x110] sm:$0xff]
      %v629 = vld [vmem:[%s0 + $0x118] sm:$0xff]
      %v630 = vld [vmem:[%s0 + $0x120] sm:$0xff]
      %v631 = vld [vmem:[%s0 + $0x128] sm:$0xff]
      %v632 = vld [vmem:[%s0 + $0x130] sm:$0xff]
      %v633 = vld [vmem:[%s0 + $0x138] sm:$0xff]
      %v634 = vld [vmem:[%s0 + $0x140] sm:$0xff]
      %v635 = vld [vmem:[%s0 + $0x148] sm:$0xff]
      %v636 = vld [vmem:[%s0 + $0x150] sm:$0xff]
      %v637 = vld [vmem:[%s0 + $0x158] sm:$0xff]
      %v638 = vld [vmem:[%s0 + $0x160] sm:$0xff]
      %v639 = vld [vmem:[%s0 + $0x168] sm:$0xff]
      %v640 = vld [vmem:[%s0 + $0x170] sm:$0xff]
      %v641 = vld [vmem:[%s0 + $0x178] sm:$0xff]
      %v642 = vld [vmem:[%s0 + $0x180] sm:$0xff]
      %v643 = vld [vmem:[%s0 + $0x188] sm:$0xff]
      %v644 = vld [vmem:[%s0 + $0x190] sm:$0xff]
      %v645 = vld [vmem:[%s0 + $0x198] sm:$0xff]
      %v646 = vld [vmem:[%s0 + $0x1a0] sm:$0xff]
      %v647 = vld [vmem:[%s0 + $0x1a8] sm:$0xff]
      %v648 = vld [vmem:[%s0 + $0x1b0] sm:$0xff]
      %v649 = vld [vmem:[%s0 + $0x1b8] sm:$0xff]
      %v650 = vld [vmem:[%s0 + $0x1c0] sm:$0xff]
      %v651 = vld [vmem:[%s0 + $0x1c8] sm:$0xff]
      %v652 = vld [vmem:[%s0 + $0x1d0] sm:$0xff]
      %v653 = vld [vmem:[%s0 + $0x1d8] sm:$0xff]
      %v654 = vld [vmem:[%s0 + $0x1e0] sm:$0xff]
      %v655 = vld [vmem:[%s0 + $0x1e8] sm:$0xff]
      %v656 = vld [vmem:[%s0 + $0x1f0] sm:$0xff]
      %v657 = vld [vmem:[%s0 + $0x1f8] sm:$0xff]
      %v658 = vld [vmem:[%s0 + $0x200] sm:$0xff]
      %v659 = vld [vmem:[%s0 + $0x208] sm:$0xff]
      %v660 = vld [vmem:[%s0 + $0x210] sm:$0xff]
      %v661 = vld [vmem:[%s0 + $0x218] sm:$0xff]
      %v662 = vld [vmem:[%s0 + $0x220] sm:$0xff]
      %v663 = vld [vmem:[%s0 + $0x228] sm:$0xff]
      %v664 = vld [vmem:[%s0 + $0x230] sm:$0xff]
      %v665 = vld [vmem:[%s0 + $0x238] sm:$0xff]
      %v666 = vld [vmem:[%s0 + $0x240] sm:$0xff]
      %v667 = vld [vmem:[%s0 + $0x248] sm:$0xff]
      %v668 = vld [vmem:[%s0 + $0x250] sm:$0xff]
      %v669 = vld [vmem:[%s0 + $0x258] sm:$0xff]
      %v670 = vld [vmem:[%s0 + $0x260] sm:$0xff]
      %v671 = vld [vmem:[%s0 + $0x268] sm:$0xff]
      %v672 = vld [vmem:[%s0 + $0x270] sm:$0xff]
      %v673 = vld [vmem:[%s0 + $0x278] sm:$0xff]
      %v674 = vld [vmem:[%s0 + $0x280] sm:$0xff]
      %v675 = vld [vmem:[%s0 + $0x288] sm:$0xff]
      %v676 = vld [vmem:[%s0 + $0x290] sm:$0xff]
      %v677 = vld [vmem:[%s0 + $0x298] sm:$0xff]
      %v678 = vld [vmem:[%s0 + $0x2a0] sm:$0xff]
      %v679 = vld [vmem:[%s0 + $0x2a8] sm:$0xff]
      %v680 = vld [vmem:[%s0 + $0x2b0] sm:$0xff]
      %v681 = vld [vmem:[%s0 + $0x2b8] sm:$0xff]
      %v682 = vld [vmem:[%s0 + $0x2c0] sm:$0xff]
      %v683 = vld [vmem:[%s0 + $0x2c8] sm:$0xff]
      %v684 = vld [vmem:[%s0 + $0x2d0] sm:$0xff]
      %v685 = vld [vmem:[%s0 + $0x2d8] sm:$0xff]
      %v686 = vld [vmem:[%s0 + $0x2e0] sm:$0xff]
      %v687 = vld [vmem:[%s0 + $0x2e8] sm:$0xff]
      %v688 = vld [vmem:[%s0 + $0x2f0] sm:$0xff]
      %v689 = vld [vmem:[%s0 + $0x2f8] sm:$0xff]
      %v690 = vld [vmem:[%s0 + $0x300] sm:$0xff]
      %v691 = vld [vmem:[%s0 + $0x308] sm:$0xff]
      %v692 = vld [vmem:[%s0 + $0x310] sm:$0xff]
      %v693 = vld [vmem:[%s0 + $0x318] sm:$0xff]
      %v694 = vld [vmem:[%s0 + $0x320] sm:$0xff]
      %v695 = vld [vmem:[%s0 + $0x328] sm:$0xff]
      %v696 = vld [vmem:[%s0 + $0x330] sm:$0xff]
      %v697 = vld [vmem:[%s0 + $0x338] sm:$0xff]
      %v698 = vld [vmem:[%s0 + $0x340] sm:$0xff]
      %v699 = vld [vmem:[%s0 + $0x348] sm:$0xff]
      %v700 = vld [vmem:[%s0 + $0x350] sm:$0xff]
      %v701 = vld [vmem:[%s0 + $0x358] sm:$0xff]
      %v702 = vld [vmem:[%s0 + $0x360] sm:$0xff]
      %v703 = vld [vmem:[%s0 + $0x368] sm:$0xff]
      %v704 = vld [vmem:[%s0 + $0x370] sm:$0xff]
      %v705 = vld [vmem:[%s0 + $0x378] sm:$0xff]
      %v706 = vld [vmem:[%s0 + $0x380] sm:$0xff]
      %v707 = vld [vmem:[%s0 + $0x388] sm:$0xff]
      %v708 = vld [vmem:[%s0 + $0x390] sm:$0xff]
      %v709 = vld [vmem:[%s0 + $0x398] sm:$0xff]
      %v710 = vld [vmem:[%s0 + $0x3a0] sm:$0xff]
      %v711 = vld [vmem:[%s0 + $0x3a8] sm:$0xff]
      %v712 = vld [vmem:[%s0 + $0x3b0] sm:$0xff]
      %v713 = vld [vmem:[%s0 + $0x3b8] sm:$0xff]
      %v714 = vld [vmem:[%s0 + $0x3c0] sm:$0xff]
      %v715 = vld [vmem:[%s0 + $0x3c8] sm:$0xff]
      %v716 = vld [vmem:[%s0 + $0x3d0] sm:$0xff]
      %v717 = vld [vmem:[%s0 + $0x3d8] sm:$0xff]
      %v718 = vld [vmem:[%s0 + $0x3e0] sm:$0xff]
      %v719 = vld [vmem:[%s0 + $0x3e8] sm:$0xff]
      %v720 = vld [vmem:[%s0 + $0x3f0] sm:$0xff]
      %v721 = vld [vmem:[%s0 + $0x3f8] sm:$0xff]
      %v722 = vld [vmem:[%s0 + $0x400] sm:$0xff]
      %v723 = vld [vmem:[%s0 + $0x408] sm:$0xff]
      %v724 = vld [vmem:[%s0 + $0x410] sm:$0xff]
      %v725 = vld [vmem:[%s0 + $0x418] sm:$0xff]
      %v726 = vld [vmem:[%s0 + $0x420] sm:$0xff]
      %v727 = vld [vmem:[%s0 + $0x428] sm:$0xff]
      %v728 = vld [vmem:[%s0 + $0x430] sm:$0xff]
      %v729 = vld [vmem:[%s0 + $0x438] sm:$0xff]
      %v730 = vld [vmem:[%s0 + $0x440] sm:$0xff]
      %v731 = vld [vmem:[%s0 + $0x448] sm:$0xff]
      %v732 = vld [vmem:[%s0 + $0x450] sm:$0xff]
      %v733 = vld [vmem:[%s0 + $0x458] sm:$0xff]
      %v734 = vld [vmem:[%s0 + $0x460] sm:$0xff]
      %v735 = vld [vmem:[%s0 + $0x468] sm:$0xff]
      %v736 = vld [vmem:[%s0 + $0x470] sm:$0xff]
      %v737 = vld [vmem:[%s0 + $0x478] sm:$0xff]
      %v738 = vld [vmem:[%s0 + $0x480] sm:$0xff]
      %v739 = vld [vmem:[%s0 + $0x488] sm:$0xff]
      %v740 = vld [vmem:[%s0 + $0x490] sm:$0xff]
      %v741 = vld [vmem:[%s0 + $0x498] sm:$0xff]
      %v742 = vld [vmem:[%s0 + $0x4a0] sm:$0xff]
      %v743 = vld [vmem:[%s0 + $0x4a8] sm:$0xff]
      %v744 = vld [vmem:[%s0 + $0x4b0] sm:$0xff]
      %v745 = vld [vmem:[%s0 + $0x4b8] sm:$0xff]
      %v746 = vld [vmem:[%s0 + $0x4c0] sm:$0xff]
      %v747 = vld [vmem:[%s0 + $0x4c8] sm:$0xff]
      %v748 = vld [vmem:[%s0 + $0x4d0] sm:$0xff]
      %v749 = vld [vmem:[%s0 + $0x4d8] sm:$0xff]
      %v750 = vld [vmem:[%s0 + $0x4e0] sm:$0xff]
      %v751 = vld [vmem:[%s0 + $0x4e8] sm:$0xff]
      %v752 = vld [vmem:[%s0 + $0x4f0] sm:$0xff]
      %v753 = vld [vmem:[%s0 + $0x4f8] sm:$0xff]
      %v754 = vld [vmem:[%s0 + $0x500] sm:$0xff]
      %v755 = vld [vmem:[%s0 + $0x508] sm:$0xff]
      %v756 = vld [vmem:[%s0 + $0x510] sm:$0xff]
      %v757 = vld [vmem:[%s0 + $0x518] sm:$0xff]
      %v758 = vld [vmem:[%s0 + $0x520] sm:$0xff]
      %v759 = vld [vmem:[%s0 + $0x528] sm:$0xff]
      %v760 = vld [vmem:[%s0 + $0x530] sm:$0xff]
      %v761 = vld [vmem:[%s0 + $0x538] sm:$0xff]
      %v762 = vld [vmem:[%s0 + $0x540] sm:$0xff]
      %v763 = vld [vmem:[%s0 + $0x548] sm:$0xff]
      %v764 = vld [vmem:[%s0 + $0x550] sm:$0xff]
      %v765 = vld [vmem:[%s0 + $0x558] sm:$0xff]
      %v766 = vld [vmem:[%s0 + $0x560] sm:$0xff]
      %v767 = vld [vmem:[%s0 + $0x568] sm:$0xff]
      %v768 = vld [vmem:[%s0 + $0x570] sm:$0xff]
      %v769 = vld [vmem:[%s0 + $0x578] sm:$0xff]
      %v770 = vld [vmem:[%s0 + $0x580] sm:$0xff]
      %v771 = vld [vmem:[%s0 + $0x588] sm:$0xff]
      %v772 = vld [vmem:[%s0 + $0x590] sm:$0xff]
      %v773 = vld [vmem:[%s0 + $0x598] sm:$0xff]
      %v774 = vld [vmem:[%s0 + $0x5a0] sm:$0xff]
      %v775 = vld [vmem:[%s0 + $0x5a8] sm:$0xff]
      %v776 = vld [vmem:[%s0 + $0x5b0] sm:$0xff]
      %v777 = vld [vmem:[%s0 + $0x5b8] sm:$0xff]
      %v778 = vld [vmem:[%s0 + $0x5c0] sm:$0xff]
      %v779 = vld [vmem:[%s0 + $0x5c8] sm:$0xff]
      %v780 = vld [vmem:[%s0 + $0x5d0] sm:$0xff]
      %v781 = vld [vmem:[%s0 + $0x5d8] sm:$0xff]
      %v782 = vld [vmem:[%s0 + $0x5e0] sm:$0xff]
      %v783 = vld [vmem:[%s0 + $0x5e8] sm:$0xff]
      %v784 = vld [vmem:[%s0 + $0x5f0] sm:$0xff]
      %v785 = vld [vmem:[%s0 + $0x5f8] sm:$0xff]
      %v786 = vld [vmem:[%s0 + $0x600] sm:$0xff]
      %v787 = vld [vmem:[%s0 + $0x608] sm:$0xff]
      %v788 = vld [vmem:[%s0 + $0x610] sm:$0xff]
      %v789 = vld [vmem:[%s0 + $0x618] sm:$0xff]
      %v790 = vld [vmem:[%s0 + $0x620] sm:$0xff]
      %v791 = vld [vmem:[%s0 + $0x628] sm:$0xff]
      %v792 = vld [vmem:[%s0 + $0x630] sm:$0xff]
      %v793 = vld [vmem:[%s0 + $0x638] sm:$0xff]
      %v794 = vld [vmem:[%s0 + $0x640] sm:$0xff]
      %v795 = vld [vmem:[%s0 + $0x648] sm:$0xff]
      %v796 = vld [vmem:[%s0 + $0x650] sm:$0xff]
      %v797 = vld [vmem:[%s0 + $0x658] sm:$0xff]
      %v798 = vld [vmem:[%s0 + $0x660] sm:$0xff]
      %v799 = vld [vmem:[%s0 + $0x668] sm:$0xff]
      %v800 = vld [vmem:[%s0 + $0x670] sm:$0xff]
      %v801 = vld [vmem:[%s0 + $0x678] sm:$0xff]
      %v802 = vld [vmem:[%s0 + $0x680] sm:$0xff]
      %v803 = vld [vmem:[%s0 + $0x688] sm:$0xff]
      %v804 = vld [vmem:[%s0 + $0x690] sm:$0xff]
      %v805 = vld [vmem:[%s0 + $0x698] sm:$0xff]
      %v806 = vld [vmem:[%s0 + $0x6a0] sm:$0xff]
      %v807 = vld [vmem:[%s0 + $0x6a8] sm:$0xff]
      %v808 = vld [vmem:[%s0 + $0x6b0] sm:$0xff]
      %v809 = vld [vmem:[%s0 + $0x6b8] sm:$0xff]
      %v810 = vld [vmem:[%s0 + $0x6c0] sm:$0xff]
      %v811 = vld [vmem:[%s0 + $0x6c8] sm:$0xff]
      %v812 = vld [vmem:[%s0 + $0x6d0] sm:$0xff]
      %v813 = vld [vmem:[%s0 + $0x6d8] sm:$0xff]
      %v814 = vld [vmem:[%s0 + $0x6e0] sm:$0xff]
      %v815 = vld [vmem:[%s0 + $0x6e8] sm:$0xff]
      %v816 = vld [vmem:[%s0 + $0x6f0] sm:$0xff]
      %v817 = vld [vmem:[%s0 + $0x6f8] sm:$0xff]
      %v818 = vld [vmem:[%s0 + $0x700] sm:$0xff]
      %v819 = vld [vmem:[%s0 + $0x708] sm:$0xff]
      %v820 = vld [vmem:[%s0 + $0x710] sm:$0xff]
      %v821 = vld [vmem:[%s0 + $0x718] sm:$0xff]
      %v822 = vld [vmem:[%s0 + $0x720] sm:$0xff]
      %v823 = vld [vmem:[%s0 + $0x728] sm:$0xff]
      %v824 = vld [vmem:[%s0 + $0x730] sm:$0xff]
      %v825 = vld [vmem:[%s0 + $0x738] sm:$0xff]
      %v826 = vld [vmem:[%s0 + $0x740] sm:$0xff]
      %v827 = vld [vmem:[%s0 + $0x748] sm:$0xff]
      %v828 = vld [vmem:[%s0 + $0x750] sm:$0xff]
      %v829 = vld [vmem:[%s0 + $0x758] sm:$0xff]
      %v830 = vld [vmem:[%s0 + $0x760] sm:$0xff]
      %v831 = vld [vmem:[%s0 + $0x768] sm:$0xff]
      %v832 = vld [vmem:[%s0 + $0x770] sm:$0xff]
      %v833 = vld [vmem:[%s0 + $0x778] sm:$0xff]
      %v834 = vld [vmem:[%s0 + $0x780] sm:$0xff]
      %v835 = vld [vmem:[%s0 + $0x788] sm:$0xff]
      %v836 = vld [vmem:[%s0 + $0x790] sm:$0xff]
      %v837 = vld [vmem:[%s0 + $0x798] sm:$0xff]
      %v838 = vld [vmem:[%s0 + $0x7a0] sm:$0xff]
      %v839 = vld [vmem:[%s0 + $0x7a8] sm:$0xff]
      %v840 = vld [vmem:[%s0 + $0x7b0] sm:$0xff]
      %v841 = vld [vmem:[%s0 + $0x7b8] sm:$0xff]
      %v842 = vld [vmem:[%s0 + $0x7c0] sm:$0xff]
      %v843 = vld [vmem:[%s0 + $0x7c8] sm:$0xff]
      %v844 = vld [vmem:[%s0 + $0x7d0] sm:$0xff]
      %v845 = vld [vmem:[%s0 + $0x7d8] sm:$0xff]
      %v846 = vld [vmem:[%s0 + $0x7e0] sm:$0xff]
      %v847 = vld [vmem:[%s0 + $0x7e8] sm:$0xff]
      %v848 = vld [vmem:[%s0 + $0x7f0] sm:$0xff]
      %v849 = vld [vmem:[%s0 + $0x7f8] sm:$0xff]
      %v850 = vld [vmem:[%s2] sm:$0xff]
      %v851 = vld [vmem:[%s2 + $0x8] sm:$0xff]
      %v852 = vld [vmem:[%s2 + $0x10] sm:$0xff]
      %v853 = vld [vmem:[%s2 + $0x18] sm:$0xff]
      %v854 = vld [vmem:[%s2 + $0x20] sm:$0xff]
      %v855 = vld [vmem:[%s2 + $0x28] sm:$0xff]
      %v856 = vld [vmem:[%s2 + $0x30] sm:$0xff]
      %v857 = vld [vmem:[%s2 + $0x38] sm:$0xff]
      %v858 = vld [vmem:[%s2 + $0x40] sm:$0xff]
      %v859 = vld [vmem:[%s2 + $0x48] sm:$0xff]
      %v860 = vld [vmem:[%s2 + $0x50] sm:$0xff]
      %v861 = vld [vmem:[%s2 + $0x58] sm:$0xff]
      %v862 = vld [vmem:[%s2 + $0x60] sm:$0xff]
      %v863 = vld [vmem:[%s2 + $0x68] sm:$0xff]
      %v864 = vld [vmem:[%s2 + $0x70] sm:$0xff]
      %v865 = vld [vmem:[%s2 + $0x78] sm:$0xff]
      %v866 = vld [vmem:[%s2 + $0x80] sm:$0xff]
      %v867 = vld [vmem:[%s2 + $0x88] sm:$0xff]
      %v868 = vld [vmem:[%s2 + $0x90] sm:$0xff]
      %v869 = vld [vmem:[%s2 + $0x98] sm:$0xff]
      %v870 = vld [vmem:[%s2 + $0xa0] sm:$0xff]
      %v871 = vld [vmem:[%s2 + $0xa8] sm:$0xff]
      %v872 = vld [vmem:[%s2 + $0xb0] sm:$0xff]
      %v873 = vld [vmem:[%s2 + $0xb8] sm:$0xff]
      %v874 = vld [vmem:[%s2 + $0xc0] sm:$0xff]
      %v875 = vld [vmem:[%s2 + $0xc8] sm:$0xff]
      %v876 = vld [vmem:[%s2 + $0xd0] sm:$0xff]
      %v877 = vld [vmem:[%s2 + $0xd8] sm:$0xff]
      %v878 = vld [vmem:[%s2 + $0xe0] sm:$0xff]
      %v879 = vld [vmem:[%s2 + $0xe8] sm:$0xff]
      %v880 = vld [vmem:[%s2 + $0xf0] sm:$0xff]
      %v881 = vld [vmem:[%s2 + $0xf8] sm:$0xff]
      %v882 = vld [vmem:[%s2 + $0x100] sm:$0xff]
      %v883 = vld [vmem:[%s2 + $0x108] sm:$0xff]
      %v884 = vld [vmem:[%s2 + $0x110] sm:$0xff]
      %v885 = vld [vmem:[%s2 + $0x118] sm:$0xff]
      %v886 = vld [vmem:[%s2 + $0x120] sm:$0xff]
      %v887 = vld [vmem:[%s2 + $0x128] sm:$0xff]
      %v888 = vld [vmem:[%s2 + $0x130] sm:$0xff]
      %v889 = vld [vmem:[%s2 + $0x138] sm:$0xff]
      %v890 = vld [vmem:[%s2 + $0x140] sm:$0xff]
      %v891 = vld [vmem:[%s2 + $0x148] sm:$0xff]
      %v892 = vld [vmem:[%s2 + $0x150] sm:$0xff]
      %v893 = vld [vmem:[%s2 + $0x158] sm:$0xff]
      %v894 = vld [vmem:[%s2 + $0x160] sm:$0xff]
      %v895 = vld [vmem:[%s2 + $0x168] sm:$0xff]
      %v896 = vld [vmem:[%s2 + $0x170] sm:$0xff]
      %v897 = vld [vmem:[%s2 + $0x178] sm:$0xff]
      %v898 = vld [vmem:[%s2 + $0x180] sm:$0xff]
      %v899 = vld [vmem:[%s2 + $0x188] sm:$0xff]
      %v900 = vld [vmem:[%s2 + $0x190] sm:$0xff]
      %v901 = vld [vmem:[%s2 + $0x198] sm:$0xff]
      %v902 = vld [vmem:[%s2 + $0x1a0] sm:$0xff]
      %v903 = vld [vmem:[%s2 + $0x1a8] sm:$0xff]
      %v904 = vld [vmem:[%s2 + $0x1b0] sm:$0xff]
      %v905 = vld [vmem:[%s2 + $0x1b8] sm:$0xff]
      %v906 = vld [vmem:[%s2 + $0x1c0] sm:$0xff]
      %v907 = vld [vmem:[%s2 + $0x1c8] sm:$0xff]
      %v908 = vld [vmem:[%s2 + $0x1d0] sm:$0xff]
      %v909 = vld [vmem:[%s2 + $0x1d8] sm:$0xff]
      %v910 = vld [vmem:[%s2 + $0x1e0] sm:$0xff]
      %v911 = vld [vmem:[%s2 + $0x1e8] sm:$0xff]
      %v912 = vld [vmem:[%s2 + $0x1f0] sm:$0xff]
      %v913 = vld [vmem:[%s2 + $0x1f8] sm:$0xff]
      %915 = vset.pattern.permute.xlu0 0
      %916 = vperm.xlu0 %915, %v850
      %v917 = vpop.permute.xlu0 %916
      %920 = vset.pattern.permute.xlu0 0
      %921 = vperm.xlu0 %920, %v851
      %v922 = vpop.permute.xlu0 %921
      %925 = vset.pattern.permute.xlu0 0
      %926 = vperm.xlu0 %925, %v852
      %v927 = vpop.permute.xlu0 %926
      %930 = vset.pattern.permute.xlu0 0
      %931 = vperm.xlu0 %930, %v853
      %v932 = vpop.permute.xlu0 %931
      %935 = vset.pattern.permute.xlu0 0
      %936 = vperm.xlu0 %935, %v854
      %v937 = vpop.permute.xlu0 %936
      %940 = vset.pattern.permute.xlu0 0
      %941 = vperm.xlu0 %940, %v855
      %v942 = vpop.permute.xlu0 %941
      %945 = vset.pattern.permute.xlu0 0
      %946 = vperm.xlu0 %945, %v856
      %v947 = vpop.permute.xlu0 %946
      %950 = vset.pattern.permute.xlu0 0
      %951 = vperm.xlu0 %950, %v857
      %v952 = vpop.permute.xlu0 %951
      %955 = vset.pattern.permute.xlu0 0
      %956 = vperm.xlu0 %955, %v858
      %v957 = vpop.permute.xlu0 %956
      %960 = vset.pattern.permute.xlu0 0
      %961 = vperm.xlu0 %960, %v859
      %v962 = vpop.permute.xlu0 %961
      %965 = vset.pattern.permute.xlu0 0
      %966 = vperm.xlu0 %965, %v860
      %v967 = vpop.permute.xlu0 %966
      %970 = vset.pattern.permute.xlu0 0
      %971 = vperm.xlu0 %970, %v861
      %v972 = vpop.permute.xlu0 %971
      %975 = vset.pattern.permute.xlu0 0
      %976 = vperm.xlu0 %975, %v862
      %v977 = vpop.permute.xlu0 %976
      %980 = vset.pattern.permute.xlu0 0
      %981 = vperm.xlu0 %980, %v863
      %v982 = vpop.permute.xlu0 %981
      %985 = vset.pattern.permute.xlu0 0
      %986 = vperm.xlu0 %985, %v864
      %v987 = vpop.permute.xlu0 %986
      %990 = vset.pattern.permute.xlu0 0
      %991 = vperm.xlu0 %990, %v865
      %v992 = vpop.permute.xlu0 %991
      %995 = vset.pattern.permute.xlu0 0
      %996 = vperm.xlu0 %995, %v866
      %v997 = vpop.permute.xlu0 %996
      %1000 = vset.pattern.permute.xlu0 0
      %1001 = vperm.xlu0 %1000, %v867
      %v1002 = vpop.permute.xlu0 %1001
      %1005 = vset.pattern.permute.xlu0 0
      %1006 = vperm.xlu0 %1005, %v868
      %v1007 = vpop.permute.xlu0 %1006
      %1010 = vset.pattern.permute.xlu0 0
      %1011 = vperm.xlu0 %1010, %v869
      %v1012 = vpop.permute.xlu0 %1011
      %1015 = vset.pattern.permute.xlu0 0
      %1016 = vperm.xlu0 %1015, %v870
      %v1017 = vpop.permute.xlu0 %1016
      %1020 = vset.pattern.permute.xlu0 0
      %1021 = vperm.xlu0 %1020, %v871
      %v1022 = vpop.permute.xlu0 %1021
      %1025 = vset.pattern.permute.xlu0 0
      %1026 = vperm.xlu0 %1025, %v872
      %v1027 = vpop.permute.xlu0 %1026
      %1030 = vset.pattern.permute.xlu0 0
      %1031 = vperm.xlu0 %1030, %v873
      %v1032 = vpop.permute.xlu0 %1031
      %1035 = vset.pattern.permute.xlu0 0
      %1036 = vperm.xlu0 %1035, %v874
      %v1037 = vpop.permute.xlu0 %1036
      %1040 = vset.pattern.permute.xlu0 0
      %1041 = vperm.xlu0 %1040, %v875
      %v1042 = vpop.permute.xlu0 %1041
      %1045 = vset.pattern.permute.xlu0 0
      %1046 = vperm.xlu0 %1045, %v876
      %v1047 = vpop.permute.xlu0 %1046
      %1050 = vset.pattern.permute.xlu0 0
      %1051 = vperm.xlu0 %1050, %v877
      %v1052 = vpop.permute.xlu0 %1051
      %1055 = vset.pattern.permute.xlu0 0
      %1056 = vperm.xlu0 %1055, %v878
      %v1057 = vpop.permute.xlu0 %1056
      %1060 = vset.pattern.permute.xlu0 0
      %1061 = vperm.xlu0 %1060, %v879
      %v1062 = vpop.permute.xlu0 %1061
      %1065 = vset.pattern.permute.xlu0 0
      %1066 = vperm.xlu0 %1065, %v880
      %v1067 = vpop.permute.xlu0 %1066
      %1070 = vset.pattern.permute.xlu0 0
      %1071 = vperm.xlu0 %1070, %v881
      %v1072 = vpop.permute.xlu0 %1071
      %1075 = vset.pattern.permute.xlu0 0
      %1076 = vperm.xlu0 %1075, %v882
      %v1077 = vpop.permute.xlu0 %1076
      %1080 = vset.pattern.permute.xlu0 0
      %1081 = vperm.xlu0 %1080, %v883
      %v1082 = vpop.permute.xlu0 %1081
      %1085 = vset.pattern.permute.xlu0 0
      %1086 = vperm.xlu0 %1085, %v884
      %v1087 = vpop.permute.xlu0 %1086
      %1090 = vset.pattern.permute.xlu0 0
      %1091 = vperm.xlu0 %1090, %v885
      %v1092 = vpop.permute.xlu0 %1091
      %1095 = vset.pattern.permute.xlu0 0
      %1096 = vperm.xlu0 %1095, %v886
      %v1097 = vpop.permute.xlu0 %1096
      %1100 = vset.pattern.permute.xlu0 0
      %1101 = vperm.xlu0 %1100, %v887
      %v1102 = vpop.permute.xlu0 %1101
      %1105 = vset.pattern.permute.xlu0 0
      %1106 = vperm.xlu0 %1105, %v888
      %v1107 = vpop.permute.xlu0 %1106
      %1110 = vset.pattern.permute.xlu0 0
      %1111 = vperm.xlu0 %1110, %v889
      %v1112 = vpop.permute.xlu0 %1111
      %1115 = vset.pattern.permute.xlu0 0
      %1116 = vperm.xlu0 %1115, %v890
      %v1117 = vpop.permute.xlu0 %1116
      %1120 = vset.pattern.permute.xlu0 0
      %1121 = vperm.xlu0 %1120, %v891
      %v1122 = vpop.permute.xlu0 %1121
      %1125 = vset.pattern.permute.xlu0 0
      %1126 = vperm.xlu0 %1125, %v892
      %v1127 = vpop.permute.xlu0 %1126
      %1130 = vset.pattern.permute.xlu0 0
      %1131 = vperm.xlu0 %1130, %v893
      %v1132 = vpop.permute.xlu0 %1131
      %1135 = vset.pattern.permute.xlu0 0
      %1136 = vperm.xlu0 %1135, %v894
      %v1137 = vpop.permute.xlu0 %1136
      %1140 = vset.pattern.permute.xlu0 0
      %1141 = vperm.xlu0 %1140, %v895
      %v1142 = vpop.permute.xlu0 %1141
      %1145 = vset.pattern.permute.xlu0 0
      %1146 = vperm.xlu0 %1145, %v896
      %v1147 = vpop.permute.xlu0 %1146
      %1150 = vset.pattern.permute.xlu0 0
      %1151 = vperm.xlu0 %1150, %v897
      %v1152 = vpop.permute.xlu0 %1151
      %1155 = vset.pattern.permute.xlu0 0
      %1156 = vperm.xlu0 %1155, %v898
      %v1157 = vpop.permute.xlu0 %1156
      %1160 = vset.pattern.permute.xlu0 0
      %1161 = vperm.xlu0 %1160, %v899
      %v1162 = vpop.permute.xlu0 %1161
      %1165 = vset.pattern.permute.xlu0 0
      %1166 = vperm.xlu0 %1165, %v900
      %v1167 = vpop.permute.xlu0 %1166
      %1170 = vset.pattern.permute.xlu0 0
      %1171 = vperm.xlu0 %1170, %v901
      %v1172 = vpop.permute.xlu0 %1171
      %1175 = vset.pattern.permute.xlu0 0
      %1176 = vperm.xlu0 %1175, %v902
      %v1177 = vpop.permute.xlu0 %1176
      %1180 = vset.pattern.permute.xlu0 0
      %1181 = vperm.xlu0 %1180, %v903
      %v1182 = vpop.permute.xlu0 %1181
      %1185 = vset.pattern.permute.xlu0 0
      %1186 = vperm.xlu0 %1185, %v904
      %v1187 = vpop.permute.xlu0 %1186
      %1190 = vset.pattern.permute.xlu0 0
      %1191 = vperm.xlu0 %1190, %v905
      %v1192 = vpop.permute.xlu0 %1191
      %1195 = vset.pattern.permute.xlu0 0
      %1196 = vperm.xlu0 %1195, %v906
      %v1197 = vpop.permute.xlu0 %1196
      %1200 = vset.pattern.permute.xlu0 0
      %1201 = vperm.xlu0 %1200, %v907
      %v1202 = vpop.permute.xlu0 %1201
      %1205 = vset.pattern.permute.xlu0 0
      %1206 = vperm.xlu0 %1205, %v908
      %v1207 = vpop.permute.xlu0 %1206
      %1210 = vset.pattern.permute.xlu0 0
      %1211 = vperm.xlu0 %1210, %v909
      %v1212 = vpop.permute.xlu0 %1211
      %1215 = vset.pattern.permute.xlu0 0
      %1216 = vperm.xlu0 %1215, %v910
      %v1217 = vpop.permute.xlu0 %1216
      %1220 = vset.pattern.permute.xlu0 0
      %1221 = vperm.xlu0 %1220, %v911
      %v1222 = vpop.permute.xlu0 %1221
      %1225 = vset.pattern.permute.xlu0 0
      %1226 = vperm.xlu0 %1225, %v912
      %v1227 = vpop.permute.xlu0 %1226
      %1230 = vset.pattern.permute.xlu0 0
      %1231 = vperm.xlu0 %1230, %v913
      %v1232 = vpop.permute.xlu0 %1231
      %v1490 = vunpack.c.l.b16 %v594
      %v1491 = vunpack.c.h.b16 %v594
      %v1492 = vunpack.c.l.b16 %v595
      %v1493 = vunpack.c.h.b16 %v595
      %v1494 = vunpack.c.l.b16 %v596
      %v1495 = vunpack.c.h.b16 %v596
      %v1496 = vunpack.c.l.b16 %v597
      %v1497 = vunpack.c.h.b16 %v597
      %v1498 = vunpack.c.l.b16 %v598
      %v1499 = vunpack.c.h.b16 %v598
      %v1500 = vunpack.c.l.b16 %v599
      %v1501 = vunpack.c.h.b16 %v599
      %v1502 = vunpack.c.l.b16 %v600
      %v1503 = vunpack.c.h.b16 %v600
      %v1504 = vunpack.c.l.b16 %v601
      %v1505 = vunpack.c.h.b16 %v601
      %v1506 = vunpack.c.l.b16 %v602
      %v1507 = vunpack.c.h.b16 %v602
      %v1508 = vunpack.c.l.b16 %v603
      %v1509 = vunpack.c.h.b16 %v603
      %v1510 = vunpack.c.l.b16 %v604
      %v1511 = vunpack.c.h.b16 %v604
      %v1512 = vunpack.c.l.b16 %v605
      %v1513 = vunpack.c.h.b16 %v605
      %v1514 = vunpack.c.l.b16 %v606
      %v1515 = vunpack.c.h.b16 %v606
      %v1516 = vunpack.c.l.b16 %v607
      %v1517 = vunpack.c.h.b16 %v607
      %v1518 = vunpack.c.l.b16 %v608
      %v1519 = vunpack.c.h.b16 %v608
      %v1520 = vunpack.c.l.b16 %v609
      %v1521 = vunpack.c.h.b16 %v609
      %v1522 = vunpack.c.l.b16 %v610
      %v1523 = vunpack.c.h.b16 %v610
      %v1524 = vunpack.c.l.b16 %v611
      %v1525 = vunpack.c.h.b16 %v611
      %v1526 = vunpack.c.l.b16 %v612
      %v1527 = vunpack.c.h.b16 %v612
      %v1528 = vunpack.c.l.b16 %v613
      %v1529 = vunpack.c.h.b16 %v613
      %v1530 = vunpack.c.l.b16 %v614
      %v1531 = vunpack.c.h.b16 %v614
      %v1532 = vunpack.c.l.b16 %v615
      %v1533 = vunpack.c.h.b16 %v615
      %v1534 = vunpack.c.l.b16 %v616
      %v1535 = vunpack.c.h.b16 %v616
      %v1536 = vunpack.c.l.b16 %v617
      %v1537 = vunpack.c.h.b16 %v617
      %v1538 = vunpack.c.l.b16 %v618
      %v1539 = vunpack.c.h.b16 %v618
      %v1540 = vunpack.c.l.b16 %v619
      %v1541 = vunpack.c.h.b16 %v619
      %v1542 = vunpack.c.l.b16 %v620
      %v1543 = vunpack.c.h.b16 %v620
      %v1544 = vunpack.c.l.b16 %v621
      %v1545 = vunpack.c.h.b16 %v621
      %v1546 = vunpack.c.l.b16 %v622
      %v1547 = vunpack.c.h.b16 %v622
      %v1548 = vunpack.c.l.b16 %v623
      %v1549 = vunpack.c.h.b16 %v623
      %v1550 = vunpack.c.l.b16 %v624
      %v1551 = vunpack.c.h.b16 %v624
      %v1552 = vunpack.c.l.b16 %v625
      %v1553 = vunpack.c.h.b16 %v625
      %v1554 = vunpack.c.l.b16 %v626
      %v1555 = vunpack.c.h.b16 %v626
      %v1556 = vunpack.c.l.b16 %v627
      %v1557 = vunpack.c.h.b16 %v627
      %v1558 = vunpack.c.l.b16 %v628
      %v1559 = vunpack.c.h.b16 %v628
      %v1560 = vunpack.c.l.b16 %v629
      %v1561 = vunpack.c.h.b16 %v629
      %v1562 = vunpack.c.l.b16 %v630
      %v1563 = vunpack.c.h.b16 %v630
      %v1564 = vunpack.c.l.b16 %v631
      %v1565 = vunpack.c.h.b16 %v631
      %v1566 = vunpack.c.l.b16 %v632
      %v1567 = vunpack.c.h.b16 %v632
      %v1568 = vunpack.c.l.b16 %v633
      %v1569 = vunpack.c.h.b16 %v633
      %v1570 = vunpack.c.l.b16 %v634
      %v1571 = vunpack.c.h.b16 %v634
      %v1572 = vunpack.c.l.b16 %v635
      %v1573 = vunpack.c.h.b16 %v635
      %v1574 = vunpack.c.l.b16 %v636
      %v1575 = vunpack.c.h.b16 %v636
      %v1576 = vunpack.c.l.b16 %v637
      %v1577 = vunpack.c.h.b16 %v637
      %v1578 = vunpack.c.l.b16 %v638
      %v1579 = vunpack.c.h.b16 %v638
      %v1580 = vunpack.c.l.b16 %v639
      %v1581 = vunpack.c.h.b16 %v639
      %v1582 = vunpack.c.l.b16 %v640
      %v1583 = vunpack.c.h.b16 %v640
      %v1584 = vunpack.c.l.b16 %v641
      %v1585 = vunpack.c.h.b16 %v641
      %v1586 = vunpack.c.l.b16 %v642
      %v1587 = vunpack.c.h.b16 %v642
      %v1588 = vunpack.c.l.b16 %v643
      %v1589 = vunpack.c.h.b16 %v643
      %v1590 = vunpack.c.l.b16 %v644
      %v1591 = vunpack.c.h.b16 %v644
      %v1592 = vunpack.c.l.b16 %v645
      %v1593 = vunpack.c.h.b16 %v645
      %v1594 = vunpack.c.l.b16 %v646
      %v1595 = vunpack.c.h.b16 %v646
      %v1596 = vunpack.c.l.b16 %v647
      %v1597 = vunpack.c.h.b16 %v647
      %v1598 = vunpack.c.l.b16 %v648
      %v1599 = vunpack.c.h.b16 %v648
      %v1600 = vunpack.c.l.b16 %v649
      %v1601 = vunpack.c.h.b16 %v649
      %v1602 = vunpack.c.l.b16 %v650
      %v1603 = vunpack.c.h.b16 %v650
      %v1604 = vunpack.c.l.b16 %v651
      %v1605 = vunpack.c.h.b16 %v651
      %v1606 = vunpack.c.l.b16 %v652
      %v1607 = vunpack.c.h.b16 %v652
      %v1608 = vunpack.c.l.b16 %v653
      %v1609 = vunpack.c.h.b16 %v653
      %v1610 = vunpack.c.l.b16 %v654
      %v1611 = vunpack.c.h.b16 %v654
      %v1612 = vunpack.c.l.b16 %v655
      %v1613 = vunpack.c.h.b16 %v655
      %v1614 = vunpack.c.l.b16 %v656
      %v1615 = vunpack.c.h.b16 %v656
      %v1616 = vunpack.c.l.b16 %v657
      %v1617 = vunpack.c.h.b16 %v657
      %v1618 = vunpack.c.l.b16 %v658
      %v1619 = vunpack.c.h.b16 %v658
      %v1620 = vunpack.c.l.b16 %v659
      %v1621 = vunpack.c.h.b16 %v659
      %v1622 = vunpack.c.l.b16 %v660
      %v1623 = vunpack.c.h.b16 %v660
      %v1624 = vunpack.c.l.b16 %v661
      %v1625 = vunpack.c.h.b16 %v661
      %v1626 = vunpack.c.l.b16 %v662
      %v1627 = vunpack.c.h.b16 %v662
      %v1628 = vunpack.c.l.b16 %v663
      %v1629 = vunpack.c.h.b16 %v663
      %v1630 = vunpack.c.l.b16 %v664
      %v1631 = vunpack.c.h.b16 %v664
      %v1632 = vunpack.c.l.b16 %v665
      %v1633 = vunpack.c.h.b16 %v665
      %v1634 = vunpack.c.l.b16 %v666
      %v1635 = vunpack.c.h.b16 %v666
      %v1636 = vunpack.c.l.b16 %v667
      %v1637 = vunpack.c.h.b16 %v667
      %v1638 = vunpack.c.l.b16 %v668
      %v1639 = vunpack.c.h.b16 %v668
      %v1640 = vunpack.c.l.b16 %v669
      %v1641 = vunpack.c.h.b16 %v669
      %v1642 = vunpack.c.l.b16 %v670
      %v1643 = vunpack.c.h.b16 %v670
      %v1644 = vunpack.c.l.b16 %v671
      %v1645 = vunpack.c.h.b16 %v671
      %v1646 = vunpack.c.l.b16 %v672
      %v1647 = vunpack.c.h.b16 %v672
      %v1648 = vunpack.c.l.b16 %v673
      %v1649 = vunpack.c.h.b16 %v673
      %v1650 = vunpack.c.l.b16 %v674
      %v1651 = vunpack.c.h.b16 %v674
      %v1652 = vunpack.c.l.b16 %v675
      %v1653 = vunpack.c.h.b16 %v675
      %v1654 = vunpack.c.l.b16 %v676
      %v1655 = vunpack.c.h.b16 %v676
      %v1656 = vunpack.c.l.b16 %v677
      %v1657 = vunpack.c.h.b16 %v677
      %v1658 = vunpack.c.l.b16 %v678
      %v1659 = vunpack.c.h.b16 %v678
      %v1660 = vunpack.c.l.b16 %v679
      %v1661 = vunpack.c.h.b16 %v679
      %v1662 = vunpack.c.l.b16 %v680
      %v1663 = vunpack.c.h.b16 %v680
      %v1664 = vunpack.c.l.b16 %v681
      %v1665 = vunpack.c.h.b16 %v681
      %v1666 = vunpack.c.l.b16 %v682
      %v1667 = vunpack.c.h.b16 %v682
      %v1668 = vunpack.c.l.b16 %v683
      %v1669 = vunpack.c.h.b16 %v683
      %v1670 = vunpack.c.l.b16 %v684
      %v1671 = vunpack.c.h.b16 %v684
      %v1672 = vunpack.c.l.b16 %v685
      %v1673 = vunpack.c.h.b16 %v685
      %v1674 = vunpack.c.l.b16 %v686
      %v1675 = vunpack.c.h.b16 %v686
      %v1676 = vunpack.c.l.b16 %v687
      %v1677 = vunpack.c.h.b16 %v687
      %v1678 = vunpack.c.l.b16 %v688
      %v1679 = vunpack.c.h.b16 %v688
      %v1680 = vunpack.c.l.b16 %v689
      %v1681 = vunpack.c.h.b16 %v689
      %v1682 = vunpack.c.l.b16 %v690
      %v1683 = vunpack.c.h.b16 %v690
      %v1684 = vunpack.c.l.b16 %v691
      %v1685 = vunpack.c.h.b16 %v691
      %v1686 = vunpack.c.l.b16 %v692
      %v1687 = vunpack.c.h.b16 %v692
      %v1688 = vunpack.c.l.b16 %v693
      %v1689 = vunpack.c.h.b16 %v693
      %v1690 = vunpack.c.l.b16 %v694
      %v1691 = vunpack.c.h.b16 %v694
      %v1692 = vunpack.c.l.b16 %v695
      %v1693 = vunpack.c.h.b16 %v695
      %v1694 = vunpack.c.l.b16 %v696
      %v1695 = vunpack.c.h.b16 %v696
      %v1696 = vunpack.c.l.b16 %v697
      %v1697 = vunpack.c.h.b16 %v697
      %v1698 = vunpack.c.l.b16 %v698
      %v1699 = vunpack.c.h.b16 %v698
      %v1700 = vunpack.c.l.b16 %v699
      %v1701 = vunpack.c.h.b16 %v699
      %v1702 = vunpack.c.l.b16 %v700
      %v1703 = vunpack.c.h.b16 %v700
      %v1704 = vunpack.c.l.b16 %v701
      %v1705 = vunpack.c.h.b16 %v701
      %v1706 = vunpack.c.l.b16 %v702
      %v1707 = vunpack.c.h.b16 %v702
      %v1708 = vunpack.c.l.b16 %v703
      %v1709 = vunpack.c.h.b16 %v703
      %v1710 = vunpack.c.l.b16 %v704
      %v1711 = vunpack.c.h.b16 %v704
      %v1712 = vunpack.c.l.b16 %v705
      %v1713 = vunpack.c.h.b16 %v705
      %v1714 = vunpack.c.l.b16 %v706
      %v1715 = vunpack.c.h.b16 %v706
      %v1716 = vunpack.c.l.b16 %v707
      %v1717 = vunpack.c.h.b16 %v707
      %v1718 = vunpack.c.l.b16 %v708
      %v1719 = vunpack.c.h.b16 %v708
      %v1720 = vunpack.c.l.b16 %v709
      %v1721 = vunpack.c.h.b16 %v709
      %v1722 = vunpack.c.l.b16 %v710
      %v1723 = vunpack.c.h.b16 %v710
      %v1724 = vunpack.c.l.b16 %v711
      %v1725 = vunpack.c.h.b16 %v711
      %v1726 = vunpack.c.l.b16 %v712
      %v1727 = vunpack.c.h.b16 %v712
      %v1728 = vunpack.c.l.b16 %v713
      %v1729 = vunpack.c.h.b16 %v713
      %v1730 = vunpack.c.l.b16 %v714
      %v1731 = vunpack.c.h.b16 %v714
      %v1732 = vunpack.c.l.b16 %v715
      %v1733 = vunpack.c.h.b16 %v715
      %v1734 = vunpack.c.l.b16 %v716
      %v1735 = vunpack.c.h.b16 %v716
      %v1736 = vunpack.c.l.b16 %v717
      %v1737 = vunpack.c.h.b16 %v717
      %v1738 = vunpack.c.l.b16 %v718
      %v1739 = vunpack.c.h.b16 %v718
      %v1740 = vunpack.c.l.b16 %v719
      %v1741 = vunpack.c.h.b16 %v719
      %v1742 = vunpack.c.l.b16 %v720
      %v1743 = vunpack.c.h.b16 %v720
      %v1744 = vunpack.c.l.b16 %v721
      %v1745 = vunpack.c.h.b16 %v721
      %v1746 = vunpack.c.l.b16 %v722
      %v1747 = vunpack.c.h.b16 %v722
      %v1748 = vunpack.c.l.b16 %v723
      %v1749 = vunpack.c.h.b16 %v723
      %v1750 = vunpack.c.l.b16 %v724
      %v1751 = vunpack.c.h.b16 %v724
      %v1752 = vunpack.c.l.b16 %v725
      %v1753 = vunpack.c.h.b16 %v725
      %v1754 = vunpack.c.l.b16 %v726
      %v1755 = vunpack.c.h.b16 %v726
      %v1756 = vunpack.c.l.b16 %v727
      %v1757 = vunpack.c.h.b16 %v727
      %v1758 = vunpack.c.l.b16 %v728
      %v1759 = vunpack.c.h.b16 %v728
      %v1760 = vunpack.c.l.b16 %v729
      %v1761 = vunpack.c.h.b16 %v729
      %v1762 = vunpack.c.l.b16 %v730
      %v1763 = vunpack.c.h.b16 %v730
      %v1764 = vunpack.c.l.b16 %v731
      %v1765 = vunpack.c.h.b16 %v731
      %v1766 = vunpack.c.l.b16 %v732
      %v1767 = vunpack.c.h.b16 %v732
      %v1768 = vunpack.c.l.b16 %v733
      %v1769 = vunpack.c.h.b16 %v733
      %v1770 = vunpack.c.l.b16 %v734
      %v1771 = vunpack.c.h.b16 %v734
      %v1772 = vunpack.c.l.b16 %v735
      %v1773 = vunpack.c.h.b16 %v735
      %v1774 = vunpack.c.l.b16 %v736
      %v1775 = vunpack.c.h.b16 %v736
      %v1776 = vunpack.c.l.b16 %v737
      %v1777 = vunpack.c.h.b16 %v737
      %v1778 = vunpack.c.l.b16 %v738
      %v1779 = vunpack.c.h.b16 %v738
      %v1780 = vunpack.c.l.b16 %v739
      %v1781 = vunpack.c.h.b16 %v739
      %v1782 = vunpack.c.l.b16 %v740
      %v1783 = vunpack.c.h.b16 %v740
      %v1784 = vunpack.c.l.b16 %v741
      %v1785 = vunpack.c.h.b16 %v741
      %v1786 = vunpack.c.l.b16 %v742
      %v1787 = vunpack.c.h.b16 %v742
      %v1788 = vunpack.c.l.b16 %v743
      %v1789 = vunpack.c.h.b16 %v743
      %v1790 = vunpack.c.l.b16 %v744
      %v1791 = vunpack.c.h.b16 %v744
      %v1792 = vunpack.c.l.b16 %v745
      %v1793 = vunpack.c.h.b16 %v745
      %v1794 = vunpack.c.l.b16 %v746
      %v1795 = vunpack.c.h.b16 %v746
      %v1796 = vunpack.c.l.b16 %v747
      %v1797 = vunpack.c.h.b16 %v747
      %v1798 = vunpack.c.l.b16 %v748
      %v1799 = vunpack.c.h.b16 %v748
      %v1800 = vunpack.c.l.b16 %v749
      %v1801 = vunpack.c.h.b16 %v749
      %v1802 = vunpack.c.l.b16 %v750
      %v1803 = vunpack.c.h.b16 %v750
      %v1804 = vunpack.c.l.b16 %v751
      %v1805 = vunpack.c.h.b16 %v751
      %v1806 = vunpack.c.l.b16 %v752
      %v1807 = vunpack.c.h.b16 %v752
      %v1808 = vunpack.c.l.b16 %v753
      %v1809 = vunpack.c.h.b16 %v753
      %v1810 = vunpack.c.l.b16 %v754
      %v1811 = vunpack.c.h.b16 %v754
      %v1812 = vunpack.c.l.b16 %v755
      %v1813 = vunpack.c.h.b16 %v755
      %v1814 = vunpack.c.l.b16 %v756
      %v1815 = vunpack.c.h.b16 %v756
      %v1816 = vunpack.c.l.b16 %v757
      %v1817 = vunpack.c.h.b16 %v757
      %v1818 = vunpack.c.l.b16 %v758
      %v1819 = vunpack.c.h.b16 %v758
      %v1820 = vunpack.c.l.b16 %v759
      %v1821 = vunpack.c.h.b16 %v759
      %v1822 = vunpack.c.l.b16 %v760
      %v1823 = vunpack.c.h.b16 %v760
      %v1824 = vunpack.c.l.b16 %v761
      %v1825 = vunpack.c.h.b16 %v761
      %v1826 = vunpack.c.l.b16 %v762
      %v1827 = vunpack.c.h.b16 %v762
      %v1828 = vunpack.c.l.b16 %v763
      %v1829 = vunpack.c.h.b16 %v763
      %v1830 = vunpack.c.l.b16 %v764
      %v1831 = vunpack.c.h.b16 %v764
      %v1832 = vunpack.c.l.b16 %v765
      %v1833 = vunpack.c.h.b16 %v765
      %v1834 = vunpack.c.l.b16 %v766
      %v1835 = vunpack.c.h.b16 %v766
      %v1836 = vunpack.c.l.b16 %v767
      %v1837 = vunpack.c.h.b16 %v767
      %v1838 = vunpack.c.l.b16 %v768
      %v1839 = vunpack.c.h.b16 %v768
      %v1840 = vunpack.c.l.b16 %v769
      %v1841 = vunpack.c.h.b16 %v769
      %v1842 = vunpack.c.l.b16 %v770
      %v1843 = vunpack.c.h.b16 %v770
      %v1844 = vunpack.c.l.b16 %v771
      %v1845 = vunpack.c.h.b16 %v771
      %v1846 = vunpack.c.l.b16 %v772
      %v1847 = vunpack.c.h.b16 %v772
      %v1848 = vunpack.c.l.b16 %v773
      %v1849 = vunpack.c.h.b16 %v773
      %v1850 = vunpack.c.l.b16 %v774
      %v1851 = vunpack.c.h.b16 %v774
      %v1852 = vunpack.c.l.b16 %v775
      %v1853 = vunpack.c.h.b16 %v775
      %v1854 = vunpack.c.l.b16 %v776
      %v1855 = vunpack.c.h.b16 %v776
      %v1856 = vunpack.c.l.b16 %v777
      %v1857 = vunpack.c.h.b16 %v777
      %v1858 = vunpack.c.l.b16 %v778
      %v1859 = vunpack.c.h.b16 %v778
      %v1860 = vunpack.c.l.b16 %v779
      %v1861 = vunpack.c.h.b16 %v779
      %v1862 = vunpack.c.l.b16 %v780
      %v1863 = vunpack.c.h.b16 %v780
      %v1864 = vunpack.c.l.b16 %v781
      %v1865 = vunpack.c.h.b16 %v781
      %v1866 = vunpack.c.l.b16 %v782
      %v1867 = vunpack.c.h.b16 %v782
      %v1868 = vunpack.c.l.b16 %v783
      %v1869 = vunpack.c.h.b16 %v783
      %v1870 = vunpack.c.l.b16 %v784
      %v1871 = vunpack.c.h.b16 %v784
      %v1872 = vunpack.c.l.b16 %v785
      %v1873 = vunpack.c.h.b16 %v785
      %v1874 = vunpack.c.l.b16 %v786
      %v1875 = vunpack.c.h.b16 %v786
      %v1876 = vunpack.c.l.b16 %v787
      %v1877 = vunpack.c.h.b16 %v787
      %v1878 = vunpack.c.l.b16 %v788
      %v1879 = vunpack.c.h.b16 %v788
      %v1880 = vunpack.c.l.b16 %v789
      %v1881 = vunpack.c.h.b16 %v789
      %v1882 = vunpack.c.l.b16 %v790
      %v1883 = vunpack.c.h.b16 %v790
      %v1884 = vunpack.c.l.b16 %v791
      %v1885 = vunpack.c.h.b16 %v791
      %v1886 = vunpack.c.l.b16 %v792
      %v1887 = vunpack.c.h.b16 %v792
      %v1888 = vunpack.c.l.b16 %v793
      %v1889 = vunpack.c.h.b16 %v793
      %v1890 = vunpack.c.l.b16 %v794
      %v1891 = vunpack.c.h.b16 %v794
      %v1892 = vunpack.c.l.b16 %v795
      %v1893 = vunpack.c.h.b16 %v795
      %v1894 = vunpack.c.l.b16 %v796
      %v1895 = vunpack.c.h.b16 %v796
      %v1896 = vunpack.c.l.b16 %v797
      %v1897 = vunpack.c.h.b16 %v797
      %v1898 = vunpack.c.l.b16 %v798
      %v1899 = vunpack.c.h.b16 %v798
      %v1900 = vunpack.c.l.b16 %v799
      %v1901 = vunpack.c.h.b16 %v799
      %v1902 = vunpack.c.l.b16 %v800
      %v1903 = vunpack.c.h.b16 %v800
      %v1904 = vunpack.c.l.b16 %v801
      %v1905 = vunpack.c.h.b16 %v801
      %v1906 = vunpack.c.l.b16 %v802
      %v1907 = vunpack.c.h.b16 %v802
      %v1908 = vunpack.c.l.b16 %v803
      %v1909 = vunpack.c.h.b16 %v803
      %v1910 = vunpack.c.l.b16 %v804
      %v1911 = vunpack.c.h.b16 %v804
      %v1912 = vunpack.c.l.b16 %v805
      %v1913 = vunpack.c.h.b16 %v805
      %v1914 = vunpack.c.l.b16 %v806
      %v1915 = vunpack.c.h.b16 %v806
      %v1916 = vunpack.c.l.b16 %v807
      %v1917 = vunpack.c.h.b16 %v807
      %v1918 = vunpack.c.l.b16 %v808
      %v1919 = vunpack.c.h.b16 %v808
      %v1920 = vunpack.c.l.b16 %v809
      %v1921 = vunpack.c.h.b16 %v809
      %v1922 = vunpack.c.l.b16 %v810
      %v1923 = vunpack.c.h.b16 %v810
      %v1924 = vunpack.c.l.b16 %v811
      %v1925 = vunpack.c.h.b16 %v811
      %v1926 = vunpack.c.l.b16 %v812
      %v1927 = vunpack.c.h.b16 %v812
      %v1928 = vunpack.c.l.b16 %v813
      %v1929 = vunpack.c.h.b16 %v813
      %v1930 = vunpack.c.l.b16 %v814
      %v1931 = vunpack.c.h.b16 %v814
      %v1932 = vunpack.c.l.b16 %v815
      %v1933 = vunpack.c.h.b16 %v815
      %v1934 = vunpack.c.l.b16 %v816
      %v1935 = vunpack.c.h.b16 %v816
      %v1936 = vunpack.c.l.b16 %v817
      %v1937 = vunpack.c.h.b16 %v817
      %v1938 = vunpack.c.l.b16 %v818
      %v1939 = vunpack.c.h.b16 %v818
      %v1940 = vunpack.c.l.b16 %v819
      %v1941 = vunpack.c.h.b16 %v819
      %v1942 = vunpack.c.l.b16 %v820
      %v1943 = vunpack.c.h.b16 %v820
      %v1944 = vunpack.c.l.b16 %v821
      %v1945 = vunpack.c.h.b16 %v821
      %v1946 = vunpack.c.l.b16 %v822
      %v1947 = vunpack.c.h.b16 %v822
      %v1948 = vunpack.c.l.b16 %v823
      %v1949 = vunpack.c.h.b16 %v823
      %v1950 = vunpack.c.l.b16 %v824
      %v1951 = vunpack.c.h.b16 %v824
      %v1952 = vunpack.c.l.b16 %v825
      %v1953 = vunpack.c.h.b16 %v825
      %v1954 = vunpack.c.l.b16 %v826
      %v1955 = vunpack.c.h.b16 %v826
      %v1956 = vunpack.c.l.b16 %v827
      %v1957 = vunpack.c.h.b16 %v827
      %v1958 = vunpack.c.l.b16 %v828
      %v1959 = vunpack.c.h.b16 %v828
      %v1960 = vunpack.c.l.b16 %v829
      %v1961 = vunpack.c.h.b16 %v829
      %v1962 = vunpack.c.l.b16 %v830
      %v1963 = vunpack.c.h.b16 %v830
      %v1964 = vunpack.c.l.b16 %v831
      %v1965 = vunpack.c.h.b16 %v831
      %v1966 = vunpack.c.l.b16 %v832
      %v1967 = vunpack.c.h.b16 %v832
      %v1968 = vunpack.c.l.b16 %v833
      %v1969 = vunpack.c.h.b16 %v833
      %v1970 = vunpack.c.l.b16 %v834
      %v1971 = vunpack.c.h.b16 %v834
      %v1972 = vunpack.c.l.b16 %v835
      %v1973 = vunpack.c.h.b16 %v835
      %v1974 = vunpack.c.l.b16 %v836
      %v1975 = vunpack.c.h.b16 %v836
      %v1976 = vunpack.c.l.b16 %v837
      %v1977 = vunpack.c.h.b16 %v837
      %v1978 = vunpack.c.l.b16 %v838
      %v1979 = vunpack.c.h.b16 %v838
      %v1980 = vunpack.c.l.b16 %v839
      %v1981 = vunpack.c.h.b16 %v839
      %v1982 = vunpack.c.l.b16 %v840
      %v1983 = vunpack.c.h.b16 %v840
      %v1984 = vunpack.c.l.b16 %v841
      %v1985 = vunpack.c.h.b16 %v841
      %v1986 = vunpack.c.l.b16 %v842
      %v1987 = vunpack.c.h.b16 %v842
      %v1988 = vunpack.c.l.b16 %v843
      %v1989 = vunpack.c.h.b16 %v843
      %v1990 = vunpack.c.l.b16 %v844
      %v1991 = vunpack.c.h.b16 %v844
      %v1992 = vunpack.c.l.b16 %v845
      %v1993 = vunpack.c.h.b16 %v845
      %v1994 = vunpack.c.l.b16 %v846
      %v1995 = vunpack.c.h.b16 %v846
      %v1996 = vunpack.c.l.b16 %v847
      %v1997 = vunpack.c.h.b16 %v847
      %v1998 = vunpack.c.l.b16 %v848
      %v1999 = vunpack.c.h.b16 %v848
      %v2000 = vunpack.c.l.b16 %v849
      %v2001 = vunpack.c.h.b16 %v849
      %v2002 = vpack.c.b16 %v1498, %v1490
      %v2003 = vpack.c.b16 %v1499, %v1491
      %v2004 = vpack.c.b16 %v1500, %v1492
      %v2005 = vpack.c.b16 %v1501, %v1493
      %v2006 = vpack.c.b16 %v1502, %v1494
      %v2007 = vpack.c.b16 %v1503, %v1495
      %v2008 = vpack.c.b16 %v1504, %v1496
      %v2009 = vpack.c.b16 %v1505, %v1497
      %v2010 = vpack.c.b16 %v1514, %v1506
      %v2011 = vpack.c.b16 %v1515, %v1507
      %v2012 = vpack.c.b16 %v1516, %v1508
      %v2013 = vpack.c.b16 %v1517, %v1509
      %v2014 = vpack.c.b16 %v1518, %v1510
      %v2015 = vpack.c.b16 %v1519, %v1511
      %v2016 = vpack.c.b16 %v1520, %v1512
      %v2017 = vpack.c.b16 %v1521, %v1513
      %v2018 = vpack.c.b16 %v1530, %v1522
      %v2019 = vpack.c.b16 %v1531, %v1523
      %v2020 = vpack.c.b16 %v1532, %v1524
      %v2021 = vpack.c.b16 %v1533, %v1525
      %v2022 = vpack.c.b16 %v1534, %v1526
      %v2023 = vpack.c.b16 %v1535, %v1527
      %v2024 = vpack.c.b16 %v1536, %v1528
      %v2025 = vpack.c.b16 %v1537, %v1529
      %v2026 = vpack.c.b16 %v1546, %v1538
      %v2027 = vpack.c.b16 %v1547, %v1539
      %v2028 = vpack.c.b16 %v1548, %v1540
      %v2029 = vpack.c.b16 %v1549, %v1541
      %v2030 = vpack.c.b16 %v1550, %v1542
      %v2031 = vpack.c.b16 %v1551, %v1543
      %v2032 = vpack.c.b16 %v1552, %v1544
      %v2033 = vpack.c.b16 %v1553, %v1545
      %v2034 = vpack.c.b16 %v1562, %v1554
      %v2035 = vpack.c.b16 %v1563, %v1555
      %v2036 = vpack.c.b16 %v1564, %v1556
      %v2037 = vpack.c.b16 %v1565, %v1557
      %v2038 = vpack.c.b16 %v1566, %v1558
      %v2039 = vpack.c.b16 %v1567, %v1559
      %v2040 = vpack.c.b16 %v1568, %v1560
      %v2041 = vpack.c.b16 %v1569, %v1561
      %v2042 = vpack.c.b16 %v1578, %v1570
      %v2043 = vpack.c.b16 %v1579, %v1571
      %v2044 = vpack.c.b16 %v1580, %v1572
      %v2045 = vpack.c.b16 %v1581, %v1573
      %v2046 = vpack.c.b16 %v1582, %v1574
      %v2047 = vpack.c.b16 %v1583, %v1575
      %v2048 = vpack.c.b16 %v1584, %v1576
      %v2049 = vpack.c.b16 %v1585, %v1577
      %v2050 = vpack.c.b16 %v1594, %v1586
      %v2051 = vpack.c.b16 %v1595, %v1587
      %v2052 = vpack.c.b16 %v1596, %v1588
      %v2053 = vpack.c.b16 %v1597, %v1589
      %v2054 = vpack.c.b16 %v1598, %v1590
      %v2055 = vpack.c.b16 %v1599, %v1591
      %v2056 = vpack.c.b16 %v1600, %v1592
      %v2057 = vpack.c.b16 %v1601, %v1593
      %v2058 = vpack.c.b16 %v1610, %v1602
      %v2059 = vpack.c.b16 %v1611, %v1603
      %v2060 = vpack.c.b16 %v1612, %v1604
      %v2061 = vpack.c.b16 %v1613, %v1605
      %v2062 = vpack.c.b16 %v1614, %v1606
      %v2063 = vpack.c.b16 %v1615, %v1607
      %v2064 = vpack.c.b16 %v1616, %v1608
      %v2065 = vpack.c.b16 %v1617, %v1609
      %v2066 = vpack.c.b16 %v1626, %v1618
      %v2067 = vpack.c.b16 %v1627, %v1619
      %v2068 = vpack.c.b16 %v1628, %v1620
      %v2069 = vpack.c.b16 %v1629, %v1621
      %v2070 = vpack.c.b16 %v1630, %v1622
      %v2071 = vpack.c.b16 %v1631, %v1623
      %v2072 = vpack.c.b16 %v1632, %v1624
      %v2073 = vpack.c.b16 %v1633, %v1625
      %v2074 = vpack.c.b16 %v1642, %v1634
      %v2075 = vpack.c.b16 %v1643, %v1635
      %v2076 = vpack.c.b16 %v1644, %v1636
      %v2077 = vpack.c.b16 %v1645, %v1637
      %v2078 = vpack.c.b16 %v1646, %v1638
      %v2079 = vpack.c.b16 %v1647, %v1639
      %v2080 = vpack.c.b16 %v1648, %v1640
      %v2081 = vpack.c.b16 %v1649, %v1641
      %v2082 = vpack.c.b16 %v1658, %v1650
      %v2083 = vpack.c.b16 %v1659, %v1651
      %v2084 = vpack.c.b16 %v1660, %v1652
      %v2085 = vpack.c.b16 %v1661, %v1653
      %v2086 = vpack.c.b16 %v1662, %v1654
      %v2087 = vpack.c.b16 %v1663, %v1655
      %v2088 = vpack.c.b16 %v1664, %v1656
      %v2089 = vpack.c.b16 %v1665, %v1657
      %v2090 = vpack.c.b16 %v1674, %v1666
      %v2091 = vpack.c.b16 %v1675, %v1667
      %v2092 = vpack.c.b16 %v1676, %v1668
      %v2093 = vpack.c.b16 %v1677, %v1669
      %v2094 = vpack.c.b16 %v1678, %v1670
      %v2095 = vpack.c.b16 %v1679, %v1671
      %v2096 = vpack.c.b16 %v1680, %v1672
      %v2097 = vpack.c.b16 %v1681, %v1673
      %v2098 = vpack.c.b16 %v1690, %v1682
      %v2099 = vpack.c.b16 %v1691, %v1683
      %v2100 = vpack.c.b16 %v1692, %v1684
      %v2101 = vpack.c.b16 %v1693, %v1685
      %v2102 = vpack.c.b16 %v1694, %v1686
      %v2103 = vpack.c.b16 %v1695, %v1687
      %v2104 = vpack.c.b16 %v1696, %v1688
      %v2105 = vpack.c.b16 %v1697, %v1689
      %v2106 = vpack.c.b16 %v1706, %v1698
      %v2107 = vpack.c.b16 %v1707, %v1699
      %v2108 = vpack.c.b16 %v1708, %v1700
      %v2109 = vpack.c.b16 %v1709, %v1701
      %v2110 = vpack.c.b16 %v1710, %v1702
      %v2111 = vpack.c.b16 %v1711, %v1703
      %v2112 = vpack.c.b16 %v1712, %v1704
      %v2113 = vpack.c.b16 %v1713, %v1705
      %v2114 = vpack.c.b16 %v1722, %v1714
      %v2115 = vpack.c.b16 %v1723, %v1715
      %v2116 = vpack.c.b16 %v1724, %v1716
      %v2117 = vpack.c.b16 %v1725, %v1717
      %v2118 = vpack.c.b16 %v1726, %v1718
      %v2119 = vpack.c.b16 %v1727, %v1719
      %v2120 = vpack.c.b16 %v1728, %v1720
      %v2121 = vpack.c.b16 %v1729, %v1721
      %v2122 = vpack.c.b16 %v1738, %v1730
      %v2123 = vpack.c.b16 %v1739, %v1731
      %v2124 = vpack.c.b16 %v1740, %v1732
      %v2125 = vpack.c.b16 %v1741, %v1733
      %v2126 = vpack.c.b16 %v1742, %v1734
      %v2127 = vpack.c.b16 %v1743, %v1735
      %v2128 = vpack.c.b16 %v1744, %v1736
      %v2129 = vpack.c.b16 %v1745, %v1737
      %v2130 = vpack.c.b16 %v1754, %v1746
      %v2131 = vpack.c.b16 %v1755, %v1747
      %v2132 = vpack.c.b16 %v1756, %v1748
      %v2133 = vpack.c.b16 %v1757, %v1749
      %v2134 = vpack.c.b16 %v1758, %v1750
      %v2135 = vpack.c.b16 %v1759, %v1751
      %v2136 = vpack.c.b16 %v1760, %v1752
      %v2137 = vpack.c.b16 %v1761, %v1753
      %v2138 = vpack.c.b16 %v1770, %v1762
      %v2139 = vpack.c.b16 %v1771, %v1763
      %v2140 = vpack.c.b16 %v1772, %v1764
      %v2141 = vpack.c.b16 %v1773, %v1765
      %v2142 = vpack.c.b16 %v1774, %v1766
      %v2143 = vpack.c.b16 %v1775, %v1767
      %v2144 = vpack.c.b16 %v1776, %v1768
      %v2145 = vpack.c.b16 %v1777, %v1769
      %v2146 = vpack.c.b16 %v1786, %v1778
      %v2147 = vpack.c.b16 %v1787, %v1779
      %v2148 = vpack.c.b16 %v1788, %v1780
      %v2149 = vpack.c.b16 %v1789, %v1781
      %v2150 = vpack.c.b16 %v1790, %v1782
      %v2151 = vpack.c.b16 %v1791, %v1783
      %v2152 = vpack.c.b16 %v1792, %v1784
      %v2153 = vpack.c.b16 %v1793, %v1785
      %v2154 = vpack.c.b16 %v1802, %v1794
      %v2155 = vpack.c.b16 %v1803, %v1795
      %v2156 = vpack.c.b16 %v1804, %v1796
      %v2157 = vpack.c.b16 %v1805, %v1797
      %v2158 = vpack.c.b16 %v1806, %v1798
      %v2159 = vpack.c.b16 %v1807, %v1799
      %v2160 = vpack.c.b16 %v1808, %v1800
      %v2161 = vpack.c.b16 %v1809, %v1801
      %v2162 = vpack.c.b16 %v1818, %v1810
      %v2163 = vpack.c.b16 %v1819, %v1811
      %v2164 = vpack.c.b16 %v1820, %v1812
      %v2165 = vpack.c.b16 %v1821, %v1813
      %v2166 = vpack.c.b16 %v1822, %v1814
      %v2167 = vpack.c.b16 %v1823, %v1815
      %v2168 = vpack.c.b16 %v1824, %v1816
      %v2169 = vpack.c.b16 %v1825, %v1817
      %v2170 = vpack.c.b16 %v1834, %v1826
      %v2171 = vpack.c.b16 %v1835, %v1827
      %v2172 = vpack.c.b16 %v1836, %v1828
      %v2173 = vpack.c.b16 %v1837, %v1829
      %v2174 = vpack.c.b16 %v1838, %v1830
      %v2175 = vpack.c.b16 %v1839, %v1831
      %v2176 = vpack.c.b16 %v1840, %v1832
      %v2177 = vpack.c.b16 %v1841, %v1833
      %v2178 = vpack.c.b16 %v1850, %v1842
      %v2179 = vpack.c.b16 %v1851, %v1843
      %v2180 = vpack.c.b16 %v1852, %v1844
      %v2181 = vpack.c.b16 %v1853, %v1845
      %v2182 = vpack.c.b16 %v1854, %v1846
      %v2183 = vpack.c.b16 %v1855, %v1847
      %v2184 = vpack.c.b16 %v1856, %v1848
      %v2185 = vpack.c.b16 %v1857, %v1849
      %v2186 = vpack.c.b16 %v1866, %v1858
      %v2187 = vpack.c.b16 %v1867, %v1859
      %v2188 = vpack.c.b16 %v1868, %v1860
      %v2189 = vpack.c.b16 %v1869, %v1861
      %v2190 = vpack.c.b16 %v1870, %v1862
      %v2191 = vpack.c.b16 %v1871, %v1863
      %v2192 = vpack.c.b16 %v1872, %v1864
      %v2193 = vpack.c.b16 %v1873, %v1865
      %v2194 = vpack.c.b16 %v1882, %v1874
      %v2195 = vpack.c.b16 %v1883, %v1875
      %v2196 = vpack.c.b16 %v1884, %v1876
      %v2197 = vpack.c.b16 %v1885, %v1877
      %v2198 = vpack.c.b16 %v1886, %v1878
      %v2199 = vpack.c.b16 %v1887, %v1879
      %v2200 = vpack.c.b16 %v1888, %v1880
      %v2201 = vpack.c.b16 %v1889, %v1881
      %v2202 = vpack.c.b16 %v1898, %v1890
      %v2203 = vpack.c.b16 %v1899, %v1891
      %v2204 = vpack.c.b16 %v1900, %v1892
      %v2205 = vpack.c.b16 %v1901, %v1893
      %v2206 = vpack.c.b16 %v1902, %v1894
      %v2207 = vpack.c.b16 %v1903, %v1895
      %v2208 = vpack.c.b16 %v1904, %v1896
      %v2209 = vpack.c.b16 %v1905, %v1897
      %v2210 = vpack.c.b16 %v1914, %v1906
      %v2211 = vpack.c.b16 %v1915, %v1907
      %v2212 = vpack.c.b16 %v1916, %v1908
      %v2213 = vpack.c.b16 %v1917, %v1909
      %v2214 = vpack.c.b16 %v1918, %v1910
      %v2215 = vpack.c.b16 %v1919, %v1911
      %v2216 = vpack.c.b16 %v1920, %v1912
      %v2217 = vpack.c.b16 %v1921, %v1913
      %v2218 = vpack.c.b16 %v1930, %v1922
      %v2219 = vpack.c.b16 %v1931, %v1923
      %v2220 = vpack.c.b16 %v1932, %v1924
      %v2221 = vpack.c.b16 %v1933, %v1925
      %v2222 = vpack.c.b16 %v1934, %v1926
      %v2223 = vpack.c.b16 %v1935, %v1927
      %v2224 = vpack.c.b16 %v1936, %v1928
      %v2225 = vpack.c.b16 %v1937, %v1929
      %v2226 = vpack.c.b16 %v1946, %v1938
      %v2227 = vpack.c.b16 %v1947, %v1939
      %v2228 = vpack.c.b16 %v1948, %v1940
      %v2229 = vpack.c.b16 %v1949, %v1941
      %v2230 = vpack.c.b16 %v1950, %v1942
      %v2231 = vpack.c.b16 %v1951, %v1943
      %v2232 = vpack.c.b16 %v1952, %v1944
      %v2233 = vpack.c.b16 %v1953, %v1945
      %v2234 = vpack.c.b16 %v1962, %v1954
      %v2235 = vpack.c.b16 %v1963, %v1955
      %v2236 = vpack.c.b16 %v1964, %v1956
      %v2237 = vpack.c.b16 %v1965, %v1957
      %v2238 = vpack.c.b16 %v1966, %v1958
      %v2239 = vpack.c.b16 %v1967, %v1959
      %v2240 = vpack.c.b16 %v1968, %v1960
      %v2241 = vpack.c.b16 %v1969, %v1961
      %v2242 = vpack.c.b16 %v1978, %v1970
      %v2243 = vpack.c.b16 %v1979, %v1971
      %v2244 = vpack.c.b16 %v1980, %v1972
      %v2245 = vpack.c.b16 %v1981, %v1973
      %v2246 = vpack.c.b16 %v1982, %v1974
      %v2247 = vpack.c.b16 %v1983, %v1975
      %v2248 = vpack.c.b16 %v1984, %v1976
      %v2249 = vpack.c.b16 %v1985, %v1977
      %v2250 = vpack.c.b16 %v1994, %v1986
      %v2251 = vpack.c.b16 %v1995, %v1987
      %v2252 = vpack.c.b16 %v1996, %v1988
      %v2253 = vpack.c.b16 %v1997, %v1989
      %v2254 = vpack.c.b16 %v1998, %v1990
      %v2255 = vpack.c.b16 %v1999, %v1991
      %v2256 = vpack.c.b16 %v2000, %v1992
      %v2257 = vpack.c.b16 %v2001, %v1993
      %2514 = vmatprep.subr.bf16.mxu0 %v481
      %2515 = vmatpush1.bf16.msra.mxu0 %v480
      %2516 = vmatprep.subr.bf16.mxu0 %v479
      %2517 = vmatpush1.bf16.msra.mxu0 %v478
      %2518 = vmatprep.subr.bf16.mxu0 %v477
      %2519 = vmatpush1.bf16.msra.mxu0 %v476
      %2520 = vmatprep.subr.bf16.mxu0 %v475
      %2521 = vmatpush1.bf16.msra.mxu0 %v474
      %2522 = vmatprep.subr.bf16.mxu0 %v473
      %2523 = vmatpush1.bf16.msra.mxu0 %v472
      %2524 = vmatprep.subr.bf16.mxu0 %v471
      %2525 = vmatpush1.bf16.msra.mxu0 %v470
      %2526 = vmatprep.subr.bf16.mxu0 %v469
      %2527 = vmatpush1.bf16.msra.mxu0 %v468
      %2528 = vmatprep.subr.bf16.mxu0 %v467
      %2529 = vmatpush1.bf16.msra.mxu0 %v466
      %2530 = vmatprep.subr.bf16.mxu0 %v497
      %2531 = vmatpush2.bf16.msra.mxu0 %v496
      %2532 = vmatprep.subr.bf16.mxu0 %v495
      %2533 = vmatpush2.bf16.msra.mxu0 %v494
      %2534 = vmatprep.subr.bf16.mxu0 %v493
      %2535 = vmatpush2.bf16.msra.mxu0 %v492
      %2536 = vmatprep.subr.bf16.mxu0 %v491
      %2537 = vmatpush2.bf16.msra.mxu0 %v490
      %2538 = vmatprep.subr.bf16.mxu0 %v489
      %2539 = vmatpush2.bf16.msra.mxu0 %v488
      %2540 = vmatprep.subr.bf16.mxu0 %v487
      %2541 = vmatpush2.bf16.msra.mxu0 %v486
      %2542 = vmatprep.subr.bf16.mxu0 %v485
      %2543 = vmatpush2.bf16.msra.mxu0 %v484
      %2544 = vmatprep.subr.bf16.mxu0 %v483
      %2545 = vmatpush2.bf16.msra.mxu0 %v482
      %2546 = vmatprep.mubr.bf16.mxu0 %v2003
      %2547 = vmatmul.mubr.bf16.gmra.mxu0 %v2002
      %v2548 = vpop.f32.mrf.mxu0
      %v2549 = vadd.f32 %v917, %v2548
      %v2550 = vpop.f32.mrf.mxu0
      %v2551 = vadd.f32 %v917, %v2550
      %v2552 = vpop.f32.mrf.mxu0
      %v2553 = vadd.f32 %v922, %v2552
      %v2554 = vpop.f32.mrf.mxu0
      %v2555 = vadd.f32 %v922, %v2554
      %2556 = vmatprep.mubr.bf16.mxu0 %v2011
      %2557 = vmatmul.mubr.bf16.gmra.mxu0 %v2010
      %v2558 = vpop.f32.mrf.mxu0
      %v2559 = vadd.f32 %v927, %v2558
      %v2560 = vpop.f32.mrf.mxu0
      %v2561 = vadd.f32 %v927, %v2560
      %v2562 = vpop.f32.mrf.mxu0
      %v2563 = vadd.f32 %v932, %v2562
      %v2564 = vpop.f32.mrf.mxu0
      %v2565 = vadd.f32 %v932, %v2564
      %2566 = vmatprep.mubr.bf16.mxu0 %v2019
      %2567 = vmatmul.mubr.bf16.gmra.mxu0 %v2018
      %v2568 = vpop.f32.mrf.mxu0
      %v2569 = vadd.f32 %v937, %v2568
      %v2570 = vpop.f32.mrf.mxu0
      %v2571 = vadd.f32 %v937, %v2570
      %v2572 = vpop.f32.mrf.mxu0
      %v2573 = vadd.f32 %v942, %v2572
      %v2574 = vpop.f32.mrf.mxu0
      %v2575 = vadd.f32 %v942, %v2574
      %2576 = vmatprep.mubr.bf16.mxu0 %v2027
      %2577 = vmatmul.mubr.bf16.gmra.mxu0 %v2026
      %v2578 = vpop.f32.mrf.mxu0
      %v2579 = vadd.f32 %v947, %v2578
      %v2580 = vpop.f32.mrf.mxu0
      %v2581 = vadd.f32 %v947, %v2580
      %v2582 = vpop.f32.mrf.mxu0
      %v2583 = vadd.f32 %v952, %v2582
      %v2584 = vpop.f32.mrf.mxu0
      %v2585 = vadd.f32 %v952, %v2584
      %2586 = vmatprep.mubr.bf16.mxu0 %v2035
      %2587 = vmatmul.mubr.bf16.gmra.mxu0 %v2034
      %v2588 = vpop.f32.mrf.mxu0
      %v2589 = vadd.f32 %v957, %v2588
      %v2590 = vpop.f32.mrf.mxu0
      %v2591 = vadd.f32 %v957, %v2590
      %v2592 = vpop.f32.mrf.mxu0
      %v2593 = vadd.f32 %v962, %v2592
      %v2594 = vpop.f32.mrf.mxu0
      %v2595 = vadd.f32 %v962, %v2594
      %2596 = vmatprep.mubr.bf16.mxu0 %v2043
      %2597 = vmatmul.mubr.bf16.gmra.mxu0 %v2042
      %v2598 = vpop.f32.mrf.mxu0
      %v2599 = vadd.f32 %v967, %v2598
      %v2600 = vpop.f32.mrf.mxu0
      %v2601 = vadd.f32 %v967, %v2600
      %v2602 = vpop.f32.mrf.mxu0
      %v2603 = vadd.f32 %v972, %v2602
      %v2604 = vpop.f32.mrf.mxu0
      %v2605 = vadd.f32 %v972, %v2604
      %2606 = vmatprep.mubr.bf16.mxu0 %v2051
      %2607 = vmatmul.mubr.bf16.gmra.mxu0 %v2050
      %v2608 = vpop.f32.mrf.mxu0
      %v2609 = vadd.f32 %v977, %v2608
      %v2610 = vpop.f32.mrf.mxu0
      %v2611 = vadd.f32 %v977, %v2610
      %v2612 = vpop.f32.mrf.mxu0
      %v2613 = vadd.f32 %v982, %v2612
      %v2614 = vpop.f32.mrf.mxu0
      %v2615 = vadd.f32 %v982, %v2614
      %2616 = vmatprep.mubr.bf16.mxu0 %v2059
      %2617 = vmatmul.mubr.bf16.gmra.mxu0 %v2058
      %v2618 = vpop.f32.mrf.mxu0
      %v2619 = vadd.f32 %v987, %v2618
      %v2620 = vpop.f32.mrf.mxu0
      %v2621 = vadd.f32 %v987, %v2620
      %v2622 = vpop.f32.mrf.mxu0
      %v2623 = vadd.f32 %v992, %v2622
      %v2624 = vpop.f32.mrf.mxu0
      %v2625 = vadd.f32 %v992, %v2624
      %2626 = vmatprep.mubr.bf16.mxu0 %v2067
      %2627 = vmatmul.mubr.bf16.gmra.mxu0 %v2066
      %v2628 = vpop.f32.mrf.mxu0
      %v2629 = vadd.f32 %v997, %v2628
      %v2630 = vpop.f32.mrf.mxu0
      %v2631 = vadd.f32 %v997, %v2630
      %v2632 = vpop.f32.mrf.mxu0
      %v2633 = vadd.f32 %v1002, %v2632
      %v2634 = vpop.f32.mrf.mxu0
      %v2635 = vadd.f32 %v1002, %v2634
      %2636 = vmatprep.mubr.bf16.mxu0 %v2075
      %2637 = vmatmul.mubr.bf16.gmra.mxu0 %v2074
      %v2638 = vpop.f32.mrf.mxu0
      %v2639 = vadd.f32 %v1007, %v2638
      %v2640 = vpop.f32.mrf.mxu0
      %v2641 = vadd.f32 %v1007, %v2640
      %v2642 = vpop.f32.mrf.mxu0
      %v2643 = vadd.f32 %v1012, %v2642
      %v2644 = vpop.f32.mrf.mxu0
      %v2645 = vadd.f32 %v1012, %v2644
      %2646 = vmatprep.mubr.bf16.mxu0 %v2083
      %2647 = vmatmul.mubr.bf16.gmra.mxu0 %v2082
      %v2648 = vpop.f32.mrf.mxu0
      %v2649 = vadd.f32 %v1017, %v2648
      %v2650 = vpop.f32.mrf.mxu0
      %v2651 = vadd.f32 %v1017, %v2650
      %v2652 = vpop.f32.mrf.mxu0
      %v2653 = vadd.f32 %v1022, %v2652
      %v2654 = vpop.f32.mrf.mxu0
      %v2655 = vadd.f32 %v1022, %v2654
      %2656 = vmatprep.mubr.bf16.mxu0 %v2091
      %2657 = vmatmul.mubr.bf16.gmra.mxu0 %v2090
      %v2658 = vpop.f32.mrf.mxu0
      %v2659 = vadd.f32 %v1027, %v2658
      %v2660 = vpop.f32.mrf.mxu0
      %v2661 = vadd.f32 %v1027, %v2660
      %v2662 = vpop.f32.mrf.mxu0
      %v2663 = vadd.f32 %v1032, %v2662
      %v2664 = vpop.f32.mrf.mxu0
      %v2665 = vadd.f32 %v1032, %v2664
      %2666 = vmatprep.mubr.bf16.mxu0 %v2099
      %2667 = vmatmul.mubr.bf16.gmra.mxu0 %v2098
      %v2668 = vpop.f32.mrf.mxu0
      %v2669 = vadd.f32 %v1037, %v2668
      %v2670 = vpop.f32.mrf.mxu0
      %v2671 = vadd.f32 %v1037, %v2670
      %v2672 = vpop.f32.mrf.mxu0
      %v2673 = vadd.f32 %v1042, %v2672
      %v2674 = vpop.f32.mrf.mxu0
      %v2675 = vadd.f32 %v1042, %v2674
      %2676 = vmatprep.mubr.bf16.mxu0 %v2107
      %2677 = vmatmul.mubr.bf16.gmra.mxu0 %v2106
      %v2678 = vpop.f32.mrf.mxu0
      %v2679 = vadd.f32 %v1047, %v2678
      %v2680 = vpop.f32.mrf.mxu0
      %v2681 = vadd.f32 %v1047, %v2680
      %v2682 = vpop.f32.mrf.mxu0
      %v2683 = vadd.f32 %v1052, %v2682
      %v2684 = vpop.f32.mrf.mxu0
      %v2685 = vadd.f32 %v1052, %v2684
      %2686 = vmatprep.mubr.bf16.mxu0 %v2115
      %2687 = vmatmul.mubr.bf16.gmra.mxu0 %v2114
      %v2688 = vpop.f32.mrf.mxu0
      %v2689 = vadd.f32 %v1057, %v2688
      %v2690 = vpop.f32.mrf.mxu0
      %v2691 = vadd.f32 %v1057, %v2690
      %v2692 = vpop.f32.mrf.mxu0
      %v2693 = vadd.f32 %v1062, %v2692
      %v2694 = vpop.f32.mrf.mxu0
      %v2695 = vadd.f32 %v1062, %v2694
      %2696 = vmatprep.mubr.bf16.mxu0 %v2123
      %2697 = vmatmul.mubr.bf16.gmra.mxu0 %v2122
      %v2698 = vpop.f32.mrf.mxu0
      %v2699 = vadd.f32 %v1067, %v2698
      %v2700 = vpop.f32.mrf.mxu0
      %v2701 = vadd.f32 %v1067, %v2700
      %v2702 = vpop.f32.mrf.mxu0
      %v2703 = vadd.f32 %v1072, %v2702
      %v2704 = vpop.f32.mrf.mxu0
      %v2705 = vadd.f32 %v1072, %v2704
      %2706 = vmatprep.mubr.bf16.mxu0 %v2131
      %2707 = vmatmul.mubr.bf16.gmra.mxu0 %v2130
      %v2708 = vpop.f32.mrf.mxu0
      %v2709 = vadd.f32 %v1077, %v2708
      %v2710 = vpop.f32.mrf.mxu0
      %v2711 = vadd.f32 %v1077, %v2710
      %v2712 = vpop.f32.mrf.mxu0
      %v2713 = vadd.f32 %v1082, %v2712
      %v2714 = vpop.f32.mrf.mxu0
      %v2715 = vadd.f32 %v1082, %v2714
      %2716 = vmatprep.mubr.bf16.mxu0 %v2139
      %2717 = vmatmul.mubr.bf16.gmra.mxu0 %v2138
      %v2718 = vpop.f32.mrf.mxu0
      %v2719 = vadd.f32 %v1087, %v2718
      %v2720 = vpop.f32.mrf.mxu0
      %v2721 = vadd.f32 %v1087, %v2720
      %v2722 = vpop.f32.mrf.mxu0
      %v2723 = vadd.f32 %v1092, %v2722
      %v2724 = vpop.f32.mrf.mxu0
      %v2725 = vadd.f32 %v1092, %v2724
      %2726 = vmatprep.mubr.bf16.mxu0 %v2147
      %2727 = vmatmul.mubr.bf16.gmra.mxu0 %v2146
      %v2728 = vpop.f32.mrf.mxu0
      %v2729 = vadd.f32 %v1097, %v2728
      %v2730 = vpop.f32.mrf.mxu0
      %v2731 = vadd.f32 %v1097, %v2730
      %v2732 = vpop.f32.mrf.mxu0
      %v2733 = vadd.f32 %v1102, %v2732
      %v2734 = vpop.f32.mrf.mxu0
      %v2735 = vadd.f32 %v1102, %v2734
      %2736 = vmatprep.mubr.bf16.mxu0 %v2155
      %2737 = vmatmul.mubr.bf16.gmra.mxu0 %v2154
      %v2738 = vpop.f32.mrf.mxu0
      %v2739 = vadd.f32 %v1107, %v2738
      %v2740 = vpop.f32.mrf.mxu0
      %v2741 = vadd.f32 %v1107, %v2740
      %v2742 = vpop.f32.mrf.mxu0
      %v2743 = vadd.f32 %v1112, %v2742
      %v2744 = vpop.f32.mrf.mxu0
      %v2745 = vadd.f32 %v1112, %v2744
      %2746 = vmatprep.mubr.bf16.mxu0 %v2163
      %2747 = vmatmul.mubr.bf16.gmra.mxu0 %v2162
      %v2748 = vpop.f32.mrf.mxu0
      %v2749 = vadd.f32 %v1117, %v2748
      %v2750 = vpop.f32.mrf.mxu0
      %v2751 = vadd.f32 %v1117, %v2750
      %v2752 = vpop.f32.mrf.mxu0
      %v2753 = vadd.f32 %v1122, %v2752
      %v2754 = vpop.f32.mrf.mxu0
      %v2755 = vadd.f32 %v1122, %v2754
      %2756 = vmatprep.mubr.bf16.mxu0 %v2171
      %2757 = vmatmul.mubr.bf16.gmra.mxu0 %v2170
      %v2758 = vpop.f32.mrf.mxu0
      %v2759 = vadd.f32 %v1127, %v2758
      %v2760 = vpop.f32.mrf.mxu0
      %v2761 = vadd.f32 %v1127, %v2760
      %v2762 = vpop.f32.mrf.mxu0
      %v2763 = vadd.f32 %v1132, %v2762
      %v2764 = vpop.f32.mrf.mxu0
      %v2765 = vadd.f32 %v1132, %v2764
      %2766 = vmatprep.mubr.bf16.mxu0 %v2179
      %2767 = vmatmul.mubr.bf16.gmra.mxu0 %v2178
      %v2768 = vpop.f32.mrf.mxu0
      %v2769 = vadd.f32 %v1137, %v2768
      %v2770 = vpop.f32.mrf.mxu0
      %v2771 = vadd.f32 %v1137, %v2770
      %v2772 = vpop.f32.mrf.mxu0
      %v2773 = vadd.f32 %v1142, %v2772
      %v2774 = vpop.f32.mrf.mxu0
      %v2775 = vadd.f32 %v1142, %v2774
      %2776 = vmatprep.mubr.bf16.mxu0 %v2187
      %2777 = vmatmul.mubr.bf16.gmra.mxu0 %v2186
      %v2778 = vpop.f32.mrf.mxu0
      %v2779 = vadd.f32 %v1147, %v2778
      %v2780 = vpop.f32.mrf.mxu0
      %v2781 = vadd.f32 %v1147, %v2780
      %v2782 = vpop.f32.mrf.mxu0
      %v2783 = vadd.f32 %v1152, %v2782
      %v2784 = vpop.f32.mrf.mxu0
      %v2785 = vadd.f32 %v1152, %v2784
      %2786 = vmatprep.mubr.bf16.mxu0 %v2195
      %2787 = vmatmul.mubr.bf16.gmra.mxu0 %v2194
      %v2788 = vpop.f32.mrf.mxu0
      %v2789 = vadd.f32 %v1157, %v2788
      %v2790 = vpop.f32.mrf.mxu0
      %v2791 = vadd.f32 %v1157, %v2790
      %v2792 = vpop.f32.mrf.mxu0
      %v2793 = vadd.f32 %v1162, %v2792
      %v2794 = vpop.f32.mrf.mxu0
      %v2795 = vadd.f32 %v1162, %v2794
      %2796 = vmatprep.mubr.bf16.mxu0 %v2203
      %2797 = vmatmul.mubr.bf16.gmra.mxu0 %v2202
      %v2798 = vpop.f32.mrf.mxu0
      %v2799 = vadd.f32 %v1167, %v2798
      %v2800 = vpop.f32.mrf.mxu0
      %v2801 = vadd.f32 %v1167, %v2800
      %v2802 = vpop.f32.mrf.mxu0
      %v2803 = vadd.f32 %v1172, %v2802
      %v2804 = vpop.f32.mrf.mxu0
      %v2805 = vadd.f32 %v1172, %v2804
      %2806 = vmatprep.mubr.bf16.mxu0 %v2211
      %2807 = vmatmul.mubr.bf16.gmra.mxu0 %v2210
      %v2808 = vpop.f32.mrf.mxu0
      %v2809 = vadd.f32 %v1177, %v2808
      %v2810 = vpop.f32.mrf.mxu0
      %v2811 = vadd.f32 %v1177, %v2810
      %v2812 = vpop.f32.mrf.mxu0
      %v2813 = vadd.f32 %v1182, %v2812
      %v2814 = vpop.f32.mrf.mxu0
      %v2815 = vadd.f32 %v1182, %v2814
      %2816 = vmatprep.mubr.bf16.mxu0 %v2219
      %2817 = vmatmul.mubr.bf16.gmra.mxu0 %v2218
      %v2818 = vpop.f32.mrf.mxu0
      %v2819 = vadd.f32 %v1187, %v2818
      %v2820 = vpop.f32.mrf.mxu0
      %v2821 = vadd.f32 %v1187, %v2820
      %v2822 = vpop.f32.mrf.mxu0
      %v2823 = vadd.f32 %v1192, %v2822
      %v2824 = vpop.f32.mrf.mxu0
      %v2825 = vadd.f32 %v1192, %v2824
      %2826 = vmatprep.mubr.bf16.mxu0 %v2227
      %2827 = vmatmul.mubr.bf16.gmra.mxu0 %v2226
      %v2828 = vpop.f32.mrf.mxu0
      %v2829 = vadd.f32 %v1197, %v2828
      %v2830 = vpop.f32.mrf.mxu0
      %v2831 = vadd.f32 %v1197, %v2830
      %v2832 = vpop.f32.mrf.mxu0
      %v2833 = vadd.f32 %v1202, %v2832
      %v2834 = vpop.f32.mrf.mxu0
      %v2835 = vadd.f32 %v1202, %v2834
      %2836 = vmatprep.mubr.bf16.mxu0 %v2235
      %2837 = vmatmul.mubr.bf16.gmra.mxu0 %v2234
      %v2838 = vpop.f32.mrf.mxu0
      %v2839 = vadd.f32 %v1207, %v2838
      %v2840 = vpop.f32.mrf.mxu0
      %v2841 = vadd.f32 %v1207, %v2840
      %v2842 = vpop.f32.mrf.mxu0
      %v2843 = vadd.f32 %v1212, %v2842
      %v2844 = vpop.f32.mrf.mxu0
      %v2845 = vadd.f32 %v1212, %v2844
      %2846 = vmatprep.mubr.bf16.mxu0 %v2243
      %2847 = vmatmul.mubr.bf16.gmra.mxu0 %v2242
      %v2848 = vpop.f32.mrf.mxu0
      %v2849 = vadd.f32 %v1217, %v2848
      %v2850 = vpop.f32.mrf.mxu0
      %v2851 = vadd.f32 %v1217, %v2850
      %v2852 = vpop.f32.mrf.mxu0
      %v2853 = vadd.f32 %v1222, %v2852
      %v2854 = vpop.f32.mrf.mxu0
      %v2855 = vadd.f32 %v1222, %v2854
      %2856 = vmatprep.mubr.bf16.mxu0 %v2251
      %2857 = vmatmul.mubr.bf16.gmra.mxu0 %v2250
      %v2858 = vpop.f32.mrf.mxu0
      %v2859 = vadd.f32 %v1227, %v2858
      %v2860 = vpop.f32.mrf.mxu0
      %v2861 = vadd.f32 %v1227, %v2860
      %v2862 = vpop.f32.mrf.mxu0
      %v2863 = vadd.f32 %v1232, %v2862
      %v2864 = vpop.f32.mrf.mxu0
      %v2865 = vadd.f32 %v1232, %v2864
      %2866 = vdwg.mxu0
      %2867 = vmatprep.subr.bf16.mxu0 %v513
      %2868 = vmatpush1.bf16.msra.mxu0 %v512
      %2869 = vmatprep.subr.bf16.mxu0 %v511
      %2870 = vmatpush1.bf16.msra.mxu0 %v510
      %2871 = vmatprep.subr.bf16.mxu0 %v509
      %2872 = vmatpush1.bf16.msra.mxu0 %v508
      %2873 = vmatprep.subr.bf16.mxu0 %v507
      %2874 = vmatpush1.bf16.msra.mxu0 %v506
      %2875 = vmatprep.subr.bf16.mxu0 %v505
      %2876 = vmatpush1.bf16.msra.mxu0 %v504
      %2877 = vmatprep.subr.bf16.mxu0 %v503
      %2878 = vmatpush1.bf16.msra.mxu0 %v502
      %2879 = vmatprep.subr.bf16.mxu0 %v501
      %2880 = vmatpush1.bf16.msra.mxu0 %v500
      %2881 = vmatprep.subr.bf16.mxu0 %v499
      %2882 = vmatpush1.bf16.msra.mxu0 %v498
      %2883 = vmatprep.subr.bf16.mxu0 %v529
      %2884 = vmatpush2.bf16.msra.mxu0 %v528
      %2885 = vmatprep.subr.bf16.mxu0 %v527
      %2886 = vmatpush2.bf16.msra.mxu0 %v526
      %2887 = vmatprep.subr.bf16.mxu0 %v525
      %2888 = vmatpush2.bf16.msra.mxu0 %v524
      %2889 = vmatprep.subr.bf16.mxu0 %v523
      %2890 = vmatpush2.bf16.msra.mxu0 %v522
      %2891 = vmatprep.subr.bf16.mxu0 %v521
      %2892 = vmatpush2.bf16.msra.mxu0 %v520
      %2893 = vmatprep.subr.bf16.mxu0 %v519
      %2894 = vmatpush2.bf16.msra.mxu0 %v518
      %2895 = vmatprep.subr.bf16.mxu0 %v517
      %2896 = vmatpush2.bf16.msra.mxu0 %v516
      %2897 = vmatprep.subr.bf16.mxu0 %v515
      %2898 = vmatpush2.bf16.msra.mxu0 %v514
      %2899 = vmatprep.mubr.bf16.mxu0 %v2005
      %2900 = vmatmul.mubr.bf16.gmra.mxu0 %v2004
      %v2901 = vpop.f32.mrf.mxu0
      %v2902 = vadd.f32 %v2549, %v2901
      %v2903 = vpop.f32.mrf.mxu0
      %v2904 = vadd.f32 %v2551, %v2903
      %v2905 = vpop.f32.mrf.mxu0
      %v2906 = vadd.f32 %v2553, %v2905
      %v2907 = vpop.f32.mrf.mxu0
      %v2908 = vadd.f32 %v2555, %v2907
      %2909 = vmatprep.mubr.bf16.mxu0 %v2013
      %2910 = vmatmul.mubr.bf16.gmra.mxu0 %v2012
      %v2911 = vpop.f32.mrf.mxu0
      %v2912 = vadd.f32 %v2559, %v2911
      %v2913 = vpop.f32.mrf.mxu0
      %v2914 = vadd.f32 %v2561, %v2913
      %v2915 = vpop.f32.mrf.mxu0
      %v2916 = vadd.f32 %v2563, %v2915
      %v2917 = vpop.f32.mrf.mxu0
      %v2918 = vadd.f32 %v2565, %v2917
      %2919 = vmatprep.mubr.bf16.mxu0 %v2021
      %2920 = vmatmul.mubr.bf16.gmra.mxu0 %v2020
      %v2921 = vpop.f32.mrf.mxu0
      %v2922 = vadd.f32 %v2569, %v2921
      %v2923 = vpop.f32.mrf.mxu0
      %v2924 = vadd.f32 %v2571, %v2923
      %v2925 = vpop.f32.mrf.mxu0
      %v2926 = vadd.f32 %v2573, %v2925
      %v2927 = vpop.f32.mrf.mxu0
      %v2928 = vadd.f32 %v2575, %v2927
      %2929 = vmatprep.mubr.bf16.mxu0 %v2029
      %2930 = vmatmul.mubr.bf16.gmra.mxu0 %v2028
      %v2931 = vpop.f32.mrf.mxu0
      %v2932 = vadd.f32 %v2579, %v2931
      %v2933 = vpop.f32.mrf.mxu0
      %v2934 = vadd.f32 %v2581, %v2933
      %v2935 = vpop.f32.mrf.mxu0
      %v2936 = vadd.f32 %v2583, %v2935
      %v2937 = vpop.f32.mrf.mxu0
      %v2938 = vadd.f32 %v2585, %v2937
      %2939 = vmatprep.mubr.bf16.mxu0 %v2037
      %2940 = vmatmul.mubr.bf16.gmra.mxu0 %v2036
      %v2941 = vpop.f32.mrf.mxu0
      %v2942 = vadd.f32 %v2589, %v2941
      %v2943 = vpop.f32.mrf.mxu0
      %v2944 = vadd.f32 %v2591, %v2943
      %v2945 = vpop.f32.mrf.mxu0
      %v2946 = vadd.f32 %v2593, %v2945
      %v2947 = vpop.f32.mrf.mxu0
      %v2948 = vadd.f32 %v2595, %v2947
      %2949 = vmatprep.mubr.bf16.mxu0 %v2045
      %2950 = vmatmul.mubr.bf16.gmra.mxu0 %v2044
      %v2951 = vpop.f32.mrf.mxu0
      %v2952 = vadd.f32 %v2599, %v2951
      %v2953 = vpop.f32.mrf.mxu0
      %v2954 = vadd.f32 %v2601, %v2953
      %v2955 = vpop.f32.mrf.mxu0
      %v2956 = vadd.f32 %v2603, %v2955
      %v2957 = vpop.f32.mrf.mxu0
      %v2958 = vadd.f32 %v2605, %v2957
      %2959 = vmatprep.mubr.bf16.mxu0 %v2053
      %2960 = vmatmul.mubr.bf16.gmra.mxu0 %v2052
      %v2961 = vpop.f32.mrf.mxu0
      %v2962 = vadd.f32 %v2609, %v2961
      %v2963 = vpop.f32.mrf.mxu0
      %v2964 = vadd.f32 %v2611, %v2963
      %v2965 = vpop.f32.mrf.mxu0
      %v2966 = vadd.f32 %v2613, %v2965
      %v2967 = vpop.f32.mrf.mxu0
      %v2968 = vadd.f32 %v2615, %v2967
      %2969 = vmatprep.mubr.bf16.mxu0 %v2061
      %2970 = vmatmul.mubr.bf16.gmra.mxu0 %v2060
      %v2971 = vpop.f32.mrf.mxu0
      %v2972 = vadd.f32 %v2619, %v2971
      %v2973 = vpop.f32.mrf.mxu0
      %v2974 = vadd.f32 %v2621, %v2973
      %v2975 = vpop.f32.mrf.mxu0
      %v2976 = vadd.f32 %v2623, %v2975
      %v2977 = vpop.f32.mrf.mxu0
      %v2978 = vadd.f32 %v2625, %v2977
      %2979 = vmatprep.mubr.bf16.mxu0 %v2069
      %2980 = vmatmul.mubr.bf16.gmra.mxu0 %v2068
      %v2981 = vpop.f32.mrf.mxu0
      %v2982 = vadd.f32 %v2629, %v2981
      %v2983 = vpop.f32.mrf.mxu0
      %v2984 = vadd.f32 %v2631, %v2983
      %v2985 = vpop.f32.mrf.mxu0
      %v2986 = vadd.f32 %v2633, %v2985
      %v2987 = vpop.f32.mrf.mxu0
      %v2988 = vadd.f32 %v2635, %v2987
      %2989 = vmatprep.mubr.bf16.mxu0 %v2077
      %2990 = vmatmul.mubr.bf16.gmra.mxu0 %v2076
      %v2991 = vpop.f32.mrf.mxu0
      %v2992 = vadd.f32 %v2639, %v2991
      %v2993 = vpop.f32.mrf.mxu0
      %v2994 = vadd.f32 %v2641, %v2993
      %v2995 = vpop.f32.mrf.mxu0
      %v2996 = vadd.f32 %v2643, %v2995
      %v2997 = vpop.f32.mrf.mxu0
      %v2998 = vadd.f32 %v2645, %v2997
      %2999 = vmatprep.mubr.bf16.mxu0 %v2085
      %3000 = vmatmul.mubr.bf16.gmra.mxu0 %v2084
      %v3001 = vpop.f32.mrf.mxu0
      %v3002 = vadd.f32 %v2649, %v3001
      %v3003 = vpop.f32.mrf.mxu0
      %v3004 = vadd.f32 %v2651, %v3003
      %v3005 = vpop.f32.mrf.mxu0
      %v3006 = vadd.f32 %v2653, %v3005
      %v3007 = vpop.f32.mrf.mxu0
      %v3008 = vadd.f32 %v2655, %v3007
      %3009 = vmatprep.mubr.bf16.mxu0 %v2093
      %3010 = vmatmul.mubr.bf16.gmra.mxu0 %v2092
      %v3011 = vpop.f32.mrf.mxu0
      %v3012 = vadd.f32 %v2659, %v3011
      %v3013 = vpop.f32.mrf.mxu0
      %v3014 = vadd.f32 %v2661, %v3013
      %v3015 = vpop.f32.mrf.mxu0
      %v3016 = vadd.f32 %v2663, %v3015
      %v3017 = vpop.f32.mrf.mxu0
      %v3018 = vadd.f32 %v2665, %v3017
      %3019 = vmatprep.mubr.bf16.mxu0 %v2101
      %3020 = vmatmul.mubr.bf16.gmra.mxu0 %v2100
      %v3021 = vpop.f32.mrf.mxu0
      %v3022 = vadd.f32 %v2669, %v3021
      %v3023 = vpop.f32.mrf.mxu0
      %v3024 = vadd.f32 %v2671, %v3023
      %v3025 = vpop.f32.mrf.mxu0
      %v3026 = vadd.f32 %v2673, %v3025
      %v3027 = vpop.f32.mrf.mxu0
      %v3028 = vadd.f32 %v2675, %v3027
      %3029 = vmatprep.mubr.bf16.mxu0 %v2109
      %3030 = vmatmul.mubr.bf16.gmra.mxu0 %v2108
      %v3031 = vpop.f32.mrf.mxu0
      %v3032 = vadd.f32 %v2679, %v3031
      %v3033 = vpop.f32.mrf.mxu0
      %v3034 = vadd.f32 %v2681, %v3033
      %v3035 = vpop.f32.mrf.mxu0
      %v3036 = vadd.f32 %v2683, %v3035
      %v3037 = vpop.f32.mrf.mxu0
      %v3038 = vadd.f32 %v2685, %v3037
      %3039 = vmatprep.mubr.bf16.mxu0 %v2117
      %3040 = vmatmul.mubr.bf16.gmra.mxu0 %v2116
      %v3041 = vpop.f32.mrf.mxu0
      %v3042 = vadd.f32 %v2689, %v3041
      %v3043 = vpop.f32.mrf.mxu0
      %v3044 = vadd.f32 %v2691, %v3043
      %v3045 = vpop.f32.mrf.mxu0
      %v3046 = vadd.f32 %v2693, %v3045
      %v3047 = vpop.f32.mrf.mxu0
      %v3048 = vadd.f32 %v2695, %v3047
      %3049 = vmatprep.mubr.bf16.mxu0 %v2125
      %3050 = vmatmul.mubr.bf16.gmra.mxu0 %v2124
      %v3051 = vpop.f32.mrf.mxu0
      %v3052 = vadd.f32 %v2699, %v3051
      %v3053 = vpop.f32.mrf.mxu0
      %v3054 = vadd.f32 %v2701, %v3053
      %v3055 = vpop.f32.mrf.mxu0
      %v3056 = vadd.f32 %v2703, %v3055
      %v3057 = vpop.f32.mrf.mxu0
      %v3058 = vadd.f32 %v2705, %v3057
      %3059 = vmatprep.mubr.bf16.mxu0 %v2133
      %3060 = vmatmul.mubr.bf16.gmra.mxu0 %v2132
      %v3061 = vpop.f32.mrf.mxu0
      %v3062 = vadd.f32 %v2709, %v3061
      %v3063 = vpop.f32.mrf.mxu0
      %v3064 = vadd.f32 %v2711, %v3063
      %v3065 = vpop.f32.mrf.mxu0
      %v3066 = vadd.f32 %v2713, %v3065
      %v3067 = vpop.f32.mrf.mxu0
      %v3068 = vadd.f32 %v2715, %v3067
      %3069 = vmatprep.mubr.bf16.mxu0 %v2141
      %3070 = vmatmul.mubr.bf16.gmra.mxu0 %v2140
      %v3071 = vpop.f32.mrf.mxu0
      %v3072 = vadd.f32 %v2719, %v3071
      %v3073 = vpop.f32.mrf.mxu0
      %v3074 = vadd.f32 %v2721, %v3073
      %v3075 = vpop.f32.mrf.mxu0
      %v3076 = vadd.f32 %v2723, %v3075
      %v3077 = vpop.f32.mrf.mxu0
      %v3078 = vadd.f32 %v2725, %v3077
      %3079 = vmatprep.mubr.bf16.mxu0 %v2149
      %3080 = vmatmul.mubr.bf16.gmra.mxu0 %v2148
      %v3081 = vpop.f32.mrf.mxu0
      %v3082 = vadd.f32 %v2729, %v3081
      %v3083 = vpop.f32.mrf.mxu0
      %v3084 = vadd.f32 %v2731, %v3083
      %v3085 = vpop.f32.mrf.mxu0
      %v3086 = vadd.f32 %v2733, %v3085
      %v3087 = vpop.f32.mrf.mxu0
      %v3088 = vadd.f32 %v2735, %v3087
      %3089 = vmatprep.mubr.bf16.mxu0 %v2157
      %3090 = vmatmul.mubr.bf16.gmra.mxu0 %v2156
      %v3091 = vpop.f32.mrf.mxu0
      %v3092 = vadd.f32 %v2739, %v3091
      %v3093 = vpop.f32.mrf.mxu0
      %v3094 = vadd.f32 %v2741, %v3093
      %v3095 = vpop.f32.mrf.mxu0
      %v3096 = vadd.f32 %v2743, %v3095
      %v3097 = vpop.f32.mrf.mxu0
      %v3098 = vadd.f32 %v2745, %v3097
      %3099 = vmatprep.mubr.bf16.mxu0 %v2165
      %3100 = vmatmul.mubr.bf16.gmra.mxu0 %v2164
      %v3101 = vpop.f32.mrf.mxu0
      %v3102 = vadd.f32 %v2749, %v3101
      %v3103 = vpop.f32.mrf.mxu0
      %v3104 = vadd.f32 %v2751, %v3103
      %v3105 = vpop.f32.mrf.mxu0
      %v3106 = vadd.f32 %v2753, %v3105
      %v3107 = vpop.f32.mrf.mxu0
      %v3108 = vadd.f32 %v2755, %v3107
      %3109 = vmatprep.mubr.bf16.mxu0 %v2173
      %3110 = vmatmul.mubr.bf16.gmra.mxu0 %v2172
      %v3111 = vpop.f32.mrf.mxu0
      %v3112 = vadd.f32 %v2759, %v3111
      %v3113 = vpop.f32.mrf.mxu0
      %v3114 = vadd.f32 %v2761, %v3113
      %v3115 = vpop.f32.mrf.mxu0
      %v3116 = vadd.f32 %v2763, %v3115
      %v3117 = vpop.f32.mrf.mxu0
      %v3118 = vadd.f32 %v2765, %v3117
      %3119 = vmatprep.mubr.bf16.mxu0 %v2181
      %3120 = vmatmul.mubr.bf16.gmra.mxu0 %v2180
      %v3121 = vpop.f32.mrf.mxu0
      %v3122 = vadd.f32 %v2769, %v3121
      %v3123 = vpop.f32.mrf.mxu0
      %v3124 = vadd.f32 %v2771, %v3123
      %v3125 = vpop.f32.mrf.mxu0
      %v3126 = vadd.f32 %v2773, %v3125
      %v3127 = vpop.f32.mrf.mxu0
      %v3128 = vadd.f32 %v2775, %v3127
      %3129 = vmatprep.mubr.bf16.mxu0 %v2189
      %3130 = vmatmul.mubr.bf16.gmra.mxu0 %v2188
      %v3131 = vpop.f32.mrf.mxu0
      %v3132 = vadd.f32 %v2779, %v3131
      %v3133 = vpop.f32.mrf.mxu0
      %v3134 = vadd.f32 %v2781, %v3133
      %v3135 = vpop.f32.mrf.mxu0
      %v3136 = vadd.f32 %v2783, %v3135
      %v3137 = vpop.f32.mrf.mxu0
      %v3138 = vadd.f32 %v2785, %v3137
      %3139 = vmatprep.mubr.bf16.mxu0 %v2197
      %3140 = vmatmul.mubr.bf16.gmra.mxu0 %v2196
      %v3141 = vpop.f32.mrf.mxu0
      %v3142 = vadd.f32 %v2789, %v3141
      %v3143 = vpop.f32.mrf.mxu0
      %v3144 = vadd.f32 %v2791, %v3143
      %v3145 = vpop.f32.mrf.mxu0
      %v3146 = vadd.f32 %v2793, %v3145
      %v3147 = vpop.f32.mrf.mxu0
      %v3148 = vadd.f32 %v2795, %v3147
      %3149 = vmatprep.mubr.bf16.mxu0 %v2205
      %3150 = vmatmul.mubr.bf16.gmra.mxu0 %v2204
      %v3151 = vpop.f32.mrf.mxu0
      %v3152 = vadd.f32 %v2799, %v3151
      %v3153 = vpop.f32.mrf.mxu0
      %v3154 = vadd.f32 %v2801, %v3153
      %v3155 = vpop.f32.mrf.mxu0
      %v3156 = vadd.f32 %v2803, %v3155
      %v3157 = vpop.f32.mrf.mxu0
      %v3158 = vadd.f32 %v2805, %v3157
      %3159 = vmatprep.mubr.bf16.mxu0 %v2213
      %3160 = vmatmul.mubr.bf16.gmra.mxu0 %v2212
      %v3161 = vpop.f32.mrf.mxu0
      %v3162 = vadd.f32 %v2809, %v3161
      %v3163 = vpop.f32.mrf.mxu0
      %v3164 = vadd.f32 %v2811, %v3163
      %v3165 = vpop.f32.mrf.mxu0
      %v3166 = vadd.f32 %v2813, %v3165
      %v3167 = vpop.f32.mrf.mxu0
      %v3168 = vadd.f32 %v2815, %v3167
      %3169 = vmatprep.mubr.bf16.mxu0 %v2221
      %3170 = vmatmul.mubr.bf16.gmra.mxu0 %v2220
      %v3171 = vpop.f32.mrf.mxu0
      %v3172 = vadd.f32 %v2819, %v3171
      %v3173 = vpop.f32.mrf.mxu0
      %v3174 = vadd.f32 %v2821, %v3173
      %v3175 = vpop.f32.mrf.mxu0
      %v3176 = vadd.f32 %v2823, %v3175
      %v3177 = vpop.f32.mrf.mxu0
      %v3178 = vadd.f32 %v2825, %v3177
      %3179 = vmatprep.mubr.bf16.mxu0 %v2229
      %3180 = vmatmul.mubr.bf16.gmra.mxu0 %v2228
      %v3181 = vpop.f32.mrf.mxu0
      %v3182 = vadd.f32 %v2829, %v3181
      %v3183 = vpop.f32.mrf.mxu0
      %v3184 = vadd.f32 %v2831, %v3183
      %v3185 = vpop.f32.mrf.mxu0
      %v3186 = vadd.f32 %v2833, %v3185
      %v3187 = vpop.f32.mrf.mxu0
      %v3188 = vadd.f32 %v2835, %v3187
      %3189 = vmatprep.mubr.bf16.mxu0 %v2237
      %3190 = vmatmul.mubr.bf16.gmra.mxu0 %v2236
      %v3191 = vpop.f32.mrf.mxu0
      %v3192 = vadd.f32 %v2839, %v3191
      %v3193 = vpop.f32.mrf.mxu0
      %v3194 = vadd.f32 %v2841, %v3193
      %v3195 = vpop.f32.mrf.mxu0
      %v3196 = vadd.f32 %v2843, %v3195
      %v3197 = vpop.f32.mrf.mxu0
      %v3198 = vadd.f32 %v2845, %v3197
      %3199 = vmatprep.mubr.bf16.mxu0 %v2245
      %3200 = vmatmul.mubr.bf16.gmra.mxu0 %v2244
      %v3201 = vpop.f32.mrf.mxu0
      %v3202 = vadd.f32 %v2849, %v3201
      %v3203 = vpop.f32.mrf.mxu0
      %v3204 = vadd.f32 %v2851, %v3203
      %v3205 = vpop.f32.mrf.mxu0
      %v3206 = vadd.f32 %v2853, %v3205
      %v3207 = vpop.f32.mrf.mxu0
      %v3208 = vadd.f32 %v2855, %v3207
      %3209 = vmatprep.mubr.bf16.mxu0 %v2253
      %3210 = vmatmul.mubr.bf16.gmra.mxu0 %v2252
      %v3211 = vpop.f32.mrf.mxu0
      %v3212 = vadd.f32 %v2859, %v3211
      %v3213 = vpop.f32.mrf.mxu0
      %v3214 = vadd.f32 %v2861, %v3213
      %v3215 = vpop.f32.mrf.mxu0
      %v3216 = vadd.f32 %v2863, %v3215
      %v3217 = vpop.f32.mrf.mxu0
      %v3218 = vadd.f32 %v2865, %v3217
      %3219 = vdwg.mxu0
      %3220 = vmatprep.subr.bf16.mxu0 %v545
      %3221 = vmatpush1.bf16.msra.mxu0 %v544
      %3222 = vmatprep.subr.bf16.mxu0 %v543
      %3223 = vmatpush1.bf16.msra.mxu0 %v542
      %3224 = vmatprep.subr.bf16.mxu0 %v541
      %3225 = vmatpush1.bf16.msra.mxu0 %v540
      %3226 = vmatprep.subr.bf16.mxu0 %v539
      %3227 = vmatpush1.bf16.msra.mxu0 %v538
      %3228 = vmatprep.subr.bf16.mxu0 %v537
      %3229 = vmatpush1.bf16.msra.mxu0 %v536
      %3230 = vmatprep.subr.bf16.mxu0 %v535
      %3231 = vmatpush1.bf16.msra.mxu0 %v534
      %3232 = vmatprep.subr.bf16.mxu0 %v533
      %3233 = vmatpush1.bf16.msra.mxu0 %v532
      %3234 = vmatprep.subr.bf16.mxu0 %v531
      %3235 = vmatpush1.bf16.msra.mxu0 %v530
      %3236 = vmatprep.subr.bf16.mxu0 %v561
      %3237 = vmatpush2.bf16.msra.mxu0 %v560
      %3238 = vmatprep.subr.bf16.mxu0 %v559
      %3239 = vmatpush2.bf16.msra.mxu0 %v558
      %3240 = vmatprep.subr.bf16.mxu0 %v557
      %3241 = vmatpush2.bf16.msra.mxu0 %v556
      %3242 = vmatprep.subr.bf16.mxu0 %v555
      %3243 = vmatpush2.bf16.msra.mxu0 %v554
      %3244 = vmatprep.subr.bf16.mxu0 %v553
      %3245 = vmatpush2.bf16.msra.mxu0 %v552
      %3246 = vmatprep.subr.bf16.mxu0 %v551
      %3247 = vmatpush2.bf16.msra.mxu0 %v550
      %3248 = vmatprep.subr.bf16.mxu0 %v549
      %3249 = vmatpush2.bf16.msra.mxu0 %v548
      %3250 = vmatprep.subr.bf16.mxu0 %v547
      %3251 = vmatpush2.bf16.msra.mxu0 %v546
      %3252 = vmatprep.mubr.bf16.mxu0 %v2007
      %3253 = vmatmul.mubr.bf16.gmra.mxu0 %v2006
      %v3254 = vpop.f32.mrf.mxu0
      %v3255 = vadd.f32 %v2902, %v3254
      %v3256 = vpop.f32.mrf.mxu0
      %v3257 = vadd.f32 %v2904, %v3256
      %v3258 = vpop.f32.mrf.mxu0
      %v3259 = vadd.f32 %v2906, %v3258
      %v3260 = vpop.f32.mrf.mxu0
      %v3261 = vadd.f32 %v2908, %v3260
      %3262 = vmatprep.mubr.bf16.mxu0 %v2015
      %3263 = vmatmul.mubr.bf16.gmra.mxu0 %v2014
      %v3264 = vpop.f32.mrf.mxu0
      %v3265 = vadd.f32 %v2912, %v3264
      %v3266 = vpop.f32.mrf.mxu0
      %v3267 = vadd.f32 %v2914, %v3266
      %v3268 = vpop.f32.mrf.mxu0
      %v3269 = vadd.f32 %v2916, %v3268
      %v3270 = vpop.f32.mrf.mxu0
      %v3271 = vadd.f32 %v2918, %v3270
      %3272 = vmatprep.mubr.bf16.mxu0 %v2023
      %3273 = vmatmul.mubr.bf16.gmra.mxu0 %v2022
      %v3274 = vpop.f32.mrf.mxu0
      %v3275 = vadd.f32 %v2922, %v3274
      %v3276 = vpop.f32.mrf.mxu0
      %v3277 = vadd.f32 %v2924, %v3276
      %v3278 = vpop.f32.mrf.mxu0
      %v3279 = vadd.f32 %v2926, %v3278
      %v3280 = vpop.f32.mrf.mxu0
      %v3281 = vadd.f32 %v2928, %v3280
      %3282 = vmatprep.mubr.bf16.mxu0 %v2031
      %3283 = vmatmul.mubr.bf16.gmra.mxu0 %v2030
      %v3284 = vpop.f32.mrf.mxu0
      %v3285 = vadd.f32 %v2932, %v3284
      %v3286 = vpop.f32.mrf.mxu0
      %v3287 = vadd.f32 %v2934, %v3286
      %v3288 = vpop.f32.mrf.mxu0
      %v3289 = vadd.f32 %v2936, %v3288
      %v3290 = vpop.f32.mrf.mxu0
      %v3291 = vadd.f32 %v2938, %v3290
      %3292 = vmatprep.mubr.bf16.mxu0 %v2039
      %3293 = vmatmul.mubr.bf16.gmra.mxu0 %v2038
      %v3294 = vpop.f32.mrf.mxu0
      %v3295 = vadd.f32 %v2942, %v3294
      %v3296 = vpop.f32.mrf.mxu0
      %v3297 = vadd.f32 %v2944, %v3296
      %v3298 = vpop.f32.mrf.mxu0
      %v3299 = vadd.f32 %v2946, %v3298
      %v3300 = vpop.f32.mrf.mxu0
      %v3301 = vadd.f32 %v2948, %v3300
      %3302 = vmatprep.mubr.bf16.mxu0 %v2047
      %3303 = vmatmul.mubr.bf16.gmra.mxu0 %v2046
      %v3304 = vpop.f32.mrf.mxu0
      %v3305 = vadd.f32 %v2952, %v3304
      %v3306 = vpop.f32.mrf.mxu0
      %v3307 = vadd.f32 %v2954, %v3306
      %v3308 = vpop.f32.mrf.mxu0
      %v3309 = vadd.f32 %v2956, %v3308
      %v3310 = vpop.f32.mrf.mxu0
      %v3311 = vadd.f32 %v2958, %v3310
      %3312 = vmatprep.mubr.bf16.mxu0 %v2055
      %3313 = vmatmul.mubr.bf16.gmra.mxu0 %v2054
      %v3314 = vpop.f32.mrf.mxu0
      %v3315 = vadd.f32 %v2962, %v3314
      %v3316 = vpop.f32.mrf.mxu0
      %v3317 = vadd.f32 %v2964, %v3316
      %v3318 = vpop.f32.mrf.mxu0
      %v3319 = vadd.f32 %v2966, %v3318
      %v3320 = vpop.f32.mrf.mxu0
      %v3321 = vadd.f32 %v2968, %v3320
      %3322 = vmatprep.mubr.bf16.mxu0 %v2063
      %3323 = vmatmul.mubr.bf16.gmra.mxu0 %v2062
      %v3324 = vpop.f32.mrf.mxu0
      %v3325 = vadd.f32 %v2972, %v3324
      %v3326 = vpop.f32.mrf.mxu0
      %v3327 = vadd.f32 %v2974, %v3326
      %v3328 = vpop.f32.mrf.mxu0
      %v3329 = vadd.f32 %v2976, %v3328
      %v3330 = vpop.f32.mrf.mxu0
      %v3331 = vadd.f32 %v2978, %v3330
      %3332 = vmatprep.mubr.bf16.mxu0 %v2071
      %3333 = vmatmul.mubr.bf16.gmra.mxu0 %v2070
      %v3334 = vpop.f32.mrf.mxu0
      %v3335 = vadd.f32 %v2982, %v3334
      %v3336 = vpop.f32.mrf.mxu0
      %v3337 = vadd.f32 %v2984, %v3336
      %v3338 = vpop.f32.mrf.mxu0
      %v3339 = vadd.f32 %v2986, %v3338
      %v3340 = vpop.f32.mrf.mxu0
      %v3341 = vadd.f32 %v2988, %v3340
      %3342 = vmatprep.mubr.bf16.mxu0 %v2079
      %3343 = vmatmul.mubr.bf16.gmra.mxu0 %v2078
      %v3344 = vpop.f32.mrf.mxu0
      %v3345 = vadd.f32 %v2992, %v3344
      %v3346 = vpop.f32.mrf.mxu0
      %v3347 = vadd.f32 %v2994, %v3346
      %v3348 = vpop.f32.mrf.mxu0
      %v3349 = vadd.f32 %v2996, %v3348
      %v3350 = vpop.f32.mrf.mxu0
      %v3351 = vadd.f32 %v2998, %v3350
      %3352 = vmatprep.mubr.bf16.mxu0 %v2087
      %3353 = vmatmul.mubr.bf16.gmra.mxu0 %v2086
      %v3354 = vpop.f32.mrf.mxu0
      %v3355 = vadd.f32 %v3002, %v3354
      %v3356 = vpop.f32.mrf.mxu0
      %v3357 = vadd.f32 %v3004, %v3356
      %v3358 = vpop.f32.mrf.mxu0
      %v3359 = vadd.f32 %v3006, %v3358
      %v3360 = vpop.f32.mrf.mxu0
      %v3361 = vadd.f32 %v3008, %v3360
      %3362 = vmatprep.mubr.bf16.mxu0 %v2095
      %3363 = vmatmul.mubr.bf16.gmra.mxu0 %v2094
      %v3364 = vpop.f32.mrf.mxu0
      %v3365 = vadd.f32 %v3012, %v3364
      %v3366 = vpop.f32.mrf.mxu0
      %v3367 = vadd.f32 %v3014, %v3366
      %v3368 = vpop.f32.mrf.mxu0
      %v3369 = vadd.f32 %v3016, %v3368
      %v3370 = vpop.f32.mrf.mxu0
      %v3371 = vadd.f32 %v3018, %v3370
      %3372 = vmatprep.mubr.bf16.mxu0 %v2103
      %3373 = vmatmul.mubr.bf16.gmra.mxu0 %v2102
      %v3374 = vpop.f32.mrf.mxu0
      %v3375 = vadd.f32 %v3022, %v3374
      %v3376 = vpop.f32.mrf.mxu0
      %v3377 = vadd.f32 %v3024, %v3376
      %v3378 = vpop.f32.mrf.mxu0
      %v3379 = vadd.f32 %v3026, %v3378
      %v3380 = vpop.f32.mrf.mxu0
      %v3381 = vadd.f32 %v3028, %v3380
      %3382 = vmatprep.mubr.bf16.mxu0 %v2111
      %3383 = vmatmul.mubr.bf16.gmra.mxu0 %v2110
      %v3384 = vpop.f32.mrf.mxu0
      %v3385 = vadd.f32 %v3032, %v3384
      %v3386 = vpop.f32.mrf.mxu0
      %v3387 = vadd.f32 %v3034, %v3386
      %v3388 = vpop.f32.mrf.mxu0
      %v3389 = vadd.f32 %v3036, %v3388
      %v3390 = vpop.f32.mrf.mxu0
      %v3391 = vadd.f32 %v3038, %v3390
      %3392 = vmatprep.mubr.bf16.mxu0 %v2119
      %3393 = vmatmul.mubr.bf16.gmra.mxu0 %v2118
      %v3394 = vpop.f32.mrf.mxu0
      %v3395 = vadd.f32 %v3042, %v3394
      %v3396 = vpop.f32.mrf.mxu0
      %v3397 = vadd.f32 %v3044, %v3396
      %v3398 = vpop.f32.mrf.mxu0
      %v3399 = vadd.f32 %v3046, %v3398
      %v3400 = vpop.f32.mrf.mxu0
      %v3401 = vadd.f32 %v3048, %v3400
      %3402 = vmatprep.mubr.bf16.mxu0 %v2127
      %3403 = vmatmul.mubr.bf16.gmra.mxu0 %v2126
      %v3404 = vpop.f32.mrf.mxu0
      %v3405 = vadd.f32 %v3052, %v3404
      %v3406 = vpop.f32.mrf.mxu0
      %v3407 = vadd.f32 %v3054, %v3406
      %v3408 = vpop.f32.mrf.mxu0
      %v3409 = vadd.f32 %v3056, %v3408
      %v3410 = vpop.f32.mrf.mxu0
      %v3411 = vadd.f32 %v3058, %v3410
      %3412 = vmatprep.mubr.bf16.mxu0 %v2135
      %3413 = vmatmul.mubr.bf16.gmra.mxu0 %v2134
      %v3414 = vpop.f32.mrf.mxu0
      %v3415 = vadd.f32 %v3062, %v3414
      %v3416 = vpop.f32.mrf.mxu0
      %v3417 = vadd.f32 %v3064, %v3416
      %v3418 = vpop.f32.mrf.mxu0
      %v3419 = vadd.f32 %v3066, %v3418
      %v3420 = vpop.f32.mrf.mxu0
      %v3421 = vadd.f32 %v3068, %v3420
      %3422 = vmatprep.mubr.bf16.mxu0 %v2143
      %3423 = vmatmul.mubr.bf16.gmra.mxu0 %v2142
      %v3424 = vpop.f32.mrf.mxu0
      %v3425 = vadd.f32 %v3072, %v3424
      %v3426 = vpop.f32.mrf.mxu0
      %v3427 = vadd.f32 %v3074, %v3426
      %v3428 = vpop.f32.mrf.mxu0
      %v3429 = vadd.f32 %v3076, %v3428
      %v3430 = vpop.f32.mrf.mxu0
      %v3431 = vadd.f32 %v3078, %v3430
      %3432 = vmatprep.mubr.bf16.mxu0 %v2151
      %3433 = vmatmul.mubr.bf16.gmra.mxu0 %v2150
      %v3434 = vpop.f32.mrf.mxu0
      %v3435 = vadd.f32 %v3082, %v3434
      %v3436 = vpop.f32.mrf.mxu0
      %v3437 = vadd.f32 %v3084, %v3436
      %v3438 = vpop.f32.mrf.mxu0
      %v3439 = vadd.f32 %v3086, %v3438
      %v3440 = vpop.f32.mrf.mxu0
      %v3441 = vadd.f32 %v3088, %v3440
      %3442 = vmatprep.mubr.bf16.mxu0 %v2159
      %3443 = vmatmul.mubr.bf16.gmra.mxu0 %v2158
      %v3444 = vpop.f32.mrf.mxu0
      %v3445 = vadd.f32 %v3092, %v3444
      %v3446 = vpop.f32.mrf.mxu0
      %v3447 = vadd.f32 %v3094, %v3446
      %v3448 = vpop.f32.mrf.mxu0
      %v3449 = vadd.f32 %v3096, %v3448
      %v3450 = vpop.f32.mrf.mxu0
      %v3451 = vadd.f32 %v3098, %v3450
      %3452 = vmatprep.mubr.bf16.mxu0 %v2167
      %3453 = vmatmul.mubr.bf16.gmra.mxu0 %v2166
      %v3454 = vpop.f32.mrf.mxu0
      %v3455 = vadd.f32 %v3102, %v3454
      %v3456 = vpop.f32.mrf.mxu0
      %v3457 = vadd.f32 %v3104, %v3456
      %v3458 = vpop.f32.mrf.mxu0
      %v3459 = vadd.f32 %v3106, %v3458
      %v3460 = vpop.f32.mrf.mxu0
      %v3461 = vadd.f32 %v3108, %v3460
      %3462 = vmatprep.mubr.bf16.mxu0 %v2175
      %3463 = vmatmul.mubr.bf16.gmra.mxu0 %v2174
      %v3464 = vpop.f32.mrf.mxu0
      %v3465 = vadd.f32 %v3112, %v3464
      %v3466 = vpop.f32.mrf.mxu0
      %v3467 = vadd.f32 %v3114, %v3466
      %v3468 = vpop.f32.mrf.mxu0
      %v3469 = vadd.f32 %v3116, %v3468
      %v3470 = vpop.f32.mrf.mxu0
      %v3471 = vadd.f32 %v3118, %v3470
      %3472 = vmatprep.mubr.bf16.mxu0 %v2183
      %3473 = vmatmul.mubr.bf16.gmra.mxu0 %v2182
      %v3474 = vpop.f32.mrf.mxu0
      %v3475 = vadd.f32 %v3122, %v3474
      %v3476 = vpop.f32.mrf.mxu0
      %v3477 = vadd.f32 %v3124, %v3476
      %v3478 = vpop.f32.mrf.mxu0
      %v3479 = vadd.f32 %v3126, %v3478
      %v3480 = vpop.f32.mrf.mxu0
      %v3481 = vadd.f32 %v3128, %v3480
      %3482 = vmatprep.mubr.bf16.mxu0 %v2191
      %3483 = vmatmul.mubr.bf16.gmra.mxu0 %v2190
      %v3484 = vpop.f32.mrf.mxu0
      %v3485 = vadd.f32 %v3132, %v3484
      %v3486 = vpop.f32.mrf.mxu0
      %v3487 = vadd.f32 %v3134, %v3486
      %v3488 = vpop.f32.mrf.mxu0
      %v3489 = vadd.f32 %v3136, %v3488
      %v3490 = vpop.f32.mrf.mxu0
      %v3491 = vadd.f32 %v3138, %v3490
      %3492 = vmatprep.mubr.bf16.mxu0 %v2199
      %3493 = vmatmul.mubr.bf16.gmra.mxu0 %v2198
      %v3494 = vpop.f32.mrf.mxu0
      %v3495 = vadd.f32 %v3142, %v3494
      %v3496 = vpop.f32.mrf.mxu0
      %v3497 = vadd.f32 %v3144, %v3496
      %v3498 = vpop.f32.mrf.mxu0
      %v3499 = vadd.f32 %v3146, %v3498
      %v3500 = vpop.f32.mrf.mxu0
      %v3501 = vadd.f32 %v3148, %v3500
      %3502 = vmatprep.mubr.bf16.mxu0 %v2207
      %3503 = vmatmul.mubr.bf16.gmra.mxu0 %v2206
      %v3504 = vpop.f32.mrf.mxu0
      %v3505 = vadd.f32 %v3152, %v3504
      %v3506 = vpop.f32.mrf.mxu0
      %v3507 = vadd.f32 %v3154, %v3506
      %v3508 = vpop.f32.mrf.mxu0
      %v3509 = vadd.f32 %v3156, %v3508
      %v3510 = vpop.f32.mrf.mxu0
      %v3511 = vadd.f32 %v3158, %v3510
      %3512 = vmatprep.mubr.bf16.mxu0 %v2215
      %3513 = vmatmul.mubr.bf16.gmra.mxu0 %v2214
      %v3514 = vpop.f32.mrf.mxu0
      %v3515 = vadd.f32 %v3162, %v3514
      %v3516 = vpop.f32.mrf.mxu0
      %v3517 = vadd.f32 %v3164, %v3516
      %v3518 = vpop.f32.mrf.mxu0
      %v3519 = vadd.f32 %v3166, %v3518
      %v3520 = vpop.f32.mrf.mxu0
      %v3521 = vadd.f32 %v3168, %v3520
      %3522 = vmatprep.mubr.bf16.mxu0 %v2223
      %3523 = vmatmul.mubr.bf16.gmra.mxu0 %v2222
      %v3524 = vpop.f32.mrf.mxu0
      %v3525 = vadd.f32 %v3172, %v3524
      %v3526 = vpop.f32.mrf.mxu0
      %v3527 = vadd.f32 %v3174, %v3526
      %v3528 = vpop.f32.mrf.mxu0
      %v3529 = vadd.f32 %v3176, %v3528
      %v3530 = vpop.f32.mrf.mxu0
      %v3531 = vadd.f32 %v3178, %v3530
      %3532 = vmatprep.mubr.bf16.mxu0 %v2231
      %3533 = vmatmul.mubr.bf16.gmra.mxu0 %v2230
      %v3534 = vpop.f32.mrf.mxu0
      %v3535 = vadd.f32 %v3182, %v3534
      %v3536 = vpop.f32.mrf.mxu0
      %v3537 = vadd.f32 %v3184, %v3536
      %v3538 = vpop.f32.mrf.mxu0
      %v3539 = vadd.f32 %v3186, %v3538
      %v3540 = vpop.f32.mrf.mxu0
      %v3541 = vadd.f32 %v3188, %v3540
      %3542 = vmatprep.mubr.bf16.mxu0 %v2239
      %3543 = vmatmul.mubr.bf16.gmra.mxu0 %v2238
      %v3544 = vpop.f32.mrf.mxu0
      %v3545 = vadd.f32 %v3192, %v3544
      %v3546 = vpop.f32.mrf.mxu0
      %v3547 = vadd.f32 %v3194, %v3546
      %v3548 = vpop.f32.mrf.mxu0
      %v3549 = vadd.f32 %v3196, %v3548
      %v3550 = vpop.f32.mrf.mxu0
      %v3551 = vadd.f32 %v3198, %v3550
      %3552 = vmatprep.mubr.bf16.mxu0 %v2247
      %3553 = vmatmul.mubr.bf16.gmra.mxu0 %v2246
      %v3554 = vpop.f32.mrf.mxu0
      %v3555 = vadd.f32 %v3202, %v3554
      %v3556 = vpop.f32.mrf.mxu0
      %v3557 = vadd.f32 %v3204, %v3556
      %v3558 = vpop.f32.mrf.mxu0
      %v3559 = vadd.f32 %v3206, %v3558
      %v3560 = vpop.f32.mrf.mxu0
      %v3561 = vadd.f32 %v3208, %v3560
      %3562 = vmatprep.mubr.bf16.mxu0 %v2255
      %3563 = vmatmul.mubr.bf16.gmra.mxu0 %v2254
      %v3564 = vpop.f32.mrf.mxu0
      %v3565 = vadd.f32 %v3212, %v3564
      %v3566 = vpop.f32.mrf.mxu0
      %v3567 = vadd.f32 %v3214, %v3566
      %v3568 = vpop.f32.mrf.mxu0
      %v3569 = vadd.f32 %v3216, %v3568
      %v3570 = vpop.f32.mrf.mxu0
      %v3571 = vadd.f32 %v3218, %v3570
      %3572 = vdwg.mxu0
      %3573 = vmatprep.subr.bf16.mxu0 %v577
      %3574 = vmatpush1.bf16.msra.mxu0 %v576
      %3575 = vmatprep.subr.bf16.mxu0 %v575
      %3576 = vmatpush1.bf16.msra.mxu0 %v574
      %3577 = vmatprep.subr.bf16.mxu0 %v573
      %3578 = vmatpush1.bf16.msra.mxu0 %v572
      %3579 = vmatprep.subr.bf16.mxu0 %v571
      %3580 = vmatpush1.bf16.msra.mxu0 %v570
      %3581 = vmatprep.subr.bf16.mxu0 %v569
      %3582 = vmatpush1.bf16.msra.mxu0 %v568
      %3583 = vmatprep.subr.bf16.mxu0 %v567
      %3584 = vmatpush1.bf16.msra.mxu0 %v566
      %3585 = vmatprep.subr.bf16.mxu0 %v565
      %3586 = vmatpush1.bf16.msra.mxu0 %v564
      %3587 = vmatprep.subr.bf16.mxu0 %v563
      %3588 = vmatpush1.bf16.msra.mxu0 %v562
      %3589 = vmatprep.subr.bf16.mxu0 %v593
      %3590 = vmatpush2.bf16.msra.mxu0 %v592
      %3591 = vmatprep.subr.bf16.mxu0 %v591
      %3592 = vmatpush2.bf16.msra.mxu0 %v590
      %3593 = vmatprep.subr.bf16.mxu0 %v589
      %3594 = vmatpush2.bf16.msra.mxu0 %v588
      %3595 = vmatprep.subr.bf16.mxu0 %v587
      %3596 = vmatpush2.bf16.msra.mxu0 %v586
      %3597 = vmatprep.subr.bf16.mxu0 %v585
      %3598 = vmatpush2.bf16.msra.mxu0 %v584
      %3599 = vmatprep.subr.bf16.mxu0 %v583
      %3600 = vmatpush2.bf16.msra.mxu0 %v582
      %3601 = vmatprep.subr.bf16.mxu0 %v581
      %3602 = vmatpush2.bf16.msra.mxu0 %v580
      %3603 = vmatprep.subr.bf16.mxu0 %v579
      %3604 = vmatpush2.bf16.msra.mxu0 %v578
      %3605 = vmatprep.mubr.bf16.mxu0 %v2009
      %3606 = vmatmul.mubr.bf16.gmra.mxu0 %v2008
      %v3607 = vpop.f32.mrf.mxu0
      %v3608 = vadd.f32 %v3255, %v3607
      %v3609 = vpop.f32.mrf.mxu0
      %v3610 = vadd.f32 %v3257, %v3609
      %v3611 = vpop.f32.mrf.mxu0
      %v3612 = vadd.f32 %v3259, %v3611
      %v3613 = vpop.f32.mrf.mxu0
      %v3614 = vadd.f32 %v3261, %v3613
      %3615 = vmatprep.mubr.bf16.mxu0 %v2017
      %3616 = vmatmul.mubr.bf16.gmra.mxu0 %v2016
      %v3617 = vpop.f32.mrf.mxu0
      %v3618 = vadd.f32 %v3265, %v3617
      %v3619 = vpop.f32.mrf.mxu0
      %v3620 = vadd.f32 %v3267, %v3619
      %v3621 = vpop.f32.mrf.mxu0
      %v3622 = vadd.f32 %v3269, %v3621
      %v3623 = vpop.f32.mrf.mxu0
      %v3624 = vadd.f32 %v3271, %v3623
      %3625 = vmatprep.mubr.bf16.mxu0 %v2025
      %3626 = vmatmul.mubr.bf16.gmra.mxu0 %v2024
      %v3627 = vpop.f32.mrf.mxu0
      %v3628 = vadd.f32 %v3275, %v3627
      %v3629 = vpop.f32.mrf.mxu0
      %v3630 = vadd.f32 %v3277, %v3629
      %v3631 = vpop.f32.mrf.mxu0
      %v3632 = vadd.f32 %v3279, %v3631
      %v3633 = vpop.f32.mrf.mxu0
      %v3634 = vadd.f32 %v3281, %v3633
      %3635 = vmatprep.mubr.bf16.mxu0 %v2033
      %3636 = vmatmul.mubr.bf16.gmra.mxu0 %v2032
      %v3637 = vpop.f32.mrf.mxu0
      %v3638 = vadd.f32 %v3285, %v3637
      %v3639 = vpop.f32.mrf.mxu0
      %v3640 = vadd.f32 %v3287, %v3639
      %v3641 = vpop.f32.mrf.mxu0
      %v3642 = vadd.f32 %v3289, %v3641
      %v3643 = vpop.f32.mrf.mxu0
      %v3644 = vadd.f32 %v3291, %v3643
      %3645 = vmatprep.mubr.bf16.mxu0 %v2041
      %3646 = vmatmul.mubr.bf16.gmra.mxu0 %v2040
      %v3647 = vpop.f32.mrf.mxu0
      %v3648 = vadd.f32 %v3295, %v3647
      %v3649 = vpop.f32.mrf.mxu0
      %v3650 = vadd.f32 %v3297, %v3649
      %v3651 = vpop.f32.mrf.mxu0
      %v3652 = vadd.f32 %v3299, %v3651
      %v3653 = vpop.f32.mrf.mxu0
      %v3654 = vadd.f32 %v3301, %v3653
      %3655 = vmatprep.mubr.bf16.mxu0 %v2049
      %3656 = vmatmul.mubr.bf16.gmra.mxu0 %v2048
      %v3657 = vpop.f32.mrf.mxu0
      %v3658 = vadd.f32 %v3305, %v3657
      %v3659 = vpop.f32.mrf.mxu0
      %v3660 = vadd.f32 %v3307, %v3659
      %v3661 = vpop.f32.mrf.mxu0
      %v3662 = vadd.f32 %v3309, %v3661
      %v3663 = vpop.f32.mrf.mxu0
      %v3664 = vadd.f32 %v3311, %v3663
      %3665 = vmatprep.mubr.bf16.mxu0 %v2057
      %3666 = vmatmul.mubr.bf16.gmra.mxu0 %v2056
      %v3667 = vpop.f32.mrf.mxu0
      %v3668 = vadd.f32 %v3315, %v3667
      %v3669 = vpop.f32.mrf.mxu0
      %v3670 = vadd.f32 %v3317, %v3669
      %v3671 = vpop.f32.mrf.mxu0
      %v3672 = vadd.f32 %v3319, %v3671
      %v3673 = vpop.f32.mrf.mxu0
      %v3674 = vadd.f32 %v3321, %v3673
      %3675 = vmatprep.mubr.bf16.mxu0 %v2065
      %3676 = vmatmul.mubr.bf16.gmra.mxu0 %v2064
      %v3677 = vpop.f32.mrf.mxu0
      %v3678 = vadd.f32 %v3325, %v3677
      %v3679 = vpop.f32.mrf.mxu0
      %v3680 = vadd.f32 %v3327, %v3679
      %v3681 = vpop.f32.mrf.mxu0
      %v3682 = vadd.f32 %v3329, %v3681
      %v3683 = vpop.f32.mrf.mxu0
      %v3684 = vadd.f32 %v3331, %v3683
      %3685 = vmatprep.mubr.bf16.mxu0 %v2073
      %3686 = vmatmul.mubr.bf16.gmra.mxu0 %v2072
      %v3687 = vpop.f32.mrf.mxu0
      %v3688 = vadd.f32 %v3335, %v3687
      %v3689 = vpop.f32.mrf.mxu0
      %v3690 = vadd.f32 %v3337, %v3689
      %v3691 = vpop.f32.mrf.mxu0
      %v3692 = vadd.f32 %v3339, %v3691
      %v3693 = vpop.f32.mrf.mxu0
      %v3694 = vadd.f32 %v3341, %v3693
      %3695 = vmatprep.mubr.bf16.mxu0 %v2081
      %3696 = vmatmul.mubr.bf16.gmra.mxu0 %v2080
      %v3697 = vpop.f32.mrf.mxu0
      %v3698 = vadd.f32 %v3345, %v3697
      %v3699 = vpop.f32.mrf.mxu0
      %v3700 = vadd.f32 %v3347, %v3699
      %v3701 = vpop.f32.mrf.mxu0
      %v3702 = vadd.f32 %v3349, %v3701
      %v3703 = vpop.f32.mrf.mxu0
      %v3704 = vadd.f32 %v3351, %v3703
      %3705 = vmatprep.mubr.bf16.mxu0 %v2089
      %3706 = vmatmul.mubr.bf16.gmra.mxu0 %v2088
      %v3707 = vpop.f32.mrf.mxu0
      %v3708 = vadd.f32 %v3355, %v3707
      %v3709 = vpop.f32.mrf.mxu0
      %v3710 = vadd.f32 %v3357, %v3709
      %v3711 = vpop.f32.mrf.mxu0
      %v3712 = vadd.f32 %v3359, %v3711
      %v3713 = vpop.f32.mrf.mxu0
      %v3714 = vadd.f32 %v3361, %v3713
      %3715 = vmatprep.mubr.bf16.mxu0 %v2097
      %3716 = vmatmul.mubr.bf16.gmra.mxu0 %v2096
      %v3717 = vpop.f32.mrf.mxu0
      %v3718 = vadd.f32 %v3365, %v3717
      %v3719 = vpop.f32.mrf.mxu0
      %v3720 = vadd.f32 %v3367, %v3719
      %v3721 = vpop.f32.mrf.mxu0
      %v3722 = vadd.f32 %v3369, %v3721
      %v3723 = vpop.f32.mrf.mxu0
      %v3724 = vadd.f32 %v3371, %v3723
      %3725 = vmatprep.mubr.bf16.mxu0 %v2105
      %3726 = vmatmul.mubr.bf16.gmra.mxu0 %v2104
      %v3727 = vpop.f32.mrf.mxu0
      %v3728 = vadd.f32 %v3375, %v3727
      %v3729 = vpop.f32.mrf.mxu0
      %v3730 = vadd.f32 %v3377, %v3729
      %v3731 = vpop.f32.mrf.mxu0
      %v3732 = vadd.f32 %v3379, %v3731
      %v3733 = vpop.f32.mrf.mxu0
      %v3734 = vadd.f32 %v3381, %v3733
      %3735 = vmatprep.mubr.bf16.mxu0 %v2113
      %3736 = vmatmul.mubr.bf16.gmra.mxu0 %v2112
      %v3737 = vpop.f32.mrf.mxu0
      %v3738 = vadd.f32 %v3385, %v3737
      %v3739 = vpop.f32.mrf.mxu0
      %v3740 = vadd.f32 %v3387, %v3739
      %v3741 = vpop.f32.mrf.mxu0
      %v3742 = vadd.f32 %v3389, %v3741
      %v3743 = vpop.f32.mrf.mxu0
      %v3744 = vadd.f32 %v3391, %v3743
      %3745 = vmatprep.mubr.bf16.mxu0 %v2121
      %3746 = vmatmul.mubr.bf16.gmra.mxu0 %v2120
      %v3747 = vpop.f32.mrf.mxu0
      %v3748 = vadd.f32 %v3395, %v3747
      %v3749 = vpop.f32.mrf.mxu0
      %v3750 = vadd.f32 %v3397, %v3749
      %v3751 = vpop.f32.mrf.mxu0
      %v3752 = vadd.f32 %v3399, %v3751
      %v3753 = vpop.f32.mrf.mxu0
      %v3754 = vadd.f32 %v3401, %v3753
      %3755 = vmatprep.mubr.bf16.mxu0 %v2129
      %3756 = vmatmul.mubr.bf16.gmra.mxu0 %v2128
      %v3757 = vpop.f32.mrf.mxu0
      %v3758 = vadd.f32 %v3405, %v3757
      %v3759 = vpop.f32.mrf.mxu0
      %v3760 = vadd.f32 %v3407, %v3759
      %v3761 = vpop.f32.mrf.mxu0
      %v3762 = vadd.f32 %v3409, %v3761
      %v3763 = vpop.f32.mrf.mxu0
      %v3764 = vadd.f32 %v3411, %v3763
      %3765 = vmatprep.mubr.bf16.mxu0 %v2137
      %3766 = vmatmul.mubr.bf16.gmra.mxu0 %v2136
      %v3767 = vpop.f32.mrf.mxu0
      %v3768 = vadd.f32 %v3415, %v3767
      %v3769 = vpop.f32.mrf.mxu0
      %v3770 = vadd.f32 %v3417, %v3769
      %v3771 = vpop.f32.mrf.mxu0
      %v3772 = vadd.f32 %v3419, %v3771
      %v3773 = vpop.f32.mrf.mxu0
      %v3774 = vadd.f32 %v3421, %v3773
      %3775 = vmatprep.mubr.bf16.mxu0 %v2145
      %3776 = vmatmul.mubr.bf16.gmra.mxu0 %v2144
      %v3777 = vpop.f32.mrf.mxu0
      %v3778 = vadd.f32 %v3425, %v3777
      %v3779 = vpop.f32.mrf.mxu0
      %v3780 = vadd.f32 %v3427, %v3779
      %v3781 = vpop.f32.mrf.mxu0
      %v3782 = vadd.f32 %v3429, %v3781
      %v3783 = vpop.f32.mrf.mxu0
      %v3784 = vadd.f32 %v3431, %v3783
      %3785 = vmatprep.mubr.bf16.mxu0 %v2153
      %3786 = vmatmul.mubr.bf16.gmra.mxu0 %v2152
      %v3787 = vpop.f32.mrf.mxu0
      %v3788 = vadd.f32 %v3435, %v3787
      %v3789 = vpop.f32.mrf.mxu0
      %v3790 = vadd.f32 %v3437, %v3789
      %v3791 = vpop.f32.mrf.mxu0
      %v3792 = vadd.f32 %v3439, %v3791
      %v3793 = vpop.f32.mrf.mxu0
      %v3794 = vadd.f32 %v3441, %v3793
      %3795 = vmatprep.mubr.bf16.mxu0 %v2161
      %3796 = vmatmul.mubr.bf16.gmra.mxu0 %v2160
      %v3797 = vpop.f32.mrf.mxu0
      %v3798 = vadd.f32 %v3445, %v3797
      %v3799 = vpop.f32.mrf.mxu0
      %v3800 = vadd.f32 %v3447, %v3799
      %v3801 = vpop.f32.mrf.mxu0
      %v3802 = vadd.f32 %v3449, %v3801
      %v3803 = vpop.f32.mrf.mxu0
      %v3804 = vadd.f32 %v3451, %v3803
      %3805 = vmatprep.mubr.bf16.mxu0 %v2169
      %3806 = vmatmul.mubr.bf16.gmra.mxu0 %v2168
      %v3807 = vpop.f32.mrf.mxu0
      %v3808 = vadd.f32 %v3455, %v3807
      %v3809 = vpop.f32.mrf.mxu0
      %v3810 = vadd.f32 %v3457, %v3809
      %v3811 = vpop.f32.mrf.mxu0
      %v3812 = vadd.f32 %v3459, %v3811
      %v3813 = vpop.f32.mrf.mxu0
      %v3814 = vadd.f32 %v3461, %v3813
      %3815 = vmatprep.mubr.bf16.mxu0 %v2177
      %3816 = vmatmul.mubr.bf16.gmra.mxu0 %v2176
      %v3817 = vpop.f32.mrf.mxu0
      %v3818 = vadd.f32 %v3465, %v3817
      %v3819 = vpop.f32.mrf.mxu0
      %v3820 = vadd.f32 %v3467, %v3819
      %v3821 = vpop.f32.mrf.mxu0
      %v3822 = vadd.f32 %v3469, %v3821
      %v3823 = vpop.f32.mrf.mxu0
      %v3824 = vadd.f32 %v3471, %v3823
      %3825 = vmatprep.mubr.bf16.mxu0 %v2185
      %3826 = vmatmul.mubr.bf16.gmra.mxu0 %v2184
      %v3827 = vpop.f32.mrf.mxu0
      %v3828 = vadd.f32 %v3475, %v3827
      %v3829 = vpop.f32.mrf.mxu0
      %v3830 = vadd.f32 %v3477, %v3829
      %v3831 = vpop.f32.mrf.mxu0
      %v3832 = vadd.f32 %v3479, %v3831
      %v3833 = vpop.f32.mrf.mxu0
      %v3834 = vadd.f32 %v3481, %v3833
      %3835 = vmatprep.mubr.bf16.mxu0 %v2193
      %3836 = vmatmul.mubr.bf16.gmra.mxu0 %v2192
      %v3837 = vpop.f32.mrf.mxu0
      %v3838 = vadd.f32 %v3485, %v3837
      %v3839 = vpop.f32.mrf.mxu0
      %v3840 = vadd.f32 %v3487, %v3839
      %v3841 = vpop.f32.mrf.mxu0
      %v3842 = vadd.f32 %v3489, %v3841
      %v3843 = vpop.f32.mrf.mxu0
      %v3844 = vadd.f32 %v3491, %v3843
      %3845 = vmatprep.mubr.bf16.mxu0 %v2201
      %3846 = vmatmul.mubr.bf16.gmra.mxu0 %v2200
      %v3847 = vpop.f32.mrf.mxu0
      %v3848 = vadd.f32 %v3495, %v3847
      %v3849 = vpop.f32.mrf.mxu0
      %v3850 = vadd.f32 %v3497, %v3849
      %v3851 = vpop.f32.mrf.mxu0
      %v3852 = vadd.f32 %v3499, %v3851
      %v3853 = vpop.f32.mrf.mxu0
      %v3854 = vadd.f32 %v3501, %v3853
      %3855 = vmatprep.mubr.bf16.mxu0 %v2209
      %3856 = vmatmul.mubr.bf16.gmra.mxu0 %v2208
      %v3857 = vpop.f32.mrf.mxu0
      %v3858 = vadd.f32 %v3505, %v3857
      %v3859 = vpop.f32.mrf.mxu0
      %v3860 = vadd.f32 %v3507, %v3859
      %v3861 = vpop.f32.mrf.mxu0
      %v3862 = vadd.f32 %v3509, %v3861
      %v3863 = vpop.f32.mrf.mxu0
      %v3864 = vadd.f32 %v3511, %v3863
      %3865 = vmatprep.mubr.bf16.mxu0 %v2217
      %3866 = vmatmul.mubr.bf16.gmra.mxu0 %v2216
      %v3867 = vpop.f32.mrf.mxu0
      %v3868 = vadd.f32 %v3515, %v3867
      %v3869 = vpop.f32.mrf.mxu0
      %v3870 = vadd.f32 %v3517, %v3869
      %v3871 = vpop.f32.mrf.mxu0
      %v3872 = vadd.f32 %v3519, %v3871
      %v3873 = vpop.f32.mrf.mxu0
      %v3874 = vadd.f32 %v3521, %v3873
      %3875 = vmatprep.mubr.bf16.mxu0 %v2225
      %3876 = vmatmul.mubr.bf16.gmra.mxu0 %v2224
      %v3877 = vpop.f32.mrf.mxu0
      %v3878 = vadd.f32 %v3525, %v3877
      %v3879 = vpop.f32.mrf.mxu0
      %v3880 = vadd.f32 %v3527, %v3879
      %v3881 = vpop.f32.mrf.mxu0
      %v3882 = vadd.f32 %v3529, %v3881
      %v3883 = vpop.f32.mrf.mxu0
      %v3884 = vadd.f32 %v3531, %v3883
      %3885 = vmatprep.mubr.bf16.mxu0 %v2233
      %3886 = vmatmul.mubr.bf16.gmra.mxu0 %v2232
      %v3887 = vpop.f32.mrf.mxu0
      %v3888 = vadd.f32 %v3535, %v3887
      %v3889 = vpop.f32.mrf.mxu0
      %v3890 = vadd.f32 %v3537, %v3889
      %v3891 = vpop.f32.mrf.mxu0
      %v3892 = vadd.f32 %v3539, %v3891
      %v3893 = vpop.f32.mrf.mxu0
      %v3894 = vadd.f32 %v3541, %v3893
      %3895 = vmatprep.mubr.bf16.mxu0 %v2241
      %3896 = vmatmul.mubr.bf16.gmra.mxu0 %v2240
      %v3897 = vpop.f32.mrf.mxu0
      %v3898 = vadd.f32 %v3545, %v3897
      %v3899 = vpop.f32.mrf.mxu0
      %v3900 = vadd.f32 %v3547, %v3899
      %v3901 = vpop.f32.mrf.mxu0
      %v3902 = vadd.f32 %v3549, %v3901
      %v3903 = vpop.f32.mrf.mxu0
      %v3904 = vadd.f32 %v3551, %v3903
      %3905 = vmatprep.mubr.bf16.mxu0 %v2249
      %3906 = vmatmul.mubr.bf16.gmra.mxu0 %v2248
      %v3907 = vpop.f32.mrf.mxu0
      %v3908 = vadd.f32 %v3555, %v3907
      %v3909 = vpop.f32.mrf.mxu0
      %v3910 = vadd.f32 %v3557, %v3909
      %v3911 = vpop.f32.mrf.mxu0
      %v3912 = vadd.f32 %v3559, %v3911
      %v3913 = vpop.f32.mrf.mxu0
      %v3914 = vadd.f32 %v3561, %v3913
      %3915 = vmatprep.mubr.bf16.mxu0 %v2257
      %3916 = vmatmul.mubr.bf16.gmra.mxu0 %v2256
      %v3917 = vpop.f32.mrf.mxu0
      %v3918 = vadd.f32 %v3565, %v3917
      %v3919 = vpop.f32.mrf.mxu0
      %v3920 = vadd.f32 %v3567, %v3919
      %v3921 = vpop.f32.mrf.mxu0
      %v3922 = vadd.f32 %v3569, %v3921
      %v3923 = vpop.f32.mrf.mxu0
      %v3924 = vadd.f32 %v3571, %v3923
      %3925 = vdwg.mxu0
      %v3926 = vmul.f32 %v3608, %v3608
      %v3927 = vmul.f32 %v3610, %v3610
      %v3928 = vmul.f32 %v3612, %v3612
      %v3929 = vmul.f32 %v3614, %v3614
      %v3930 = vmul.f32 %v3618, %v3618
      %v3931 = vmul.f32 %v3620, %v3620
      %v3932 = vmul.f32 %v3622, %v3622
      %v3933 = vmul.f32 %v3624, %v3624
      %v3934 = vmul.f32 %v3628, %v3628
      %v3935 = vmul.f32 %v3630, %v3630
      %v3936 = vmul.f32 %v3632, %v3632
      %v3937 = vmul.f32 %v3634, %v3634
      %v3938 = vmul.f32 %v3638, %v3638
      %v3939 = vmul.f32 %v3640, %v3640
      %v3940 = vmul.f32 %v3642, %v3642
      %v3941 = vmul.f32 %v3644, %v3644
      %v3942 = vmul.f32 %v3648, %v3648
      %v3943 = vmul.f32 %v3650, %v3650
      %v3944 = vmul.f32 %v3652, %v3652
      %v3945 = vmul.f32 %v3654, %v3654
      %v3946 = vmul.f32 %v3658, %v3658
      %v3947 = vmul.f32 %v3660, %v3660
      %v3948 = vmul.f32 %v3662, %v3662
      %v3949 = vmul.f32 %v3664, %v3664
      %v3950 = vmul.f32 %v3668, %v3668
      %v3951 = vmul.f32 %v3670, %v3670
      %v3952 = vmul.f32 %v3672, %v3672
      %v3953 = vmul.f32 %v3674, %v3674
      %v3954 = vmul.f32 %v3678, %v3678
      %v3955 = vmul.f32 %v3680, %v3680
      %v3956 = vmul.f32 %v3682, %v3682
      %v3957 = vmul.f32 %v3684, %v3684
      %v3958 = vmul.f32 %v3688, %v3688
      %v3959 = vmul.f32 %v3690, %v3690
      %v3960 = vmul.f32 %v3692, %v3692
      %v3961 = vmul.f32 %v3694, %v3694
      %v3962 = vmul.f32 %v3698, %v3698
      %v3963 = vmul.f32 %v3700, %v3700
      %v3964 = vmul.f32 %v3702, %v3702
      %v3965 = vmul.f32 %v3704, %v3704
      %v3966 = vmul.f32 %v3708, %v3708
      %v3967 = vmul.f32 %v3710, %v3710
      %v3968 = vmul.f32 %v3712, %v3712
      %v3969 = vmul.f32 %v3714, %v3714
      %v3970 = vmul.f32 %v3718, %v3718
      %v3971 = vmul.f32 %v3720, %v3720
      %v3972 = vmul.f32 %v3722, %v3722
      %v3973 = vmul.f32 %v3724, %v3724
      %v3974 = vmul.f32 %v3728, %v3728
      %v3975 = vmul.f32 %v3730, %v3730
      %v3976 = vmul.f32 %v3732, %v3732
      %v3977 = vmul.f32 %v3734, %v3734
      %v3978 = vmul.f32 %v3738, %v3738
      %v3979 = vmul.f32 %v3740, %v3740
      %v3980 = vmul.f32 %v3742, %v3742
      %v3981 = vmul.f32 %v3744, %v3744
      %v3982 = vmul.f32 %v3748, %v3748
      %v3983 = vmul.f32 %v3750, %v3750
      %v3984 = vmul.f32 %v3752, %v3752
      %v3985 = vmul.f32 %v3754, %v3754
      %v3986 = vmul.f32 %v3758, %v3758
      %v3987 = vmul.f32 %v3760, %v3760
      %v3988 = vmul.f32 %v3762, %v3762
      %v3989 = vmul.f32 %v3764, %v3764
      %v3990 = vmul.f32 %v3768, %v3768
      %v3991 = vmul.f32 %v3770, %v3770
      %v3992 = vmul.f32 %v3772, %v3772
      %v3993 = vmul.f32 %v3774, %v3774
      %v3994 = vmul.f32 %v3778, %v3778
      %v3995 = vmul.f32 %v3780, %v3780
      %v3996 = vmul.f32 %v3782, %v3782
      %v3997 = vmul.f32 %v3784, %v3784
      %v3998 = vmul.f32 %v3788, %v3788
      %v3999 = vmul.f32 %v3790, %v3790
      %v4000 = vmul.f32 %v3792, %v3792
      %v4001 = vmul.f32 %v3794, %v3794
      %v4002 = vmul.f32 %v3798, %v3798
      %v4003 = vmul.f32 %v3800, %v3800
      %v4004 = vmul.f32 %v3802, %v3802
      %v4005 = vmul.f32 %v3804, %v3804
      %v4006 = vmul.f32 %v3808, %v3808
      %v4007 = vmul.f32 %v3810, %v3810
      %v4008 = vmul.f32 %v3812, %v3812
      %v4009 = vmul.f32 %v3814, %v3814
      %v4010 = vmul.f32 %v3818, %v3818
      %v4011 = vmul.f32 %v3820, %v3820
      %v4012 = vmul.f32 %v3822, %v3822
      %v4013 = vmul.f32 %v3824, %v3824
      %v4014 = vmul.f32 %v3828, %v3828
      %v4015 = vmul.f32 %v3830, %v3830
      %v4016 = vmul.f32 %v3832, %v3832
      %v4017 = vmul.f32 %v3834, %v3834
      %v4018 = vmul.f32 %v3838, %v3838
      %v4019 = vmul.f32 %v3840, %v3840
      %v4020 = vmul.f32 %v3842, %v3842
      %v4021 = vmul.f32 %v3844, %v3844
      %v4022 = vmul.f32 %v3848, %v3848
      %v4023 = vmul.f32 %v3850, %v3850
      %v4024 = vmul.f32 %v3852, %v3852
      %v4025 = vmul.f32 %v3854, %v3854
      %v4026 = vmul.f32 %v3858, %v3858
      %v4027 = vmul.f32 %v3860, %v3860
      %v4028 = vmul.f32 %v3862, %v3862
      %v4029 = vmul.f32 %v3864, %v3864
      %v4030 = vmul.f32 %v3868, %v3868
      %v4031 = vmul.f32 %v3870, %v3870
      %v4032 = vmul.f32 %v3872, %v3872
      %v4033 = vmul.f32 %v3874, %v3874
      %v4034 = vmul.f32 %v3878, %v3878
      %v4035 = vmul.f32 %v3880, %v3880
      %v4036 = vmul.f32 %v3882, %v3882
      %v4037 = vmul.f32 %v3884, %v3884
      %v4038 = vmul.f32 %v3888, %v3888
      %v4039 = vmul.f32 %v3890, %v3890
      %v4040 = vmul.f32 %v3892, %v3892
      %v4041 = vmul.f32 %v3894, %v3894
      %v4042 = vmul.f32 %v3898, %v3898
      %v4043 = vmul.f32 %v3900, %v3900
      %v4044 = vmul.f32 %v3902, %v3902
      %v4045 = vmul.f32 %v3904, %v3904
      %v4046 = vmul.f32 %v3908, %v3908
      %v4047 = vmul.f32 %v3910, %v3910
      %v4048 = vmul.f32 %v3912, %v3912
      %v4049 = vmul.f32 %v3914, %v3914
      %v4050 = vmul.f32 %v3918, %v3918
      %v4051 = vmul.f32 %v3920, %v3920
      %v4052 = vmul.f32 %v3922, %v3922
      %v4053 = vmul.f32 %v3924, %v3924
      %v4054 = vmul.f32 %v3926, 0.035677407
      %v4055 = vmul.f32 %v3927, 0.035677407
      %v4056 = vmul.f32 %v3928, 0.035677407
      %v4057 = vmul.f32 %v3929, 0.035677407
      %v4058 = vmul.f32 %v3930, 0.035677407
      %v4059 = vmul.f32 %v3931, 0.035677407
      %v4060 = vmul.f32 %v3932, 0.035677407
      %v4061 = vmul.f32 %v3933, 0.035677407
      %v4062 = vmul.f32 %v3934, 0.035677407
      %v4063 = vmul.f32 %v3935, 0.035677407
      %v4064 = vmul.f32 %v3936, 0.035677407
      %v4065 = vmul.f32 %v3937, 0.035677407
      %v4066 = vmul.f32 %v3938, 0.035677407
      %v4067 = vmul.f32 %v3939, 0.035677407
      %v4068 = vmul.f32 %v3940, 0.035677407
      %v4069 = vmul.f32 %v3941, 0.035677407
      %v4070 = vmul.f32 %v3942, 0.035677407
      %v4071 = vmul.f32 %v3943, 0.035677407
      %v4072 = vmul.f32 %v3944, 0.035677407
      %v4073 = vmul.f32 %v3945, 0.035677407
      %v4074 = vmul.f32 %v3946, 0.035677407
      %v4075 = vmul.f32 %v3947, 0.035677407
      %v4076 = vmul.f32 %v3948, 0.035677407
      %v4077 = vmul.f32 %v3949, 0.035677407
      %v4078 = vmul.f32 %v3950, 0.035677407
      %v4079 = vmul.f32 %v3951, 0.035677407
      %v4080 = vmul.f32 %v3952, 0.035677407
      %v4081 = vmul.f32 %v3953, 0.035677407
      %v4082 = vmul.f32 %v3954, 0.035677407
      %v4083 = vmul.f32 %v3955, 0.035677407
      %v4084 = vmul.f32 %v3956, 0.035677407
      %v4085 = vmul.f32 %v3957, 0.035677407
      %v4086 = vmul.f32 %v3958, 0.035677407
      %v4087 = vmul.f32 %v3959, 0.035677407
      %v4088 = vmul.f32 %v3960, 0.035677407
      %v4089 = vmul.f32 %v3961, 0.035677407
      %v4090 = vmul.f32 %v3962, 0.035677407
      %v4091 = vmul.f32 %v3963, 0.035677407
      %v4092 = vmul.f32 %v3964, 0.035677407
      %v4093 = vmul.f32 %v3965, 0.035677407
      %v4094 = vmul.f32 %v3966, 0.035677407
      %v4095 = vmul.f32 %v3967, 0.035677407
      %v4096 = vmul.f32 %v3968, 0.035677407
      %v4097 = vmul.f32 %v3969, 0.035677407
      %v4098 = vmul.f32 %v3970, 0.035677407
      %v4099 = vmul.f32 %v3971, 0.035677407
      %v4100 = vmul.f32 %v3972, 0.035677407
      %v4101 = vmul.f32 %v3973, 0.035677407
      %v4102 = vmul.f32 %v3974, 0.035677407
      %v4103 = vmul.f32 %v3975, 0.035677407
      %v4104 = vmul.f32 %v3976, 0.035677407
      %v4105 = vmul.f32 %v3977, 0.035677407
      %v4106 = vmul.f32 %v3978, 0.035677407
      %v4107 = vmul.f32 %v3979, 0.035677407
      %v4108 = vmul.f32 %v3980, 0.035677407
      %v4109 = vmul.f32 %v3981, 0.035677407
      %v4110 = vmul.f32 %v3982, 0.035677407
      %v4111 = vmul.f32 %v3983, 0.035677407
      %v4112 = vmul.f32 %v3984, 0.035677407
      %v4113 = vmul.f32 %v3985, 0.035677407
      %v4114 = vmul.f32 %v3986, 0.035677407
      %v4115 = vmul.f32 %v3987, 0.035677407
      %v4116 = vmul.f32 %v3988, 0.035677407
      %v4117 = vmul.f32 %v3989, 0.035677407
      %v4118 = vmul.f32 %v3990, 0.035677407
      %v4119 = vmul.f32 %v3991, 0.035677407
      %v4120 = vmul.f32 %v3992, 0.035677407
      %v4121 = vmul.f32 %v3993, 0.035677407
      %v4122 = vmul.f32 %v3994, 0.035677407
      %v4123 = vmul.f32 %v3995, 0.035677407
      %v4124 = vmul.f32 %v3996, 0.035677407
      %v4125 = vmul.f32 %v3997, 0.035677407
      %v4126 = vmul.f32 %v3998, 0.035677407
      %v4127 = vmul.f32 %v3999, 0.035677407
      %v4128 = vmul.f32 %v4000, 0.035677407
      %v4129 = vmul.f32 %v4001, 0.035677407
      %v4130 = vmul.f32 %v4002, 0.035677407
      %v4131 = vmul.f32 %v4003, 0.035677407
      %v4132 = vmul.f32 %v4004, 0.035677407
      %v4133 = vmul.f32 %v4005, 0.035677407
      %v4134 = vmul.f32 %v4006, 0.035677407
      %v4135 = vmul.f32 %v4007, 0.035677407
      %v4136 = vmul.f32 %v4008, 0.035677407
      %v4137 = vmul.f32 %v4009, 0.035677407
      %v4138 = vmul.f32 %v4010, 0.035677407
      %v4139 = vmul.f32 %v4011, 0.035677407
      %v4140 = vmul.f32 %v4012, 0.035677407
      %v4141 = vmul.f32 %v4013, 0.035677407
      %v4142 = vmul.f32 %v4014, 0.035677407
      %v4143 = vmul.f32 %v4015, 0.035677407
      %v4144 = vmul.f32 %v4016, 0.035677407
      %v4145 = vmul.f32 %v4017, 0.035677407
      %v4146 = vmul.f32 %v4018, 0.035677407
      %v4147 = vmul.f32 %v4019, 0.035677407
      %v4148 = vmul.f32 %v4020, 0.035677407
      %v4149 = vmul.f32 %v4021, 0.035677407
      %v4150 = vmul.f32 %v4022, 0.035677407
      %v4151 = vmul.f32 %v4023, 0.035677407
      %v4152 = vmul.f32 %v4024, 0.035677407
      %v4153 = vmul.f32 %v4025, 0.035677407
      %v4154 = vmul.f32 %v4026, 0.035677407
      %v4155 = vmul.f32 %v4027, 0.035677407
      %v4156 = vmul.f32 %v4028, 0.035677407
      %v4157 = vmul.f32 %v4029, 0.035677407
      %v4158 = vmul.f32 %v4030, 0.035677407
      %v4159 = vmul.f32 %v4031, 0.035677407
      %v4160 = vmul.f32 %v4032, 0.035677407
      %v4161 = vmul.f32 %v4033, 0.035677407
      %v4162 = vmul.f32 %v4034, 0.035677407
      %v4163 = vmul.f32 %v4035, 0.035677407
      %v4164 = vmul.f32 %v4036, 0.035677407
      %v4165 = vmul.f32 %v4037, 0.035677407
      %v4166 = vmul.f32 %v4038, 0.035677407
      %v4167 = vmul.f32 %v4039, 0.035677407
      %v4168 = vmul.f32 %v4040, 0.035677407
      %v4169 = vmul.f32 %v4041, 0.035677407
      %v4170 = vmul.f32 %v4042, 0.035677407
      %v4171 = vmul.f32 %v4043, 0.035677407
      %v4172 = vmul.f32 %v4044, 0.035677407
      %v4173 = vmul.f32 %v4045, 0.035677407
      %v4174 = vmul.f32 %v4046, 0.035677407
      %v4175 = vmul.f32 %v4047, 0.035677407
      %v4176 = vmul.f32 %v4048, 0.035677407
      %v4177 = vmul.f32 %v4049, 0.035677407
      %v4178 = vmul.f32 %v4050, 0.035677407
      %v4179 = vmul.f32 %v4051, 0.035677407
      %v4180 = vmul.f32 %v4052, 0.035677407
      %v4181 = vmul.f32 %v4053, 0.035677407
      %v4182 = vadd.f32 %v4054, 0.7978846
      %v4183 = vadd.f32 %v4055, 0.7978846
      %v4184 = vadd.f32 %v4056, 0.7978846
      %v4185 = vadd.f32 %v4057, 0.7978846
      %v4186 = vadd.f32 %v4058, 0.7978846
      %v4187 = vadd.f32 %v4059, 0.7978846
      %v4188 = vadd.f32 %v4060, 0.7978846
      %v4189 = vadd.f32 %v4061, 0.7978846
      %v4190 = vadd.f32 %v4062, 0.7978846
      %v4191 = vadd.f32 %v4063, 0.7978846
      %v4192 = vadd.f32 %v4064, 0.7978846
      %v4193 = vadd.f32 %v4065, 0.7978846
      %v4194 = vadd.f32 %v4066, 0.7978846
      %v4195 = vadd.f32 %v4067, 0.7978846
      %v4196 = vadd.f32 %v4068, 0.7978846
      %v4197 = vadd.f32 %v4069, 0.7978846
      %v4198 = vadd.f32 %v4070, 0.7978846
      %v4199 = vadd.f32 %v4071, 0.7978846
      %v4200 = vadd.f32 %v4072, 0.7978846
      %v4201 = vadd.f32 %v4073, 0.7978846
      %v4202 = vadd.f32 %v4074, 0.7978846
      %v4203 = vadd.f32 %v4075, 0.7978846
      %v4204 = vadd.f32 %v4076, 0.7978846
      %v4205 = vadd.f32 %v4077, 0.7978846
      %v4206 = vadd.f32 %v4078, 0.7978846
      %v4207 = vadd.f32 %v4079, 0.7978846
      %v4208 = vadd.f32 %v4080, 0.7978846
      %v4209 = vadd.f32 %v4081, 0.7978846
      %v4210 = vadd.f32 %v4082, 0.7978846
      %v4211 = vadd.f32 %v4083, 0.7978846
      %v4212 = vadd.f32 %v4084, 0.7978846
      %v4213 = vadd.f32 %v4085, 0.7978846
      %v4214 = vadd.f32 %v4086, 0.7978846
      %v4215 = vadd.f32 %v4087, 0.7978846
      %v4216 = vadd.f32 %v4088, 0.7978846
      %v4217 = vadd.f32 %v4089, 0.7978846
      %v4218 = vadd.f32 %v4090, 0.7978846
      %v4219 = vadd.f32 %v4091, 0.7978846
      %v4220 = vadd.f32 %v4092, 0.7978846
      %v4221 = vadd.f32 %v4093, 0.7978846
      %v4222 = vadd.f32 %v4094, 0.7978846
      %v4223 = vadd.f32 %v4095, 0.7978846
      %v4224 = vadd.f32 %v4096, 0.7978846
      %v4225 = vadd.f32 %v4097, 0.7978846
      %v4226 = vadd.f32 %v4098, 0.7978846
      %v4227 = vadd.f32 %v4099, 0.7978846
      %v4228 = vadd.f32 %v4100, 0.7978846
      %v4229 = vadd.f32 %v4101, 0.7978846
      %v4230 = vadd.f32 %v4102, 0.7978846
      %v4231 = vadd.f32 %v4103, 0.7978846
      %v4232 = vadd.f32 %v4104, 0.7978846
      %v4233 = vadd.f32 %v4105, 0.7978846
      %v4234 = vadd.f32 %v4106, 0.7978846
      %v4235 = vadd.f32 %v4107, 0.7978846
      %v4236 = vadd.f32 %v4108, 0.7978846
      %v4237 = vadd.f32 %v4109, 0.7978846
      %v4238 = vadd.f32 %v4110, 0.7978846
      %v4239 = vadd.f32 %v4111, 0.7978846
      %v4240 = vadd.f32 %v4112, 0.7978846
      %v4241 = vadd.f32 %v4113, 0.7978846
      %v4242 = vadd.f32 %v4114, 0.7978846
      %v4243 = vadd.f32 %v4115, 0.7978846
      %v4244 = vadd.f32 %v4116, 0.7978846
      %v4245 = vadd.f32 %v4117, 0.7978846
      %v4246 = vadd.f32 %v4118, 0.7978846
      %v4247 = vadd.f32 %v4119, 0.7978846
      %v4248 = vadd.f32 %v4120, 0.7978846
      %v4249 = vadd.f32 %v4121, 0.7978846
      %v4250 = vadd.f32 %v4122, 0.7978846
      %v4251 = vadd.f32 %v4123, 0.7978846
      %v4252 = vadd.f32 %v4124, 0.7978846
      %v4253 = vadd.f32 %v4125, 0.7978846
      %v4254 = vadd.f32 %v4126, 0.7978846
      %v4255 = vadd.f32 %v4127, 0.7978846
      %v4256 = vadd.f32 %v4128, 0.7978846
      %v4257 = vadd.f32 %v4129, 0.7978846
      %v4258 = vadd.f32 %v4130, 0.7978846
      %v4259 = vadd.f32 %v4131, 0.7978846
      %v4260 = vadd.f32 %v4132, 0.7978846
      %v4261 = vadd.f32 %v4133, 0.7978846
      %v4262 = vadd.f32 %v4134, 0.7978846
      %v4263 = vadd.f32 %v4135, 0.7978846
      %v4264 = vadd.f32 %v4136, 0.7978846
      %v4265 = vadd.f32 %v4137, 0.7978846
      %v4266 = vadd.f32 %v4138, 0.7978846
      %v4267 = vadd.f32 %v4139, 0.7978846
      %v4268 = vadd.f32 %v4140, 0.7978846
      %v4269 = vadd.f32 %v4141, 0.7978846
      %v4270 = vadd.f32 %v4142, 0.7978846
      %v4271 = vadd.f32 %v4143, 0.7978846
      %v4272 = vadd.f32 %v4144, 0.7978846
      %v4273 = vadd.f32 %v4145, 0.7978846
      %v4274 = vadd.f32 %v4146, 0.7978846
      %v4275 = vadd.f32 %v4147, 0.7978846
      %v4276 = vadd.f32 %v4148, 0.7978846
      %v4277 = vadd.f32 %v4149, 0.7978846
      %v4278 = vadd.f32 %v4150, 0.7978846
      %v4279 = vadd.f32 %v4151, 0.7978846
      %v4280 = vadd.f32 %v4152, 0.7978846
      %v4281 = vadd.f32 %v4153, 0.7978846
      %v4282 = vadd.f32 %v4154, 0.7978846
      %v4283 = vadd.f32 %v4155, 0.7978846
      %v4284 = vadd.f32 %v4156, 0.7978846
      %v4285 = vadd.f32 %v4157, 0.7978846
      %v4286 = vadd.f32 %v4158, 0.7978846
      %v4287 = vadd.f32 %v4159, 0.7978846
      %v4288 = vadd.f32 %v4160, 0.7978846
      %v4289 = vadd.f32 %v4161, 0.7978846
      %v4290 = vadd.f32 %v4162, 0.7978846
      %v4291 = vadd.f32 %v4163, 0.7978846
      %v4292 = vadd.f32 %v4164, 0.7978846
      %v4293 = vadd.f32 %v4165, 0.7978846
      %v4294 = vadd.f32 %v4166, 0.7978846
      %v4295 = vadd.f32 %v4167, 0.7978846
      %v4296 = vadd.f32 %v4168, 0.7978846
      %v4297 = vadd.f32 %v4169, 0.7978846
      %v4298 = vadd.f32 %v4170, 0.7978846
      %v4299 = vadd.f32 %v4171, 0.7978846
      %v4300 = vadd.f32 %v4172, 0.7978846
      %v4301 = vadd.f32 %v4173, 0.7978846
      %v4302 = vadd.f32 %v4174, 0.7978846
      %v4303 = vadd.f32 %v4175, 0.7978846
      %v4304 = vadd.f32 %v4176, 0.7978846
      %v4305 = vadd.f32 %v4177, 0.7978846
      %v4306 = vadd.f32 %v4178, 0.7978846
      %v4307 = vadd.f32 %v4179, 0.7978846
      %v4308 = vadd.f32 %v4180, 0.7978846
      %v4309 = vadd.f32 %v4181, 0.7978846
      %v4310 = vmul.f32 %v3608, %v4182
      %v4311 = vmul.f32 %v3610, %v4183
      %v4312 = vmul.f32 %v3612, %v4184
      %v4313 = vmul.f32 %v3614, %v4185
      %v4314 = vmul.f32 %v3618, %v4186
      %v4315 = vmul.f32 %v3620, %v4187
      %v4316 = vmul.f32 %v3622, %v4188
      %v4317 = vmul.f32 %v3624, %v4189
      %v4318 = vmul.f32 %v3628, %v4190
      %v4319 = vmul.f32 %v3630, %v4191
      %v4320 = vmul.f32 %v3632, %v4192
      %v4321 = vmul.f32 %v3634, %v4193
      %v4322 = vmul.f32 %v3638, %v4194
      %v4323 = vmul.f32 %v3640, %v4195
      %v4324 = vmul.f32 %v3642, %v4196
      %v4325 = vmul.f32 %v3644, %v4197
      %v4326 = vmul.f32 %v3648, %v4198
      %v4327 = vmul.f32 %v3650, %v4199
      %v4328 = vmul.f32 %v3652, %v4200
      %v4329 = vmul.f32 %v3654, %v4201
      %v4330 = vmul.f32 %v3658, %v4202
      %v4331 = vmul.f32 %v3660, %v4203
      %v4332 = vmul.f32 %v3662, %v4204
      %v4333 = vmul.f32 %v3664, %v4205
      %v4334 = vmul.f32 %v3668, %v4206
      %v4335 = vmul.f32 %v3670, %v4207
      %v4336 = vmul.f32 %v3672, %v4208
      %v4337 = vmul.f32 %v3674, %v4209
      %v4338 = vmul.f32 %v3678, %v4210
      %v4339 = vmul.f32 %v3680, %v4211
      %v4340 = vmul.f32 %v3682, %v4212
      %v4341 = vmul.f32 %v3684, %v4213
      %v4342 = vmul.f32 %v3688, %v4214
      %v4343 = vmul.f32 %v3690, %v4215
      %v4344 = vmul.f32 %v3692, %v4216
      %v4345 = vmul.f32 %v3694, %v4217
      %v4346 = vmul.f32 %v3698, %v4218
      %v4347 = vmul.f32 %v3700, %v4219
      %v4348 = vmul.f32 %v3702, %v4220
      %v4349 = vmul.f32 %v3704, %v4221
      %v4350 = vmul.f32 %v3708, %v4222
      %v4351 = vmul.f32 %v3710, %v4223
      %v4352 = vmul.f32 %v3712, %v4224
      %v4353 = vmul.f32 %v3714, %v4225
      %v4354 = vmul.f32 %v3718, %v4226
      %v4355 = vmul.f32 %v3720, %v4227
      %v4356 = vmul.f32 %v3722, %v4228
      %v4357 = vmul.f32 %v3724, %v4229
      %v4358 = vmul.f32 %v3728, %v4230
      %v4359 = vmul.f32 %v3730, %v4231
      %v4360 = vmul.f32 %v3732, %v4232
      %v4361 = vmul.f32 %v3734, %v4233
      %v4362 = vmul.f32 %v3738, %v4234
      %v4363 = vmul.f32 %v3740, %v4235
      %v4364 = vmul.f32 %v3742, %v4236
      %v4365 = vmul.f32 %v3744, %v4237
      %v4366 = vmul.f32 %v3748, %v4238
      %v4367 = vmul.f32 %v3750, %v4239
      %v4368 = vmul.f32 %v3752, %v4240
      %v4369 = vmul.f32 %v3754, %v4241
      %v4370 = vmul.f32 %v3758, %v4242
      %v4371 = vmul.f32 %v3760, %v4243
      %v4372 = vmul.f32 %v3762, %v4244
      %v4373 = vmul.f32 %v3764, %v4245
      %v4374 = vmul.f32 %v3768, %v4246
      %v4375 = vmul.f32 %v3770, %v4247
      %v4376 = vmul.f32 %v3772, %v4248
      %v4377 = vmul.f32 %v3774, %v4249
      %v4378 = vmul.f32 %v3778, %v4250
      %v4379 = vmul.f32 %v3780, %v4251
      %v4380 = vmul.f32 %v3782, %v4252
      %v4381 = vmul.f32 %v3784, %v4253
      %v4382 = vmul.f32 %v3788, %v4254
      %v4383 = vmul.f32 %v3790, %v4255
      %v4384 = vmul.f32 %v3792, %v4256
      %v4385 = vmul.f32 %v3794, %v4257
      %v4386 = vmul.f32 %v3798, %v4258
      %v4387 = vmul.f32 %v3800, %v4259
      %v4388 = vmul.f32 %v3802, %v4260
      %v4389 = vmul.f32 %v3804, %v4261
      %v4390 = vmul.f32 %v3808, %v4262
      %v4391 = vmul.f32 %v3810, %v4263
      %v4392 = vmul.f32 %v3812, %v4264
      %v4393 = vmul.f32 %v3814, %v4265
      %v4394 = vmul.f32 %v3818, %v4266
      %v4395 = vmul.f32 %v3820, %v4267
      %v4396 = vmul.f32 %v3822, %v4268
      %v4397 = vmul.f32 %v3824, %v4269
      %v4398 = vmul.f32 %v3828, %v4270
      %v4399 = vmul.f32 %v3830, %v4271
      %v4400 = vmul.f32 %v3832, %v4272
      %v4401 = vmul.f32 %v3834, %v4273
      %v4402 = vmul.f32 %v3838, %v4274
      %v4403 = vmul.f32 %v3840, %v4275
      %v4404 = vmul.f32 %v3842, %v4276
      %v4405 = vmul.f32 %v3844, %v4277
      %v4406 = vmul.f32 %v3848, %v4278
      %v4407 = vmul.f32 %v3850, %v4279
      %v4408 = vmul.f32 %v3852, %v4280
      %v4409 = vmul.f32 %v3854, %v4281
      %v4410 = vmul.f32 %v3858, %v4282
      %v4411 = vmul.f32 %v3860, %v4283
      %v4412 = vmul.f32 %v3862, %v4284
      %v4413 = vmul.f32 %v3864, %v4285
      %v4414 = vmul.f32 %v3868, %v4286
      %v4415 = vmul.f32 %v3870, %v4287
      %v4416 = vmul.f32 %v3872, %v4288
      %v4417 = vmul.f32 %v3874, %v4289
      %v4418 = vmul.f32 %v3878, %v4290
      %v4419 = vmul.f32 %v3880, %v4291
      %v4420 = vmul.f32 %v3882, %v4292
      %v4421 = vmul.f32 %v3884, %v4293
      %v4422 = vmul.f32 %v3888, %v4294
      %v4423 = vmul.f32 %v3890, %v4295
      %v4424 = vmul.f32 %v3892, %v4296
      %v4425 = vmul.f32 %v3894, %v4297
      %v4426 = vmul.f32 %v3898, %v4298
      %v4427 = vmul.f32 %v3900, %v4299
      %v4428 = vmul.f32 %v3902, %v4300
      %v4429 = vmul.f32 %v3904, %v4301
      %v4430 = vmul.f32 %v3908, %v4302
      %v4431 = vmul.f32 %v3910, %v4303
      %v4432 = vmul.f32 %v3912, %v4304
      %v4433 = vmul.f32 %v3914, %v4305
      %v4434 = vmul.f32 %v3918, %v4306
      %v4435 = vmul.f32 %v3920, %v4307
      %v4436 = vmul.f32 %v3922, %v4308
      %v4437 = vmul.f32 %v3924, %v4309
      %v4438 = vmul.f32 %v3608, 0.5
      %v4439 = vmul.f32 %v3610, 0.5
      %v4440 = vmul.f32 %v3612, 0.5
      %v4441 = vmul.f32 %v3614, 0.5
      %v4442 = vmul.f32 %v3618, 0.5
      %v4443 = vmul.f32 %v3620, 0.5
      %v4444 = vmul.f32 %v3622, 0.5
      %v4445 = vmul.f32 %v3624, 0.5
      %v4446 = vmul.f32 %v3628, 0.5
      %v4447 = vmul.f32 %v3630, 0.5
      %v4448 = vmul.f32 %v3632, 0.5
      %v4449 = vmul.f32 %v3634, 0.5
      %v4450 = vmul.f32 %v3638, 0.5
      %v4451 = vmul.f32 %v3640, 0.5
      %v4452 = vmul.f32 %v3642, 0.5
      %v4453 = vmul.f32 %v3644, 0.5
      %v4454 = vmul.f32 %v3648, 0.5
      %v4455 = vmul.f32 %v3650, 0.5
      %v4456 = vmul.f32 %v3652, 0.5
      %v4457 = vmul.f32 %v3654, 0.5
      %v4458 = vmul.f32 %v3658, 0.5
      %v4459 = vmul.f32 %v3660, 0.5
      %v4460 = vmul.f32 %v3662, 0.5
      %v4461 = vmul.f32 %v3664, 0.5
      %v4462 = vmul.f32 %v3668, 0.5
      %v4463 = vmul.f32 %v3670, 0.5
      %v4464 = vmul.f32 %v3672, 0.5
      %v4465 = vmul.f32 %v3674, 0.5
      %v4466 = vmul.f32 %v3678, 0.5
      %v4467 = vmul.f32 %v3680, 0.5
      %v4468 = vmul.f32 %v3682, 0.5
      %v4469 = vmul.f32 %v3684, 0.5
      %v4470 = vmul.f32 %v3688, 0.5
      %v4471 = vmul.f32 %v3690, 0.5
      %v4472 = vmul.f32 %v3692, 0.5
      %v4473 = vmul.f32 %v3694, 0.5
      %v4474 = vmul.f32 %v3698, 0.5
      %v4475 = vmul.f32 %v3700, 0.5
      %v4476 = vmul.f32 %v3702, 0.5
      %v4477 = vmul.f32 %v3704, 0.5
      %v4478 = vmul.f32 %v3708, 0.5
      %v4479 = vmul.f32 %v3710, 0.5
      %v4480 = vmul.f32 %v3712, 0.5
      %v4481 = vmul.f32 %v3714, 0.5
      %v4482 = vmul.f32 %v3718, 0.5
      %v4483 = vmul.f32 %v3720, 0.5
      %v4484 = vmul.f32 %v3722, 0.5
      %v4485 = vmul.f32 %v3724, 0.5
      %v4486 = vmul.f32 %v3728, 0.5
      %v4487 = vmul.f32 %v3730, 0.5
      %v4488 = vmul.f32 %v3732, 0.5
      %v4489 = vmul.f32 %v3734, 0.5
      %v4490 = vmul.f32 %v3738, 0.5
      %v4491 = vmul.f32 %v3740, 0.5
      %v4492 = vmul.f32 %v3742, 0.5
      %v4493 = vmul.f32 %v3744, 0.5
      %v4494 = vmul.f32 %v3748, 0.5
      %v4495 = vmul.f32 %v3750, 0.5
      %v4496 = vmul.f32 %v3752, 0.5
      %v4497 = vmul.f32 %v3754, 0.5
      %v4498 = vmul.f32 %v3758, 0.5
      %v4499 = vmul.f32 %v3760, 0.5
      %v4500 = vmul.f32 %v3762, 0.5
      %v4501 = vmul.f32 %v3764, 0.5
      %v4502 = vmul.f32 %v3768, 0.5
      %v4503 = vmul.f32 %v3770, 0.5
      %v4504 = vmul.f32 %v3772, 0.5
      %v4505 = vmul.f32 %v3774, 0.5
      %v4506 = vmul.f32 %v3778, 0.5
      %v4507 = vmul.f32 %v3780, 0.5
      %v4508 = vmul.f32 %v3782, 0.5
      %v4509 = vmul.f32 %v3784, 0.5
      %v4510 = vmul.f32 %v3788, 0.5
      %v4511 = vmul.f32 %v3790, 0.5
      %v4512 = vmul.f32 %v3792, 0.5
      %v4513 = vmul.f32 %v3794, 0.5
      %v4514 = vmul.f32 %v3798, 0.5
      %v4515 = vmul.f32 %v3800, 0.5
      %v4516 = vmul.f32 %v3802, 0.5
      %v4517 = vmul.f32 %v3804, 0.5
      %v4518 = vmul.f32 %v3808, 0.5
      %v4519 = vmul.f32 %v3810, 0.5
      %v4520 = vmul.f32 %v3812, 0.5
      %v4521 = vmul.f32 %v3814, 0.5
      %v4522 = vmul.f32 %v3818, 0.5
      %v4523 = vmul.f32 %v3820, 0.5
      %v4524 = vmul.f32 %v3822, 0.5
      %v4525 = vmul.f32 %v3824, 0.5
      %v4526 = vmul.f32 %v3828, 0.5
      %v4527 = vmul.f32 %v3830, 0.5
      %v4528 = vmul.f32 %v3832, 0.5
      %v4529 = vmul.f32 %v3834, 0.5
      %v4530 = vmul.f32 %v3838, 0.5
      %v4531 = vmul.f32 %v3840, 0.5
      %v4532 = vmul.f32 %v3842, 0.5
      %v4533 = vmul.f32 %v3844, 0.5
      %v4534 = vmul.f32 %v3848, 0.5
      %v4535 = vmul.f32 %v3850, 0.5
      %v4536 = vmul.f32 %v3852, 0.5
      %v4537 = vmul.f32 %v3854, 0.5
      %v4538 = vmul.f32 %v3858, 0.5
      %v4539 = vmul.f32 %v3860, 0.5
      %v4540 = vmul.f32 %v3862, 0.5
      %v4541 = vmul.f32 %v3864, 0.5
      %v4542 = vmul.f32 %v3868, 0.5
      %v4543 = vmul.f32 %v3870, 0.5
      %v4544 = vmul.f32 %v3872, 0.5
      %v4545 = vmul.f32 %v3874, 0.5
      %v4546 = vmul.f32 %v3878, 0.5
      %v4547 = vmul.f32 %v3880, 0.5
      %v4548 = vmul.f32 %v3882, 0.5
      %v4549 = vmul.f32 %v3884, 0.5
      %v4550 = vmul.f32 %v3888, 0.5
      %v4551 = vmul.f32 %v3890, 0.5
      %v4552 = vmul.f32 %v3892, 0.5
      %v4553 = vmul.f32 %v3894, 0.5
      %v4554 = vmul.f32 %v3898, 0.5
      %v4555 = vmul.f32 %v3900, 0.5
      %v4556 = vmul.f32 %v3902, 0.5
      %v4557 = vmul.f32 %v3904, 0.5
      %v4558 = vmul.f32 %v3908, 0.5
      %v4559 = vmul.f32 %v3910, 0.5
      %v4560 = vmul.f32 %v3912, 0.5
      %v4561 = vmul.f32 %v3914, 0.5
      %v4562 = vmul.f32 %v3918, 0.5
      %v4563 = vmul.f32 %v3920, 0.5
      %v4564 = vmul.f32 %v3922, 0.5
      %v4565 = vmul.f32 %v3924, 0.5
      %v4566 = vtanh.pop %v4310
      %v4567 = vtanh.pop %v4311
      %v4568 = vtanh.pop %v4312
      %v4569 = vtanh.pop %v4313
      %v4570 = vtanh.pop %v4314
      %v4571 = vtanh.pop %v4315
      %v4572 = vtanh.pop %v4316
      %v4573 = vtanh.pop %v4317
      %v4574 = vtanh.pop %v4318
      %v4575 = vtanh.pop %v4319
      %v4576 = vtanh.pop %v4320
      %v4577 = vtanh.pop %v4321
      %v4578 = vtanh.pop %v4322
      %v4579 = vtanh.pop %v4323
      %v4580 = vtanh.pop %v4324
      %v4581 = vtanh.pop %v4325
      %v4582 = vtanh.pop %v4326
      %v4583 = vtanh.pop %v4327
      %v4584 = vtanh.pop %v4328
      %v4585 = vtanh.pop %v4329
      %v4586 = vtanh.pop %v4330
      %v4587 = vtanh.pop %v4331
      %v4588 = vtanh.pop %v4332
      %v4589 = vtanh.pop %v4333
      %v4590 = vtanh.pop %v4334
      %v4591 = vtanh.pop %v4335
      %v4592 = vtanh.pop %v4336
      %v4593 = vtanh.pop %v4337
      %v4594 = vtanh.pop %v4338
      %v4595 = vtanh.pop %v4339
      %v4596 = vtanh.pop %v4340
      %v4597 = vtanh.pop %v4341
      %v4598 = vtanh.pop %v4342
      %v4599 = vtanh.pop %v4343
      %v4600 = vtanh.pop %v4344
      %v4601 = vtanh.pop %v4345
      %v4602 = vtanh.pop %v4346
      %v4603 = vtanh.pop %v4347
      %v4604 = vtanh.pop %v4348
      %v4605 = vtanh.pop %v4349
      %v4606 = vtanh.pop %v4350
      %v4607 = vtanh.pop %v4351
      %v4608 = vtanh.pop %v4352
      %v4609 = vtanh.pop %v4353
      %v4610 = vtanh.pop %v4354
      %v4611 = vtanh.pop %v4355
      %v4612 = vtanh.pop %v4356
      %v4613 = vtanh.pop %v4357
      %v4614 = vtanh.pop %v4358
      %v4615 = vtanh.pop %v4359
      %v4616 = vtanh.pop %v4360
      %v4617 = vtanh.pop %v4361
      %v4618 = vtanh.pop %v4362
      %v4619 = vtanh.pop %v4363
      %v4620 = vtanh.pop %v4364
      %v4621 = vtanh.pop %v4365
      %v4622 = vtanh.pop %v4366
      %v4623 = vtanh.pop %v4367
      %v4624 = vtanh.pop %v4368
      %v4625 = vtanh.pop %v4369
      %v4626 = vtanh.pop %v4370
      %v4627 = vtanh.pop %v4371
      %v4628 = vtanh.pop %v4372
      %v4629 = vtanh.pop %v4373
      %v4630 = vtanh.pop %v4374
      %v4631 = vtanh.pop %v4375
      %v4632 = vtanh.pop %v4376
      %v4633 = vtanh.pop %v4377
      %v4634 = vtanh.pop %v4378
      %v4635 = vtanh.pop %v4379
      %v4636 = vtanh.pop %v4380
      %v4637 = vtanh.pop %v4381
      %v4638 = vtanh.pop %v4382
      %v4639 = vtanh.pop %v4383
      %v4640 = vtanh.pop %v4384
      %v4641 = vtanh.pop %v4385
      %v4642 = vtanh.pop %v4386
      %v4643 = vtanh.pop %v4387
      %v4644 = vtanh.pop %v4388
      %v4645 = vtanh.pop %v4389
      %v4646 = vtanh.pop %v4390
      %v4647 = vtanh.pop %v4391
      %v4648 = vtanh.pop %v4392
      %v4649 = vtanh.pop %v4393
      %v4650 = vtanh.pop %v4394
      %v4651 = vtanh.pop %v4395
      %v4652 = vtanh.pop %v4396
      %v4653 = vtanh.pop %v4397
      %v4654 = vtanh.pop %v4398
      %v4655 = vtanh.pop %v4399
      %v4656 = vtanh.pop %v4400
      %v4657 = vtanh.pop %v4401
      %v4658 = vtanh.pop %v4402
      %v4659 = vtanh.pop %v4403
      %v4660 = vtanh.pop %v4404
      %v4661 = vtanh.pop %v4405
      %v4662 = vtanh.pop %v4406
      %v4663 = vtanh.pop %v4407
      %v4664 = vtanh.pop %v4408
      %v4665 = vtanh.pop %v4409
      %v4666 = vtanh.pop %v4410
      %v4667 = vtanh.pop %v4411
      %v4668 = vtanh.pop %v4412
      %v4669 = vtanh.pop %v4413
      %v4670 = vtanh.pop %v4414
      %v4671 = vtanh.pop %v4415
      %v4672 = vtanh.pop %v4416
      %v4673 = vtanh.pop %v4417
      %v4674 = vtanh.pop %v4418
      %v4675 = vtanh.pop %v4419
      %v4676 = vtanh.pop %v4420
      %v4677 = vtanh.pop %v4421
      %v4678 = vtanh.pop %v4422
      %v4679 = vtanh.pop %v4423
      %v4680 = vtanh.pop %v4424
      %v4681 = vtanh.pop %v4425
      %v4682 = vtanh.pop %v4426
      %v4683 = vtanh.pop %v4427
      %v4684 = vtanh.pop %v4428
      %v4685 = vtanh.pop %v4429
      %v4686 = vtanh.pop %v4430
      %v4687 = vtanh.pop %v4431
      %v4688 = vtanh.pop %v4432
      %v4689 = vtanh.pop %v4433
      %v4690 = vtanh.pop %v4434
      %v4691 = vtanh.pop %v4435
      %v4692 = vtanh.pop %v4436
      %v4693 = vtanh.pop %v4437
      %v4694 = vadd.f32 %v4566, 1.0
      %v4695 = vadd.f32 %v4567, 1.0
      %v4696 = vadd.f32 %v4568, 1.0
      %v4697 = vadd.f32 %v4569, 1.0
      %v4698 = vadd.f32 %v4570, 1.0
      %v4699 = vadd.f32 %v4571, 1.0
      %v4700 = vadd.f32 %v4572, 1.0
      %v4701 = vadd.f32 %v4573, 1.0
      %v4702 = vadd.f32 %v4574, 1.0
      %v4703 = vadd.f32 %v4575, 1.0
      %v4704 = vadd.f32 %v4576, 1.0
      %v4705 = vadd.f32 %v4577, 1.0
      %v4706 = vadd.f32 %v4578, 1.0
      %v4707 = vadd.f32 %v4579, 1.0
      %v4708 = vadd.f32 %v4580, 1.0
      %v4709 = vadd.f32 %v4581, 1.0
      %v4710 = vadd.f32 %v4582, 1.0
      %v4711 = vadd.f32 %v4583, 1.0
      %v4712 = vadd.f32 %v4584, 1.0
      %v4713 = vadd.f32 %v4585, 1.0
      %v4714 = vadd.f32 %v4586, 1.0
      %v4715 = vadd.f32 %v4587, 1.0
      %v4716 = vadd.f32 %v4588, 1.0
      %v4717 = vadd.f32 %v4589, 1.0
      %v4718 = vadd.f32 %v4590, 1.0
      %v4719 = vadd.f32 %v4591, 1.0
      %v4720 = vadd.f32 %v4592, 1.0
      %v4721 = vadd.f32 %v4593, 1.0
      %v4722 = vadd.f32 %v4594, 1.0
      %v4723 = vadd.f32 %v4595, 1.0
      %v4724 = vadd.f32 %v4596, 1.0
      %v4725 = vadd.f32 %v4597, 1.0
      %v4726 = vadd.f32 %v4598, 1.0
      %v4727 = vadd.f32 %v4599, 1.0
      %v4728 = vadd.f32 %v4600, 1.0
      %v4729 = vadd.f32 %v4601, 1.0
      %v4730 = vadd.f32 %v4602, 1.0
      %v4731 = vadd.f32 %v4603, 1.0
      %v4732 = vadd.f32 %v4604, 1.0
      %v4733 = vadd.f32 %v4605, 1.0
      %v4734 = vadd.f32 %v4606, 1.0
      %v4735 = vadd.f32 %v4607, 1.0
      %v4736 = vadd.f32 %v4608, 1.0
      %v4737 = vadd.f32 %v4609, 1.0
      %v4738 = vadd.f32 %v4610, 1.0
      %v4739 = vadd.f32 %v4611, 1.0
      %v4740 = vadd.f32 %v4612, 1.0
      %v4741 = vadd.f32 %v4613, 1.0
      %v4742 = vadd.f32 %v4614, 1.0
      %v4743 = vadd.f32 %v4615, 1.0
      %v4744 = vadd.f32 %v4616, 1.0
      %v4745 = vadd.f32 %v4617, 1.0
      %v4746 = vadd.f32 %v4618, 1.0
      %v4747 = vadd.f32 %v4619, 1.0
      %v4748 = vadd.f32 %v4620, 1.0
      %v4749 = vadd.f32 %v4621, 1.0
      %v4750 = vadd.f32 %v4622, 1.0
      %v4751 = vadd.f32 %v4623, 1.0
      %v4752 = vadd.f32 %v4624, 1.0
      %v4753 = vadd.f32 %v4625, 1.0
      %v4754 = vadd.f32 %v4626, 1.0
      %v4755 = vadd.f32 %v4627, 1.0
      %v4756 = vadd.f32 %v4628, 1.0
      %v4757 = vadd.f32 %v4629, 1.0
      %v4758 = vadd.f32 %v4630, 1.0
      %v4759 = vadd.f32 %v4631, 1.0
      %v4760 = vadd.f32 %v4632, 1.0
      %v4761 = vadd.f32 %v4633, 1.0
      %v4762 = vadd.f32 %v4634, 1.0
      %v4763 = vadd.f32 %v4635, 1.0
      %v4764 = vadd.f32 %v4636, 1.0
      %v4765 = vadd.f32 %v4637, 1.0
      %v4766 = vadd.f32 %v4638, 1.0
      %v4767 = vadd.f32 %v4639, 1.0
      %v4768 = vadd.f32 %v4640, 1.0
      %v4769 = vadd.f32 %v4641, 1.0
      %v4770 = vadd.f32 %v4642, 1.0
      %v4771 = vadd.f32 %v4643, 1.0
      %v4772 = vadd.f32 %v4644, 1.0
      %v4773 = vadd.f32 %v4645, 1.0
      %v4774 = vadd.f32 %v4646, 1.0
      %v4775 = vadd.f32 %v4647, 1.0
      %v4776 = vadd.f32 %v4648, 1.0
      %v4777 = vadd.f32 %v4649, 1.0
      %v4778 = vadd.f32 %v4650, 1.0
      %v4779 = vadd.f32 %v4651, 1.0
      %v4780 = vadd.f32 %v4652, 1.0
      %v4781 = vadd.f32 %v4653, 1.0
      %v4782 = vadd.f32 %v4654, 1.0
      %v4783 = vadd.f32 %v4655, 1.0
      %v4784 = vadd.f32 %v4656, 1.0
      %v4785 = vadd.f32 %v4657, 1.0
      %v4786 = vadd.f32 %v4658, 1.0
      %v4787 = vadd.f32 %v4659, 1.0
      %v4788 = vadd.f32 %v4660, 1.0
      %v4789 = vadd.f32 %v4661, 1.0
      %v4790 = vadd.f32 %v4662, 1.0
      %v4791 = vadd.f32 %v4663, 1.0
      %v4792 = vadd.f32 %v4664, 1.0
      %v4793 = vadd.f32 %v4665, 1.0
      %v4794 = vadd.f32 %v4666, 1.0
      %v4795 = vadd.f32 %v4667, 1.0
      %v4796 = vadd.f32 %v4668, 1.0
      %v4797 = vadd.f32 %v4669, 1.0
      %v4798 = vadd.f32 %v4670, 1.0
      %v4799 = vadd.f32 %v4671, 1.0
      %v4800 = vadd.f32 %v4672, 1.0
      %v4801 = vadd.f32 %v4673, 1.0
      %v4802 = vadd.f32 %v4674, 1.0
      %v4803 = vadd.f32 %v4675, 1.0
      %v4804 = vadd.f32 %v4676, 1.0
      %v4805 = vadd.f32 %v4677, 1.0
      %v4806 = vadd.f32 %v4678, 1.0
      %v4807 = vadd.f32 %v4679, 1.0
      %v4808 = vadd.f32 %v4680, 1.0
      %v4809 = vadd.f32 %v4681, 1.0
      %v4810 = vadd.f32 %v4682, 1.0
      %v4811 = vadd.f32 %v4683, 1.0
      %v4812 = vadd.f32 %v4684, 1.0
      %v4813 = vadd.f32 %v4685, 1.0
      %v4814 = vadd.f32 %v4686, 1.0
      %v4815 = vadd.f32 %v4687, 1.0
      %v4816 = vadd.f32 %v4688, 1.0
      %v4817 = vadd.f32 %v4689, 1.0
      %v4818 = vadd.f32 %v4690, 1.0
      %v4819 = vadd.f32 %v4691, 1.0
      %v4820 = vadd.f32 %v4692, 1.0
      %v4821 = vadd.f32 %v4693, 1.0
      %v4822 = vmul.f32 %v4438, %v4694
      %v4823 = vmul.f32 %v4439, %v4695
      %v4824 = vmul.f32 %v4440, %v4696
      %v4825 = vmul.f32 %v4441, %v4697
      %v4826 = vmul.f32 %v4442, %v4698
      %v4827 = vmul.f32 %v4443, %v4699
      %v4828 = vmul.f32 %v4444, %v4700
      %v4829 = vmul.f32 %v4445, %v4701
      %v4830 = vmul.f32 %v4446, %v4702
      %v4831 = vmul.f32 %v4447, %v4703
      %v4832 = vmul.f32 %v4448, %v4704
      %v4833 = vmul.f32 %v4449, %v4705
      %v4834 = vmul.f32 %v4450, %v4706
      %v4835 = vmul.f32 %v4451, %v4707
      %v4836 = vmul.f32 %v4452, %v4708
      %v4837 = vmul.f32 %v4453, %v4709
      %v4838 = vmul.f32 %v4454, %v4710
      %v4839 = vmul.f32 %v4455, %v4711
      %v4840 = vmul.f32 %v4456, %v4712
      %v4841 = vmul.f32 %v4457, %v4713
      %v4842 = vmul.f32 %v4458, %v4714
      %v4843 = vmul.f32 %v4459, %v4715
      %v4844 = vmul.f32 %v4460, %v4716
      %v4845 = vmul.f32 %v4461, %v4717
      %v4846 = vmul.f32 %v4462, %v4718
      %v4847 = vmul.f32 %v4463, %v4719
      %v4848 = vmul.f32 %v4464, %v4720
      %v4849 = vmul.f32 %v4465, %v4721
      %v4850 = vmul.f32 %v4466, %v4722
      %v4851 = vmul.f32 %v4467, %v4723
      %v4852 = vmul.f32 %v4468, %v4724
      %v4853 = vmul.f32 %v4469, %v4725
      %v4854 = vmul.f32 %v4470, %v4726
      %v4855 = vmul.f32 %v4471, %v4727
      %v4856 = vmul.f32 %v4472, %v4728
      %v4857 = vmul.f32 %v4473, %v4729
      %v4858 = vmul.f32 %v4474, %v4730
      %v4859 = vmul.f32 %v4475, %v4731
      %v4860 = vmul.f32 %v4476, %v4732
      %v4861 = vmul.f32 %v4477, %v4733
      %v4862 = vmul.f32 %v4478, %v4734
      %v4863 = vmul.f32 %v4479, %v4735
      %v4864 = vmul.f32 %v4480, %v4736
      %v4865 = vmul.f32 %v4481, %v4737
      %v4866 = vmul.f32 %v4482, %v4738
      %v4867 = vmul.f32 %v4483, %v4739
      %v4868 = vmul.f32 %v4484, %v4740
      %v4869 = vmul.f32 %v4485, %v4741
      %v4870 = vmul.f32 %v4486, %v4742
      %v4871 = vmul.f32 %v4487, %v4743
      %v4872 = vmul.f32 %v4488, %v4744
      %v4873 = vmul.f32 %v4489, %v4745
      %v4874 = vmul.f32 %v4490, %v4746
      %v4875 = vmul.f32 %v4491, %v4747
      %v4876 = vmul.f32 %v4492, %v4748
      %v4877 = vmul.f32 %v4493, %v4749
      %v4878 = vmul.f32 %v4494, %v4750
      %v4879 = vmul.f32 %v4495, %v4751
      %v4880 = vmul.f32 %v4496, %v4752
      %v4881 = vmul.f32 %v4497, %v4753
      %v4882 = vmul.f32 %v4498, %v4754
      %v4883 = vmul.f32 %v4499, %v4755
      %v4884 = vmul.f32 %v4500, %v4756
      %v4885 = vmul.f32 %v4501, %v4757
      %v4886 = vmul.f32 %v4502, %v4758
      %v4887 = vmul.f32 %v4503, %v4759
      %v4888 = vmul.f32 %v4504, %v4760
      %v4889 = vmul.f32 %v4505, %v4761
      %v4890 = vmul.f32 %v4506, %v4762
      %v4891 = vmul.f32 %v4507, %v4763
      %v4892 = vmul.f32 %v4508, %v4764
      %v4893 = vmul.f32 %v4509, %v4765
      %v4894 = vmul.f32 %v4510, %v4766
      %v4895 = vmul.f32 %v4511, %v4767
      %v4896 = vmul.f32 %v4512, %v4768
      %v4897 = vmul.f32 %v4513, %v4769
      %v4898 = vmul.f32 %v4514, %v4770
      %v4899 = vmul.f32 %v4515, %v4771
      %v4900 = vmul.f32 %v4516, %v4772
      %v4901 = vmul.f32 %v4517, %v4773
      %v4902 = vmul.f32 %v4518, %v4774
      %v4903 = vmul.f32 %v4519, %v4775
      %v4904 = vmul.f32 %v4520, %v4776
      %v4905 = vmul.f32 %v4521, %v4777
      %v4906 = vmul.f32 %v4522, %v4778
      %v4907 = vmul.f32 %v4523, %v4779
      %v4908 = vmul.f32 %v4524, %v4780
      %v4909 = vmul.f32 %v4525, %v4781
      %v4910 = vmul.f32 %v4526, %v4782
      %v4911 = vmul.f32 %v4527, %v4783
      %v4912 = vmul.f32 %v4528, %v4784
      %v4913 = vmul.f32 %v4529, %v4785
      %v4914 = vmul.f32 %v4530, %v4786
      %v4915 = vmul.f32 %v4531, %v4787
      %v4916 = vmul.f32 %v4532, %v4788
      %v4917 = vmul.f32 %v4533, %v4789
      %v4918 = vmul.f32 %v4534, %v4790
      %v4919 = vmul.f32 %v4535, %v4791
      %v4920 = vmul.f32 %v4536, %v4792
      %v4921 = vmul.f32 %v4537, %v4793
      %v4922 = vmul.f32 %v4538, %v4794
      %v4923 = vmul.f32 %v4539, %v4795
      %v4924 = vmul.f32 %v4540, %v4796
      %v4925 = vmul.f32 %v4541, %v4797
      %v4926 = vmul.f32 %v4542, %v4798
      %v4927 = vmul.f32 %v4543, %v4799
      %v4928 = vmul.f32 %v4544, %v4800
      %v4929 = vmul.f32 %v4545, %v4801
      %v4930 = vmul.f32 %v4546, %v4802
      %v4931 = vmul.f32 %v4547, %v4803
      %v4932 = vmul.f32 %v4548, %v4804
      %v4933 = vmul.f32 %v4549, %v4805
      %v4934 = vmul.f32 %v4550, %v4806
      %v4935 = vmul.f32 %v4551, %v4807
      %v4936 = vmul.f32 %v4552, %v4808
      %v4937 = vmul.f32 %v4553, %v4809
      %v4938 = vmul.f32 %v4554, %v4810
      %v4939 = vmul.f32 %v4555, %v4811
      %v4940 = vmul.f32 %v4556, %v4812
      %v4941 = vmul.f32 %v4557, %v4813
      %v4942 = vmul.f32 %v4558, %v4814
      %v4943 = vmul.f32 %v4559, %v4815
      %v4944 = vmul.f32 %v4560, %v4816
      %v4945 = vmul.f32 %v4561, %v4817
      %v4946 = vmul.f32 %v4562, %v4818
      %v4947 = vmul.f32 %v4563, %v4819
      %v4948 = vmul.f32 %v4564, %v4820
      %v4949 = vmul.f32 %v4565, %v4821
      %4950 = vst [vmem:[%s208] sm:$0xff] %v4822
      %4951 = vst [vmem:[%s208 + $0x8] sm:$0xff] %v4823
      %4952 = vst [vmem:[%s208 + $0x10] sm:$0xff] %v4824
      %4953 = vst [vmem:[%s208 + $0x18] sm:$0xff] %v4825
      %4954 = vst [vmem:[%s208 + $0x20] sm:$0xff] %v4826
      %4955 = vst [vmem:[%s208 + $0x28] sm:$0xff] %v4827
      %4956 = vst [vmem:[%s208 + $0x30] sm:$0xff] %v4828
      %4957 = vst [vmem:[%s208 + $0x38] sm:$0xff] %v4829
      %4958 = vst [vmem:[%s208 + $0x40] sm:$0xff] %v4830
      %4959 = vst [vmem:[%s208 + $0x48] sm:$0xff] %v4831
      %4960 = vst [vmem:[%s208 + $0x50] sm:$0xff] %v4832
      %4961 = vst [vmem:[%s208 + $0x58] sm:$0xff] %v4833
      %4962 = vst [vmem:[%s208 + $0x60] sm:$0xff] %v4834
      %4963 = vst [vmem:[%s208 + $0x68] sm:$0xff] %v4835
      %4964 = vst [vmem:[%s208 + $0x70] sm:$0xff] %v4836
      %4965 = vst [vmem:[%s208 + $0x78] sm:$0xff] %v4837
      %4966 = vst [vmem:[%s208 + $0x80] sm:$0xff] %v4838
      %4967 = vst [vmem:[%s208 + $0x88] sm:$0xff] %v4839
      %4968 = vst [vmem:[%s208 + $0x90] sm:$0xff] %v4840
      %4969 = vst [vmem:[%s208 + $0x98] sm:$0xff] %v4841
      %4970 = vst [vmem:[%s208 + $0xa0] sm:$0xff] %v4842
      %4971 = vst [vmem:[%s208 + $0xa8] sm:$0xff] %v4843
      %4972 = vst [vmem:[%s208 + $0xb0] sm:$0xff] %v4844
      %4973 = vst [vmem:[%s208 + $0xb8] sm:$0xff] %v4845
      %4974 = vst [vmem:[%s208 + $0xc0] sm:$0xff] %v4846
      %4975 = vst [vmem:[%s208 + $0xc8] sm:$0xff] %v4847
      %4976 = vst [vmem:[%s208 + $0xd0] sm:$0xff] %v4848
      %4977 = vst [vmem:[%s208 + $0xd8] sm:$0xff] %v4849
      %4978 = vst [vmem:[%s208 + $0xe0] sm:$0xff] %v4850
      %4979 = vst [vmem:[%s208 + $0xe8] sm:$0xff] %v4851
      %4980 = vst [vmem:[%s208 + $0xf0] sm:$0xff] %v4852
      %4981 = vst [vmem:[%s208 + $0xf8] sm:$0xff] %v4853
      %4982 = vst [vmem:[%s208 + $0x100] sm:$0xff] %v4854
      %4983 = vst [vmem:[%s208 + $0x108] sm:$0xff] %v4855
      %4984 = vst [vmem:[%s208 + $0x110] sm:$0xff] %v4856
      %4985 = vst [vmem:[%s208 + $0x118] sm:$0xff] %v4857
      %4986 = vst [vmem:[%s208 + $0x120] sm:$0xff] %v4858
      %4987 = vst [vmem:[%s208 + $0x128] sm:$0xff] %v4859
      %4988 = vst [vmem:[%s208 + $0x130] sm:$0xff] %v4860
      %4989 = vst [vmem:[%s208 + $0x138] sm:$0xff] %v4861
      %4990 = vst [vmem:[%s208 + $0x140] sm:$0xff] %v4862
      %4991 = vst [vmem:[%s208 + $0x148] sm:$0xff] %v4863
      %4992 = vst [vmem:[%s208 + $0x150] sm:$0xff] %v4864
      %4993 = vst [vmem:[%s208 + $0x158] sm:$0xff] %v4865
      %4994 = vst [vmem:[%s208 + $0x160] sm:$0xff] %v4866
      %4995 = vst [vmem:[%s208 + $0x168] sm:$0xff] %v4867
      %4996 = vst [vmem:[%s208 + $0x170] sm:$0xff] %v4868
      %4997 = vst [vmem:[%s208 + $0x178] sm:$0xff] %v4869
      %4998 = vst [vmem:[%s208 + $0x180] sm:$0xff] %v4870
      %4999 = vst [vmem:[%s208 + $0x188] sm:$0xff] %v4871
      %5000 = vst [vmem:[%s208 + $0x190] sm:$0xff] %v4872
      %5001 = vst [vmem:[%s208 + $0x198] sm:$0xff] %v4873
      %5002 = vst [vmem:[%s208 + $0x1a0] sm:$0xff] %v4874
      %5003 = vst [vmem:[%s208 + $0x1a8] sm:$0xff] %v4875
      %5004 = vst [vmem:[%s208 + $0x1b0] sm:$0xff] %v4876
      %5005 = vst [vmem:[%s208 + $0x1b8] sm:$0xff] %v4877
      %5006 = vst [vmem:[%s208 + $0x1c0] sm:$0xff] %v4878
      %5007 = vst [vmem:[%s208 + $0x1c8] sm:$0xff] %v4879
      %5008 = vst [vmem:[%s208 + $0x1d0] sm:$0xff] %v4880
      %5009 = vst [vmem:[%s208 + $0x1d8] sm:$0xff] %v4881
      %5010 = vst [vmem:[%s208 + $0x1e0] sm:$0xff] %v4882
      %5011 = vst [vmem:[%s208 + $0x1e8] sm:$0xff] %v4883
      %5012 = vst [vmem:[%s208 + $0x1f0] sm:$0xff] %v4884
      %5013 = vst [vmem:[%s208 + $0x1f8] sm:$0xff] %v4885
      %5014 = vst [vmem:[%s208 + $0x200] sm:$0xff] %v4886
      %5015 = vst [vmem:[%s208 + $0x208] sm:$0xff] %v4887
      %5016 = vst [vmem:[%s208 + $0x210] sm:$0xff] %v4888
      %5017 = vst [vmem:[%s208 + $0x218] sm:$0xff] %v4889
      %5018 = vst [vmem:[%s208 + $0x220] sm:$0xff] %v4890
      %5019 = vst [vmem:[%s208 + $0x228] sm:$0xff] %v4891
      %5020 = vst [vmem:[%s208 + $0x230] sm:$0xff] %v4892
      %5021 = vst [vmem:[%s208 + $0x238] sm:$0xff] %v4893
      %5022 = vst [vmem:[%s208 + $0x240] sm:$0xff] %v4894
      %5023 = vst [vmem:[%s208 + $0x248] sm:$0xff] %v4895
      %5024 = vst [vmem:[%s208 + $0x250] sm:$0xff] %v4896
      %5025 = vst [vmem:[%s208 + $0x258] sm:$0xff] %v4897
      %5026 = vst [vmem:[%s208 + $0x260] sm:$0xff] %v4898
      %5027 = vst [vmem:[%s208 + $0x268] sm:$0xff] %v4899
      %5028 = vst [vmem:[%s208 + $0x270] sm:$0xff] %v4900
      %5029 = vst [vmem:[%s208 + $0x278] sm:$0xff] %v4901
      %5030 = vst [vmem:[%s208 + $0x280] sm:$0xff] %v4902
      %5031 = vst [vmem:[%s208 + $0x288] sm:$0xff] %v4903
      %5032 = vst [vmem:[%s208 + $0x290] sm:$0xff] %v4904
      %5033 = vst [vmem:[%s208 + $0x298] sm:$0xff] %v4905
      %5034 = vst [vmem:[%s208 + $0x2a0] sm:$0xff] %v4906
      %5035 = vst [vmem:[%s208 + $0x2a8] sm:$0xff] %v4907
      %5036 = vst [vmem:[%s208 + $0x2b0] sm:$0xff] %v4908
      %5037 = vst [vmem:[%s208 + $0x2b8] sm:$0xff] %v4909
      %5038 = vst [vmem:[%s208 + $0x2c0] sm:$0xff] %v4910
      %5039 = vst [vmem:[%s208 + $0x2c8] sm:$0xff] %v4911
      %5040 = vst [vmem:[%s208 + $0x2d0] sm:$0xff] %v4912
      %5041 = vst [vmem:[%s208 + $0x2d8] sm:$0xff] %v4913
      %5042 = vst [vmem:[%s208 + $0x2e0] sm:$0xff] %v4914
      %5043 = vst [vmem:[%s208 + $0x2e8] sm:$0xff] %v4915
      %5044 = vst [vmem:[%s208 + $0x2f0] sm:$0xff] %v4916
      %5045 = vst [vmem:[%s208 + $0x2f8] sm:$0xff] %v4917
      %5046 = vst [vmem:[%s208 + $0x300] sm:$0xff] %v4918
      %5047 = vst [vmem:[%s208 + $0x308] sm:$0xff] %v4919
      %5048 = vst [vmem:[%s208 + $0x310] sm:$0xff] %v4920
      %5049 = vst [vmem:[%s208 + $0x318] sm:$0xff] %v4921
      %5050 = vst [vmem:[%s208 + $0x320] sm:$0xff] %v4922
      %5051 = vst [vmem:[%s208 + $0x328] sm:$0xff] %v4923
      %5052 = vst [vmem:[%s208 + $0x330] sm:$0xff] %v4924
      %5053 = vst [vmem:[%s208 + $0x338] sm:$0xff] %v4925
      %5054 = vst [vmem:[%s208 + $0x340] sm:$0xff] %v4926
      %5055 = vst [vmem:[%s208 + $0x348] sm:$0xff] %v4927
      %5056 = vst [vmem:[%s208 + $0x350] sm:$0xff] %v4928
      %5057 = vst [vmem:[%s208 + $0x358] sm:$0xff] %v4929
      %5058 = vst [vmem:[%s208 + $0x360] sm:$0xff] %v4930
      %5059 = vst [vmem:[%s208 + $0x368] sm:$0xff] %v4931
      %5060 = vst [vmem:[%s208 + $0x370] sm:$0xff] %v4932
      %5061 = vst [vmem:[%s208 + $0x378] sm:$0xff] %v4933
      %5062 = vst [vmem:[%s208 + $0x380] sm:$0xff] %v4934
      %5063 = vst [vmem:[%s208 + $0x388] sm:$0xff] %v4935
      %5064 = vst [vmem:[%s208 + $0x390] sm:$0xff] %v4936
      %5065 = vst [vmem:[%s208 + $0x398] sm:$0xff] %v4937
      %5066 = vst [vmem:[%s208 + $0x3a0] sm:$0xff] %v4938
      %5067 = vst [vmem:[%s208 + $0x3a8] sm:$0xff] %v4939
      %5068 = vst [vmem:[%s208 + $0x3b0] sm:$0xff] %v4940
      %5069 = vst [vmem:[%s208 + $0x3b8] sm:$0xff] %v4941
      %5070 = vst [vmem:[%s208 + $0x3c0] sm:$0xff] %v4942
      %5071 = vst [vmem:[%s208 + $0x3c8] sm:$0xff] %v4943
      %5072 = vst [vmem:[%s208 + $0x3d0] sm:$0xff] %v4944
      %5073 = vst [vmem:[%s208 + $0x3d8] sm:$0xff] %v4945
      %5074 = vst [vmem:[%s208 + $0x3e0] sm:$0xff] %v4946
      %5075 = vst [vmem:[%s208 + $0x3e8] sm:$0xff] %v4947
      %5076 = vst [vmem:[%s208 + $0x3f0] sm:$0xff] %v4948
      %5077 = vst [vmem:[%s208 + $0x3f8] sm:$0xff] %v4949
      %s5078 = smul.u32 2, %s19
      %p5079 = scmp.lt.s32.totalorder %s18, 1
      %s5080 = scalar_select %p5079, %s18, 1
      %p5081 = scmp.lt.s32.totalorder %s5078, 1
      %s5082 = scalar_select %p5081, %s5078, 1
      %s5083 = smul.addr %s5080, 128
      %s5084 = sadd.s32 %s5082, %s5083
      %s5085 = smul.addr %s5084, 8
      %s5086 = scalar_lea.vmem %s3, %s5085
      // Predicated region
      $region33: #{model_forward.1} parent=31 // pred_check
        %p5087 = pneg %p116
      $region34: #{model_forward.1} parent=31 // pred_check_branch
        %5089 = sbr.rel (%p5087) target = $region36
      $region35: #{model_forward.1} parent=31 // pred_region
        %s5090 = smul.u32 2, %s19
      $region36: #{model_forward.1} parent=31 // pred_fallthru
        _
    $region32: #{model_forward.1} parent=5 // pred_fallthru
      _
    %p5091 = scmp.le.s32.totalorder 2, %s9
    // Predicated region
    $region37: #{model_forward.1} parent=5 // pred_check
      %p5092 = pneg %p5091
    $region38: #{model_forward.1} parent=5 // pred_check_branch
      %5094 = sbr.rel (%p5092) target = $region40
    $region39: #{model_forward.1} parent=5 // pred_region
      %s5095 = ssub.s32 %s9, 2
      // Predicated region
      $region41: #{model_forward.1} parent=39 // pred_check
        %p5096 = pneg %p122
      $region42: #{model_forward.1} parent=39 // pred_check_branch
        %5098 = sbr.rel (%p5096) target = $region44
      $region43: #{model_forward.1} parent=39 // pred_region
        %s5099 = smul.u32 2, %s21
        %p5100 = scmp.lt.s32.totalorder %s20, 1
        %s5101 = scalar_select %p5100, %s20, 1
        %p5102 = scmp.lt.s32.totalorder %s5099, 1
        %s5103 = scalar_select %p5102, %s5099, 1
        %s5104 = smul.addr %s5101, 128
        %s5105 = sadd.s32 %s5103, %s5104
        %s5106 = smul.addr %s5105, 8
        %s5107 = scalar_lea.vmem %s3, %s5106
      $region44: #{model_forward.1} parent=39 // pred_fallthru
        _
    $region40: #{model_forward.1} parent=5 // pred_fallthru
      _
  $region6: #{model_forward.1} parent=0 // loop_footer
    %s13 = sadd.s32 1, %s9
  $region7: #{model_forward.1} parent=0 // loop_footer_branch
    %8 = sbr.rel target = $region3
  $region8: #{model_forward.1} parent=0 // loop_exit
    _

</llo_original>
